<compile_context>
chip_gen: v5e
topology: v5e:2x2
jax: 0.10.0
libtpu: 0.0.40
codegen_flags: <defaults>
</compile_context>

<pallas_src>
import jax
import jax.numpy as jnp
from jax.experimental import pallas as pl
from jax.experimental.pallas import tpu as pltpu

H = 256           # hidden width
_LANE = 128       # TPU lane width
_MAX_BM = 16384   # block_m ceiling (batch elements per grid step)
_FIXED_VMEM = 1 << 20          # weights + small tiles + slack
_BYTES_PER_BATCH_ELEM = 4096   # f32 pre-ReLU h1 + bf16 h1 + f32 h2 + f32 w3*h2 + I/O tiles


def mlp_kernel(x_ref, w1_ref, b1_ref, w2_ref, b2_ref, w3_ref, b3_ref, o_ref):
    # x_ref : (1, bm)  f32, batch along lanes
    # w1_ref: (H, 1)   f32  torch hidden1.weight (out, in=1)
    # b1_ref: (H, 1)   f32
    # w2_ref: (H, H)   bf16 torch hidden2.weight (pre-cast in wrapper)
    # b2_ref: (H, 1)   f32
    # w3_ref: (H, 1)   f32  = output.weight.T
    # b3_ref: (1,)     f32 scalar in SMEM
    # o_ref : (1, bm)  f32
    x = x_ref[...]                                                  # (1, bm)

    # Layer 1: scalar input feature -> rank-1 broadcast on the VPU (f32 for
    # v5e portability; the single cast below feeds the MXU in bf16).
    h1 = jnp.maximum(w1_ref[...] * x + b1_ref[...], 0.0)           # (H, bm) f32

    # Layer 2: the only real matmul.  bf16 operands into the MXU, f32 accumulate.
    h2 = jnp.dot(w2_ref[...], h1.astype(jnp.bfloat16),
                 preferred_element_type=jnp.float32)                # (H, bm) f32
    h2 = jnp.maximum(h2 + b2_ref[...], 0.0)

    # Layer 3: single output unit -> VPU multiply + sublane (XLU) reduce in f32.
    out = jnp.sum(w3_ref[...] * h2, axis=0, keepdims=True)          # (1, bm) f32
    o_ref[...] = (out + b3_ref[0]).astype(o_ref.dtype)


def _vmem_budget_bytes():
    """Per-chip VMEM budget with ~16 MiB headroom (v7x has 64 MiB vs 128 on v5e/v6e)."""
    try:
        cap = pltpu.get_tpu_info().vmem_capacity_bytes
    except Exception:
        cap = 64 << 20  # conservative default = v7x per-TensorCore VMEM
    return max(cap - (16 << 20), 24 << 20)


def _max_block_m(budget_bytes):
    bm = (budget_bytes - _FIXED_VMEM) // _BYTES_PER_BATCH_ELEM
    bm = (bm // _LANE) * _LANE
    return int(max(_LANE, min(bm, _MAX_BM)))


def _pick_block_m(n_padded, max_bm):
    """n_padded is a multiple of 128.  One full-width block if it fits VMEM
    (no per-step overhead); otherwise the largest dividing tile, preferring an
    even step count (v7x shards the 'parallel' axis across its 2 TensorCores)."""
    if n_padded <= max_bm:
        return n_padded
    candidates = [bm for bm in (16384, 8192, 4096, 2048, 1024, 512, 256, 128)
                  if bm <= max_bm and n_padded % bm == 0]
    if not candidates:
        return _LANE
    even = [bm for bm in candidates if (n_padded // bm) % 2 == 0]
    return even[0] if even else candidates[0]


def _build_call(n_padded, block_m, vmem_limit, single_buffer_weights):
    wmap = lambda i: (0, 0)
    if single_buffer_weights:
        # Resident weights: constant index_map -> one buffer is enough.
        wkw = dict(pipeline_mode=pl.Buffered(1))
    else:
        wkw = {}

    in_specs = [
        pl.BlockSpec((1, block_m), lambda i: (0, i)),           # x tile (lane-dense)
        pl.BlockSpec((H, 1), wmap, **wkw),                      # w1 (resident)
        pl.BlockSpec((H, 1), wmap, **wkw),                      # b1
        pl.BlockSpec((H, H), wmap, **wkw),                      # w2 (bf16)
        pl.BlockSpec((H, 1), wmap, **wkw),                      # b2
        pl.BlockSpec((H, 1), wmap, **wkw),                      # w3^T
        pl.BlockSpec(memory_space=pltpu.MemorySpace.SMEM),      # b3 scalar in SMEM
    ]
    out_spec = pl.BlockSpec((1, block_m), lambda i: (0, i))     # lane-dense output row

    cost = pl.CostEstimate(
        flops=2 * H * H * n_padded + 6 * H * n_padded,
        transcendentals=0,
        bytes_accessed=2 * 4 * n_padded + 2 * H * H + 4 * 4 * H + 4,
    )

    return pl.pallas_call(
        mlp_kernel,
        out_shape=jax.ShapeDtypeStruct((1, n_padded), jnp.float32),
        grid_spec=pltpu.PrefetchScalarGridSpec(
            num_scalar_prefetch=0,
            grid=(n_padded // block_m,),
            in_specs=in_specs,
            out_specs=out_spec,
        ),
        compiler_params=pltpu.CompilerParams(
            dimension_semantics=("parallel",),
            vmem_limit_bytes=int(vmem_limit),
        ),
        cost_estimate=cost,
    )


def mlp_overfitting_forward_row(x_row, kparams, *, block_m=None):
    """Hot-path entry point: x_row is (1, N) f32 (batch on lanes) -> (1, N) f32."""
    w1, b1, w2_bf16, b2, w3t, b3 = kparams
    n = x_row.shape[1]

    # Pad the batch to a lane multiple so output stores stay unmasked.
    n_padded = ((n + _LANE - 1) // _LANE) * _LANE
    if n_padded != n:
        x_row = jnp.pad(x_row, ((0, 0), (0, n_padded - n)))

    budget = _vmem_budget_bytes()
    if block_m is None:
        block_m = _pick_block_m(n_padded, _max_block_m(budget))
    assert n_padded % block_m == 0, "padded batch must be a multiple of block_m"

    args = (x_row, w1, b1, w2_bf16, b2, w3t, b3)
    try:
        out_row = _build_call(n_padded, block_m, budget, True)(*args)
    except Exception:
        # pl.Buffered(1) single-buffering not accepted on this jax version:
        # fall back to default (double-buffered) weight specs.
        out_row = _build_call(n_padded, block_m, budget, False)(*args)

    return out_row[:, :n]


def mlp_overfitting_forward(x, kparams, *, block_m=None):
    """Torch-facing API: x (N, 1) f32 -> (N, 1) f32, same semantics as MLPOverfitting.
    NOTE: the (N,1)<->(1,N) relayouts are XLA passes outside the kernel; repeated
    callers should feed mlp_overfitting_forward_row with (1, N) directly."""
    n = x.shape[0]
    out_row = mlp_overfitting_forward_row(x.reshape(1, n), kparams, block_m=block_m)
    return out_row.reshape(n, 1)


def init_params(key):
    """torch.nn.Linear default init (U[-1/sqrt(fan_in), +1/sqrt(fan_in)]) in torch layout."""
    k1, k2, k3, k4, k5, k6 = jax.random.split(key, 6)

    def u(k, shape, fan_in):
        bound = 1.0 / jnp.sqrt(jnp.float32(fan_in))
        return jax.random.uniform(k, shape, jnp.float32, -bound, bound)

    w1 = u(k1, (H, 1), 1)      # hidden1.weight (out, in)
    b1 = u(k2, (H,), 1)        # hidden1.bias
    w2 = u(k3, (H, H), H)      # hidden2.weight
    b2 = u(k4, (H,), H)        # hidden2.bias
    w3 = u(k5, (1, H), H)      # output.weight
    b3 = u(k6, (1,), H)        # output.bias
    return (w1, b1, w2, b2, w3, b3)


def prepare_params(torch_params):
    """One-time conversion to kernel layout: biases -> (H,1) columns, output.weight ->
    (H,1) column, hidden2.weight pre-cast to bf16 (cast kept out of the kernel body)."""
    w1, b1, w2, b2, w3, b3 = torch_params
    return (w1,
            b1.reshape(H, 1),
            w2.astype(jnp.bfloat16),
            b2.reshape(H, 1),
            w3.reshape(H, 1),      # == output.weight.T
            b3)


def reference_forward(x, torch_params):
    """Pure-JAX f32 reference with torch row-vector semantics: y = x @ W.T + b."""
    w1, b1, w2, b2, w3, b3 = torch_params
    h1 = jnp.maximum(x @ w1.T + b1, 0.0)     # (N, H)
    h2 = jnp.maximum(h1 @ w2.T + b2, 0.0)    # (N, H)
    return h2 @ w3.T + b3                    # (N, 1)


if __name__ == "__main__":
    key = jax.random.PRNGKey(0)
    pkey, xkey = jax.random.split(key)

    torch_params = init_params(pkey)
    kparams = prepare_params(torch_params)

    N = 256
    x = jax.random.normal(xkey, (N, 1), dtype=jnp.float32)

    out = mlp_overfitting_forward(x, kparams)
    out = jax.block_until_ready(out)

    ref = reference_forward(x, torch_params)
    assert out.shape == (N, 1)
    max_err = float(jnp.max(jnp.abs(out - ref)))
    # bf16 MXU operands with f32 accumulation -> loosened tolerance per review.
    assert jnp.allclose(out, ref, atol=2e-2, rtol=2e-2), f"mismatch vs reference (max abs err {max_err})"

    print("KERNEL_OK")
</pallas_src>

<mosaic_0001>
module attributes {stable_mosaic.version = 11 : i64} {
  func.func @mlp_kernel(%arg0: i32, %arg1: memref<1x256xf32, #tpu.memory_space<vmem>>, %arg2: memref<256x1xf32, #tpu.memory_space<vmem>>, %arg3: memref<256x1xf32, #tpu.memory_space<vmem>>, %arg4: memref<256x256xbf16, #tpu.memory_space<vmem>>, %arg5: memref<256x1xf32, #tpu.memory_space<vmem>>, %arg6: memref<256x1xf32, #tpu.memory_space<vmem>>, %arg7: memref<1xf32, #tpu.memory_space<smem>>, %arg8: memref<1x256xf32, #tpu.memory_space<vmem>>) attributes {dimension_semantics = [#tpu.dimension_semantics<parallel>], iteration_bounds = array<i64: 1>, scalar_prefetch = 0 : i64, scratch_operands = 0 : i64, tpu.core_type = #tpu.core_type<tc>, window_params = [{transform_indices = @transform_0, window_bounds = array<i64: 1, 256>}, {pipeline_mode = #tpu.pipeline_mode<synchronous>, transform_indices = @transform_1, window_bounds = array<i64: 256, 1>}, {pipeline_mode = #tpu.pipeline_mode<synchronous>, transform_indices = @transform_2, window_bounds = array<i64: 256, 1>}, {pipeline_mode = #tpu.pipeline_mode<synchronous>, transform_indices = @transform_3, window_bounds = array<i64: 256, 256>}, {pipeline_mode = #tpu.pipeline_mode<synchronous>, transform_indices = @transform_4, window_bounds = array<i64: 256, 1>}, {pipeline_mode = #tpu.pipeline_mode<synchronous>, transform_indices = @transform_5, window_bounds = array<i64: 256, 1>}, {transform_indices = @transform_6, window_bounds = array<i64: 1>}, {transform_indices = @transform_7, window_bounds = array<i64: 1, 256>}]} {
    %c0 = arith.constant 0 : index
    %c0_0 = arith.constant 0 : index
    %0 = vector.load %arg1[%c0, %c0_0] : memref<1x256xf32, #tpu.memory_space<vmem>>, vector<1x256xf32>
    %c0_1 = arith.constant 0 : index
    %c0_2 = arith.constant 0 : index
    %1 = vector.load %arg2[%c0_1, %c0_2] : memref<256x1xf32, #tpu.memory_space<vmem>>, vector<256x1xf32>
    %2 = vector.broadcast %1 : vector<256x1xf32> to vector<256x256xf32>
    %3 = vector.broadcast %0 : vector<1x256xf32> to vector<256x256xf32>
    %4 = arith.mulf %2, %3 : vector<256x256xf32>
    %c0_3 = arith.constant 0 : index
    %c0_4 = arith.constant 0 : index
    %5 = vector.load %arg3[%c0_3, %c0_4] : memref<256x1xf32, #tpu.memory_space<vmem>>, vector<256x1xf32>
    %6 = vector.broadcast %5 : vector<256x1xf32> to vector<256x256xf32>
    %7 = arith.addf %4, %6 : vector<256x256xf32>
    %cst = arith.constant 0.000000e+00 : f32
    %8 = vector.broadcast %cst : f32 to vector<256x256xf32>
    %9 = arith.maximumf %7, %8 : vector<256x256xf32>
    %c0_5 = arith.constant 0 : index
    %c0_6 = arith.constant 0 : index
    %10 = vector.load %arg4[%c0_5, %c0_6] : memref<256x256xbf16, #tpu.memory_space<vmem>>, vector<256x256xbf16>
    %11 = arith.truncf %9 : vector<256x256xf32> to vector<256x256xbf16>
    %cst_7 = arith.constant dense<0.000000e+00> : vector<256x256xf32>
    %12 = tpu.matmul %10, %11, %cst_7 {dimension_numbers = #tpu.dot_dimension_numbers<[1], [0], [0], [1], [0, 0, 1, 1], [], []>} : vector<256x256xbf16>, vector<256x256xbf16>, vector<256x256xf32> -> vector<256x256xf32>
    %c0_8 = arith.constant 0 : index
    %c0_9 = arith.constant 0 : index
    %13 = vector.load %arg5[%c0_8, %c0_9] : memref<256x1xf32, #tpu.memory_space<vmem>>, vector<256x1xf32>
    %14 = vector.broadcast %13 : vector<256x1xf32> to vector<256x256xf32>
    %15 = arith.addf %12, %14 : vector<256x256xf32>
    %cst_10 = arith.constant 0.000000e+00 : f32
    %16 = vector.broadcast %cst_10 : f32 to vector<256x256xf32>
    %17 = arith.maximumf %15, %16 : vector<256x256xf32>
    %c0_11 = arith.constant 0 : index
    %c0_12 = arith.constant 0 : index
    %18 = vector.load %arg6[%c0_11, %c0_12] : memref<256x1xf32, #tpu.memory_space<vmem>>, vector<256x1xf32>
    %19 = vector.broadcast %18 : vector<256x1xf32> to vector<256x256xf32>
    %20 = arith.mulf %19, %17 : vector<256x256xf32>
    %cst_13 = arith.constant dense<0.000000e+00> : vector<256xf32>
    %21 = vector.multi_reduction <add>, %20, %cst_13 [0] : vector<256x256xf32> to vector<256xf32>
    %22 = vector.shape_cast %21 : vector<256xf32> to vector<1x256xf32>
    %c0_14 = arith.constant 0 : index
    %23 = memref.load %arg7[%c0_14] : memref<1xf32, #tpu.memory_space<smem>>
    %24 = vector.broadcast %23 : f32 to vector<1x256xf32>
    %25 = arith.addf %22, %24 : vector<1x256xf32>
    %c0_15 = arith.constant 0 : index
    %c0_16 = arith.constant 0 : index
    %26 = vector.load %arg8[%c0_15, %c0_16] : memref<1x256xf32, #tpu.memory_space<vmem>>, vector<1x256xf32>
    tpu.vector_store %arg8[%c0_15, %c0_16], %25 {strides = array<i32>} : memref<1x256xf32, #tpu.memory_space<vmem>>, vector<1x256xf32>,
    return
  }
  func.func @transform_0(%arg0: i32) -> (i32, i32) {
    %c0_i32 = arith.constant 0 : i32
    %c0_i32_0 = arith.constant 0 : i32
    return %c0_i32, %arg0 : i32, i32
  }
  func.func @transform_1(%arg0: i32) -> (i32, i32) {
    %c0_i32 = arith.constant 0 : i32
    %c0_i32_0 = arith.constant 0 : i32
    %c0_i32_1 = arith.constant 0 : i32
    return %c0_i32, %c0_i32_0 : i32, i32
  }
  func.func @transform_2(%arg0: i32) -> (i32, i32) {
    %c0_i32 = arith.constant 0 : i32
    %c0_i32_0 = arith.constant 0 : i32
    %c0_i32_1 = arith.constant 0 : i32
    return %c0_i32, %c0_i32_0 : i32, i32
  }
  func.func @transform_3(%arg0: i32) -> (i32, i32) {
    %c0_i32 = arith.constant 0 : i32
    %c0_i32_0 = arith.constant 0 : i32
    %c0_i32_1 = arith.constant 0 : i32
    return %c0_i32, %c0_i32_0 : i32, i32
  }
  func.func @transform_4(%arg0: i32) -> (i32, i32) {
    %c0_i32 = arith.constant 0 : i32
    %c0_i32_0 = arith.constant 0 : i32
    %c0_i32_1 = arith.constant 0 : i32
    return %c0_i32, %c0_i32_0 : i32, i32
  }
  func.func @transform_5(%arg0: i32) -> (i32, i32) {
    %c0_i32 = arith.constant 0 : i32
    %c0_i32_0 = arith.constant 0 : i32
    %c0_i32_1 = arith.constant 0 : i32
    return %c0_i32, %c0_i32_0 : i32, i32
  }
  func.func @transform_6(%arg0: i32) -> i32 {
    %c0_i32 = arith.constant 0 : i32
    %c0_i32_0 = arith.constant 0 : i32
    return %c0_i32 : i32
  }
  func.func @transform_7(%arg0: i32) -> (i32, i32) {
    %c0_i32 = arith.constant 0 : i32
    %c0_i32_0 = arith.constant 0 : i32
    return %c0_i32, %arg0 : i32, i32
  }
}

module attributes {stable_mosaic.version = 11 : i64} {
  func.func @mlp_kernel(%arg0: i32, %arg1: memref<1x256xf32, #tpu.memory_space<vmem>>, %arg2: memref<256x1xf32, #tpu.memory_space<vmem>>, %arg3: memref<256x1xf32, #tpu.memory_space<vmem>>, %arg4: memref<256x256xbf16, #tpu.memory_space<vmem>>, %arg5: memref<256x1xf32, #tpu.memory_space<vmem>>, %arg6: memref<256x1xf32, #tpu.memory_space<vmem>>, %arg7: memref<1xf32, #tpu.memory_space<smem>>, %arg8: memref<1x256xf32, #tpu.memory_space<vmem>>) attributes {dimension_semantics = [#tpu.dimension_semantics<parallel>], iteration_bounds = array<i64: 1>, scalar_prefetch = 0 : i64, scratch_operands = 0 : i64, tpu.core_type = #tpu.core_type<tc>, window_params = [{transform_indices = @transform_0, window_bounds = array<i64: 1, 256>}, {pipeline_mode = #tpu.pipeline_mode<synchronous>, transform_indices = @transform_1, window_bounds = array<i64: 256, 1>}, {pipeline_mode = #tpu.pipeline_mode<synchronous>, transform_indices = @transform_2, window_bounds = array<i64: 256, 1>}, {pipeline_mode = #tpu.pipeline_mode<synchronous>, transform_indices = @transform_3, window_bounds = array<i64: 256, 256>}, {pipeline_mode = #tpu.pipeline_mode<synchronous>, transform_indices = @transform_4, window_bounds = array<i64: 256, 1>}, {pipeline_mode = #tpu.pipeline_mode<synchronous>, transform_indices = @transform_5, window_bounds = array<i64: 256, 1>}, {transform_indices = @transform_6, window_bounds = array<i64: 1>}, {transform_indices = @transform_7, window_bounds = array<i64: 1, 256>}]} {
    %c0 = arith.constant 0 : index
    %c0_0 = arith.constant 0 : index
    %0 = vector.load %arg1[%c0, %c0_0] : memref<1x256xf32, #tpu.memory_space<vmem>>, vector<1x256xf32>
    %c0_1 = arith.constant 0 : index
    %c0_2 = arith.constant 0 : index
    %1 = vector.load %arg2[%c0_1, %c0_2] : memref<256x1xf32, #tpu.memory_space<vmem>>, vector<256x1xf32>
    %2 = vector.broadcast %1 : vector<256x1xf32> to vector<256x256xf32>
    %3 = vector.broadcast %0 : vector<1x256xf32> to vector<256x256xf32>
    %4 = arith.mulf %2, %3 : vector<256x256xf32>
    %c0_3 = arith.constant 0 : index
    %c0_4 = arith.constant 0 : index
    %5 = vector.load %arg3[%c0_3, %c0_4] : memref<256x1xf32, #tpu.memory_space<vmem>>, vector<256x1xf32>
    %6 = vector.broadcast %5 : vector<256x1xf32> to vector<256x256xf32>
    %7 = arith.addf %4, %6 : vector<256x256xf32>
    %cst = arith.constant 0.000000e+00 : f32
    %8 = vector.broadcast %cst : f32 to vector<256x256xf32>
    %9 = arith.maximumf %7, %8 : vector<256x256xf32>
    %c0_5 = arith.constant 0 : index
    %c0_6 = arith.constant 0 : index
    %10 = vector.load %arg4[%c0_5, %c0_6] : memref<256x256xbf16, #tpu.memory_space<vmem>>, vector<256x256xbf16>
    %11 = arith.truncf %9 : vector<256x256xf32> to vector<256x256xbf16>
    %cst_7 = arith.constant dense<0.000000e+00> : vector<256x256xf32>
    %12 = tpu.matmul %10, %11, %cst_7 {dimension_numbers = #tpu.dot_dimension_numbers<[1], [0], [0], [1], [0, 0, 1, 1], [], []>} : vector<256x256xbf16>, vector<256x256xbf16>, vector<256x256xf32> -> vector<256x256xf32>
    %c0_8 = arith.constant 0 : index
    %c0_9 = arith.constant 0 : index
    %13 = vector.load %arg5[%c0_8, %c0_9] : memref<256x1xf32, #tpu.memory_space<vmem>>, vector<256x1xf32>
    %14 = vector.broadcast %13 : vector<256x1xf32> to vector<256x256xf32>
    %15 = arith.addf %12, %14 : vector<256x256xf32>
    %cst_10 = arith.constant 0.000000e+00 : f32
    %16 = vector.broadcast %cst_10 : f32 to vector<256x256xf32>
    %17 = arith.maximumf %15, %16 : vector<256x256xf32>
    %c0_11 = arith.constant 0 : index
    %c0_12 = arith.constant 0 : index
    %18 = vector.load %arg6[%c0_11, %c0_12] : memref<256x1xf32, #tpu.memory_space<vmem>>, vector<256x1xf32>
    %19 = vector.broadcast %18 : vector<256x1xf32> to vector<256x256xf32>
    %20 = arith.mulf %19, %17 : vector<256x256xf32>
    %cst_13 = arith.constant dense<0.000000e+00> : vector<256xf32>
    %21 = vector.multi_reduction <add>, %20, %cst_13 [0] : vector<256x256xf32> to vector<256xf32>
    %22 = vector.shape_cast %21 : vector<256xf32> to vector<1x256xf32>
    %c0_14 = arith.constant 0 : index
    %23 = memref.load %arg7[%c0_14] : memref<1xf32, #tpu.memory_space<smem>>
    %24 = vector.broadcast %23 : f32 to vector<1x256xf32>
    %25 = arith.addf %22, %24 : vector<1x256xf32>
    %c0_15 = arith.constant 0 : index
    %c0_16 = arith.constant 0 : index
    %26 = vector.load %arg8[%c0_15, %c0_16] : memref<1x256xf32, #tpu.memory_space<vmem>>, vector<1x256xf32>
    tpu.vector_store %arg8[%c0_15, %c0_16], %25 {strides = array<i32>} : memref<1x256xf32, #tpu.memory_space<vmem>>, vector<1x256xf32>,
    return
  }
  func.func @transform_0(%arg0: i32) -> (i32, i32) {
    %c0_i32 = arith.constant 0 : i32
    %c0_i32_0 = arith.constant 0 : i32
    return %c0_i32, %arg0 : i32, i32
  }
  func.func @transform_1(%arg0: i32) -> (i32, i32) {
    %c0_i32 = arith.constant 0 : i32
    %c0_i32_0 = arith.constant 0 : i32
    %c0_i32_1 = arith.constant 0 : i32
    return %c0_i32, %c0_i32_0 : i32, i32
  }
  func.func @transform_2(%arg0: i32) -> (i32, i32) {
    %c0_i32 = arith.constant 0 : i32
    %c0_i32_0 = arith.constant 0 : i32
    %c0_i32_1 = arith.constant 0 : i32
    return %c0_i32, %c0_i32_0 : i32, i32
  }
  func.func @transform_3(%arg0: i32) -> (i32, i32) {
    %c0_i32 = arith.constant 0 : i32
    %c0_i32_0 = arith.constant 0 : i32
    %c0_i32_1 = arith.constant 0 : i32
    return %c0_i32, %c0_i32_0 : i32, i32
  }
  func.func @transform_4(%arg0: i32) -> (i32, i32) {
    %c0_i32 = arith.constant 0 : i32
    %c0_i32_0 = arith.constant 0 : i32
    %c0_i32_1 = arith.constant 0 : i32
    return %c0_i32, %c0_i32_0 : i32, i32
  }
  func.func @transform_5(%arg0: i32) -> (i32, i32) {
    %c0_i32 = arith.constant 0 : i32
    %c0_i32_0 = arith.constant 0 : i32
    %c0_i32_1 = arith.constant 0 : i32
    return %c0_i32, %c0_i32_0 : i32, i32
  }
  func.func @transform_6(%arg0: i32) -> i32 {
    %c0_i32 = arith.constant 0 : i32
    %c0_i32_0 = arith.constant 0 : i32
    return %c0_i32 : i32
  }
  func.func @transform_7(%arg0: i32) -> (i32, i32) {
    %c0_i32 = arith.constant 0 : i32
    %c0_i32_0 = arith.constant 0 : i32
    return %c0_i32, %arg0 : i32, i32
  }
}

</mosaic_0001>

<llo_original>
// kernel: tpu_custom_call.1
$region0: #{tpu_custom_call.1}
  #allocation0 [shape = 'u32[]', space=smem, size = 0x4, offset = 0x4, fixed_abs, tag = 'smem constant byte address 0x4 - core index']
  #allocation1 [shape = 'u32[72,128]{1,0:T(1,128)}', space=vmem, size = 0x9000, scoped, tag = 'internal scratch']
  #allocation2 [shape = 'f32[1]{0:T(128)S(6)}', space=smem, size = 0x200, scoped, tag = 'scoped memory for tpu_custom_call.1']
  %s0 = inlined_call_operand.vmem [shape: f32[1,256], index: 0, kind: input, shape index: {}]
  %s1 = inlined_call_operand.vmem [shape: f32[256,1], index: 1, kind: input, shape index: {}]
  %s2 = inlined_call_operand.vmem [shape: f32[256,1], index: 2, kind: input, shape index: {}]
  %s3 = inlined_call_operand.vmem [shape: bf16[256,256], index: 3, kind: input, shape index: {}]
  %s4 = inlined_call_operand.vmem [shape: f32[256,1], index: 4, kind: input, shape index: {}]
  %s5 = inlined_call_operand.vmem [shape: f32[256,1], index: 5, kind: input, shape index: {}]
  %s6 = inlined_call_operand.<no memory space> [shape: f32[1], index: 6, kind: input, shape index: {}]
  %s7 = inlined_call_operand.hbm [shape: f32[1,256], index: 7, kind: output, shape index: {}]
  %s8 = sld [smem:[#allocation0]]
  $region38: #{tpu_custom_call.1} parent=0
    _
  %s10 = ssub.s32 1, %s8
  %s11 = scalar_select 0, %s10, %s8
  %12 = sst [smem:[#allocation2]] %s6
  $region1: #{tpu_custom_call.1} parent=0
    #allocation3 [shape = 'u8[1024]{0}', space=vmem, size = 0x400, scoped, tag = 'output window, operand 0, single buffered']
    #allocation4 [shape = 's32[1]{0}', space=sflag, size = 0x4, scoped, tag = 'scoped memory for tpu_custom_call.1']
    %13 = vsyncpa [#allocation4], 0
    // Predicated region
    $region2: #{tpu_custom_call.1} parent=1 // pred_check
      _
    $region3: #{tpu_custom_call.1} parent=1 // pred_check_branch
      %15 = sbr.rel (0) target = $region5
    $region4: #{tpu_custom_call.1} parent=1 // pred_region
      _
    $region5: #{tpu_custom_call.1} parent=1 // pred_fallthru
      _
    // Predicated region
    $region6: #{tpu_custom_call.1} parent=1 // pred_check
      _
    $region7: #{tpu_custom_call.1} parent=1 // pred_check_branch
      %17 = sbr.rel (0) target = $region9
    $region8: #{tpu_custom_call.1} parent=1 // pred_region
      _
    $region9: #{tpu_custom_call.1} parent=1 // pred_fallthru
      _
    // Predicated region
    $region10: #{tpu_custom_call.1} parent=1 // pred_check
      _
    $region11: #{tpu_custom_call.1} parent=1 // pred_check_branch
      %19 = sbr.rel (0) target = $region13
    $region12: #{tpu_custom_call.1} parent=1 // pred_region
      _
    $region13: #{tpu_custom_call.1} parent=1 // pred_fallthru
      _
    // Predicated region
    $region14: #{tpu_custom_call.1} parent=1 // pred_check
      _
    $region15: #{tpu_custom_call.1} parent=1 // pred_check_branch
      %21 = sbr.rel (0) target = $region17
    $region16: #{tpu_custom_call.1} parent=1 // pred_region
      _
    $region17: #{tpu_custom_call.1} parent=1 // pred_fallthru
      _
    // Predicated region
    $region18: #{tpu_custom_call.1} parent=1 // pred_check
      _
    $region19: #{tpu_custom_call.1} parent=1 // pred_check_branch
      %23 = sbr.rel (0) target = $region21
    $region20: #{tpu_custom_call.1} parent=1 // pred_region
      _
    $region21: #{tpu_custom_call.1} parent=1 // pred_fallthru
      _
    // Predicated region
    $region22: #{tpu_custom_call.1} parent=1 // pred_check
      _
    $region23: #{tpu_custom_call.1} parent=1 // pred_check_branch
      %25 = sbr.rel (0) target = $region25
    $region24: #{tpu_custom_call.1} parent=1 // pred_region
      _
    $region25: #{tpu_custom_call.1} parent=1 // pred_fallthru
      _
    // Predicated region
    $region26: #{tpu_custom_call.1} parent=1 // pred_check
      _
    $region27: #{tpu_custom_call.1} parent=1 // pred_check_branch
      %27 = sbr.rel (0) target = $region29
    $region28: #{tpu_custom_call.1} parent=1 // pred_region
      _
    $region29: #{tpu_custom_call.1} parent=1 // pred_fallthru
      _
    %v28 = vld [vmem:[%s0] sm:$0x3]
    %v29 = vld [vmem:[%s1] sm:$0xff]
    %v30 = vld [vmem:[%s1 + $0x8] sm:$0xff]
    %v31 = vld [vmem:[%s1 + $0x10] sm:$0xff]
    %v32 = vld [vmem:[%s1 + $0x18] sm:$0xff]
    %v33 = vld [vmem:[%s1 + $0x20] sm:$0xff]
    %v34 = vld [vmem:[%s1 + $0x28] sm:$0xff]
    %v35 = vld [vmem:[%s1 + $0x30] sm:$0xff]
    %v36 = vld [vmem:[%s1 + $0x38] sm:$0xff]
    %v37 = vld [vmem:[%s1 + $0x40] sm:$0xff]
    %v38 = vld [vmem:[%s1 + $0x48] sm:$0xff]
    %v39 = vld [vmem:[%s1 + $0x50] sm:$0xff]
    %v40 = vld [vmem:[%s1 + $0x58] sm:$0xff]
    %v41 = vld [vmem:[%s1 + $0x60] sm:$0xff]
    %v42 = vld [vmem:[%s1 + $0x68] sm:$0xff]
    %v43 = vld [vmem:[%s1 + $0x70] sm:$0xff]
    %v44 = vld [vmem:[%s1 + $0x78] sm:$0xff]
    %v45 = vld [vmem:[%s1 + $0x80] sm:$0xff]
    %v46 = vld [vmem:[%s1 + $0x88] sm:$0xff]
    %v47 = vld [vmem:[%s1 + $0x90] sm:$0xff]
    %v48 = vld [vmem:[%s1 + $0x98] sm:$0xff]
    %v49 = vld [vmem:[%s1 + $0xa0] sm:$0xff]
    %v50 = vld [vmem:[%s1 + $0xa8] sm:$0xff]
    %v51 = vld [vmem:[%s1 + $0xb0] sm:$0xff]
    %v52 = vld [vmem:[%s1 + $0xb8] sm:$0xff]
    %v53 = vld [vmem:[%s1 + $0xc0] sm:$0xff]
    %v54 = vld [vmem:[%s1 + $0xc8] sm:$0xff]
    %v55 = vld [vmem:[%s1 + $0xd0] sm:$0xff]
    %v56 = vld [vmem:[%s1 + $0xd8] sm:$0xff]
    %v57 = vld [vmem:[%s1 + $0xe0] sm:$0xff]
    %v58 = vld [vmem:[%s1 + $0xe8] sm:$0xff]
    %v59 = vld [vmem:[%s1 + $0xf0] sm:$0xff]
    %v60 = vld [vmem:[%s1 + $0xf8] sm:$0xff]
    %62 = vset.pattern.permute.xlu0 0
    %63 = vperm.xlu0 %62, %v29
    %v64 = vpop.permute.xlu0 %63
    %67 = vset.pattern.permute.xlu0 0
    %68 = vperm.xlu0 %67, %v30
    %v69 = vpop.permute.xlu0 %68
    %72 = vset.pattern.permute.xlu0 0
    %73 = vperm.xlu0 %72, %v31
    %v74 = vpop.permute.xlu0 %73
    %77 = vset.pattern.permute.xlu0 0
    %78 = vperm.xlu0 %77, %v32
    %v79 = vpop.permute.xlu0 %78
    %82 = vset.pattern.permute.xlu0 0
    %83 = vperm.xlu0 %82, %v33
    %v84 = vpop.permute.xlu0 %83
    %87 = vset.pattern.permute.xlu0 0
    %88 = vperm.xlu0 %87, %v34
    %v89 = vpop.permute.xlu0 %88
    %92 = vset.pattern.permute.xlu0 0
    %93 = vperm.xlu0 %92, %v35
    %v94 = vpop.permute.xlu0 %93
    %97 = vset.pattern.permute.xlu0 0
    %98 = vperm.xlu0 %97, %v36
    %v99 = vpop.permute.xlu0 %98
    %102 = vset.pattern.permute.xlu0 0
    %103 = vperm.xlu0 %102, %v37
    %v104 = vpop.permute.xlu0 %103
    %107 = vset.pattern.permute.xlu0 0
    %108 = vperm.xlu0 %107, %v38
    %v109 = vpop.permute.xlu0 %108
    %112 = vset.pattern.permute.xlu0 0
    %113 = vperm.xlu0 %112, %v39
    %v114 = vpop.permute.xlu0 %113
    %117 = vset.pattern.permute.xlu0 0
    %118 = vperm.xlu0 %117, %v40
    %v119 = vpop.permute.xlu0 %118
    %122 = vset.pattern.permute.xlu0 0
    %123 = vperm.xlu0 %122, %v41
    %v124 = vpop.permute.xlu0 %123
    %127 = vset.pattern.permute.xlu0 0
    %128 = vperm.xlu0 %127, %v42
    %v129 = vpop.permute.xlu0 %128
    %132 = vset.pattern.permute.xlu0 0
    %133 = vperm.xlu0 %132, %v43
    %v134 = vpop.permute.xlu0 %133
    %137 = vset.pattern.permute.xlu0 0
    %138 = vperm.xlu0 %137, %v44
    %v139 = vpop.permute.xlu0 %138
    %142 = vset.pattern.permute.xlu0 0
    %143 = vperm.xlu0 %142, %v45
    %v144 = vpop.permute.xlu0 %143
    %147 = vset.pattern.permute.xlu0 0
    %148 = vperm.xlu0 %147, %v46
    %v149 = vpop.permute.xlu0 %148
    %152 = vset.pattern.permute.xlu0 0
    %153 = vperm.xlu0 %152, %v47
    %v154 = vpop.permute.xlu0 %153
    %157 = vset.pattern.permute.xlu0 0
    %158 = vperm.xlu0 %157, %v48
    %v159 = vpop.permute.xlu0 %158
    %162 = vset.pattern.permute.xlu0 0
    %163 = vperm.xlu0 %162, %v49
    %v164 = vpop.permute.xlu0 %163
    %167 = vset.pattern.permute.xlu0 0
    %168 = vperm.xlu0 %167, %v50
    %v169 = vpop.permute.xlu0 %168
    %172 = vset.pattern.permute.xlu0 0
    %173 = vperm.xlu0 %172, %v51
    %v174 = vpop.permute.xlu0 %173
    %177 = vset.pattern.permute.xlu0 0
    %178 = vperm.xlu0 %177, %v52
    %v179 = vpop.permute.xlu0 %178
    %182 = vset.pattern.permute.xlu0 0
    %183 = vperm.xlu0 %182, %v53
    %v184 = vpop.permute.xlu0 %183
    %187 = vset.pattern.permute.xlu0 0
    %188 = vperm.xlu0 %187, %v54
    %v189 = vpop.permute.xlu0 %188
    %192 = vset.pattern.permute.xlu0 0
    %193 = vperm.xlu0 %192, %v55
    %v194 = vpop.permute.xlu0 %193
    %197 = vset.pattern.permute.xlu0 0
    %198 = vperm.xlu0 %197, %v56
    %v199 = vpop.permute.xlu0 %198
    %202 = vset.pattern.permute.xlu0 0
    %203 = vperm.xlu0 %202, %v57
    %v204 = vpop.permute.xlu0 %203
    %207 = vset.pattern.permute.xlu0 0
    %208 = vperm.xlu0 %207, %v58
    %v209 = vpop.permute.xlu0 %208
    %212 = vset.pattern.permute.xlu0 0
    %213 = vperm.xlu0 %212, %v59
    %v214 = vpop.permute.xlu0 %213
    %217 = vset.pattern.permute.xlu0 0
    %218 = vperm.xlu0 %217, %v60
    %v219 = vpop.permute.xlu0 %218
    %v222 = vperm.slane %v28, 0
    %v223 = vperm.slane %v28, 1
    %v226 = vmul.f32 %v64, %v222
    %v227 = vmul.f32 %v64, %v223
    %v228 = vmul.f32 %v69, %v222
    %v229 = vmul.f32 %v69, %v223
    %v230 = vmul.f32 %v74, %v222
    %v231 = vmul.f32 %v74, %v223
    %v232 = vmul.f32 %v79, %v222
    %v233 = vmul.f32 %v79, %v223
    %v234 = vmul.f32 %v84, %v222
    %v235 = vmul.f32 %v84, %v223
    %v236 = vmul.f32 %v89, %v222
    %v237 = vmul.f32 %v89, %v223
    %v238 = vmul.f32 %v94, %v222
    %v239 = vmul.f32 %v94, %v223
    %v240 = vmul.f32 %v99, %v222
    %v241 = vmul.f32 %v99, %v223
    %v242 = vmul.f32 %v104, %v222
    %v243 = vmul.f32 %v104, %v223
    %v244 = vmul.f32 %v109, %v222
    %v245 = vmul.f32 %v109, %v223
    %v246 = vmul.f32 %v114, %v222
    %v247 = vmul.f32 %v114, %v223
    %v248 = vmul.f32 %v119, %v222
    %v249 = vmul.f32 %v119, %v223
    %v250 = vmul.f32 %v124, %v222
    %v251 = vmul.f32 %v124, %v223
    %v252 = vmul.f32 %v129, %v222
    %v253 = vmul.f32 %v129, %v223
    %v254 = vmul.f32 %v134, %v222
    %v255 = vmul.f32 %v134, %v223
    %v256 = vmul.f32 %v139, %v222
    %v257 = vmul.f32 %v139, %v223
    %v258 = vmul.f32 %v144, %v222
    %v259 = vmul.f32 %v144, %v223
    %v260 = vmul.f32 %v149, %v222
    %v261 = vmul.f32 %v149, %v223
    %v262 = vmul.f32 %v154, %v222
    %v263 = vmul.f32 %v154, %v223
    %v264 = vmul.f32 %v159, %v222
    %v265 = vmul.f32 %v159, %v223
    %v266 = vmul.f32 %v164, %v222
    %v267 = vmul.f32 %v164, %v223
    %v268 = vmul.f32 %v169, %v222
    %v269 = vmul.f32 %v169, %v223
    %v270 = vmul.f32 %v174, %v222
    %v271 = vmul.f32 %v174, %v223
    %v272 = vmul.f32 %v179, %v222
    %v273 = vmul.f32 %v179, %v223
    %v274 = vmul.f32 %v184, %v222
    %v275 = vmul.f32 %v184, %v223
    %v276 = vmul.f32 %v189, %v222
    %v277 = vmul.f32 %v189, %v223
    %v278 = vmul.f32 %v194, %v222
    %v279 = vmul.f32 %v194, %v223
    %v280 = vmul.f32 %v199, %v222
    %v281 = vmul.f32 %v199, %v223
    %v282 = vmul.f32 %v204, %v222
    %v283 = vmul.f32 %v204, %v223
    %v284 = vmul.f32 %v209, %v222
    %v285 = vmul.f32 %v209, %v223
    %v286 = vmul.f32 %v214, %v222
    %v287 = vmul.f32 %v214, %v223
    %v288 = vmul.f32 %v219, %v222
    %v289 = vmul.f32 %v219, %v223
    %v290 = vld [vmem:[%s2] sm:$0xff]
    %v291 = vld [vmem:[%s2 + $0x8] sm:$0xff]
    %v292 = vld [vmem:[%s2 + $0x10] sm:$0xff]
    %v293 = vld [vmem:[%s2 + $0x18] sm:$0xff]
    %v294 = vld [vmem:[%s2 + $0x20] sm:$0xff]
    %v295 = vld [vmem:[%s2 + $0x28] sm:$0xff]
    %v296 = vld [vmem:[%s2 + $0x30] sm:$0xff]
    %v297 = vld [vmem:[%s2 + $0x38] sm:$0xff]
    %v298 = vld [vmem:[%s2 + $0x40] sm:$0xff]
    %v299 = vld [vmem:[%s2 + $0x48] sm:$0xff]
    %v300 = vld [vmem:[%s2 + $0x50] sm:$0xff]
    %v301 = vld [vmem:[%s2 + $0x58] sm:$0xff]
    %v302 = vld [vmem:[%s2 + $0x60] sm:$0xff]
    %v303 = vld [vmem:[%s2 + $0x68] sm:$0xff]
    %v304 = vld [vmem:[%s2 + $0x70] sm:$0xff]
    %v305 = vld [vmem:[%s2 + $0x78] sm:$0xff]
    %v306 = vld [vmem:[%s2 + $0x80] sm:$0xff]
    %v307 = vld [vmem:[%s2 + $0x88] sm:$0xff]
    %v308 = vld [vmem:[%s2 + $0x90] sm:$0xff]
    %v309 = vld [vmem:[%s2 + $0x98] sm:$0xff]
    %v310 = vld [vmem:[%s2 + $0xa0] sm:$0xff]
    %v311 = vld [vmem:[%s2 + $0xa8] sm:$0xff]
    %v312 = vld [vmem:[%s2 + $0xb0] sm:$0xff]
    %v313 = vld [vmem:[%s2 + $0xb8] sm:$0xff]
    %v314 = vld [vmem:[%s2 + $0xc0] sm:$0xff]
    %v315 = vld [vmem:[%s2 + $0xc8] sm:$0xff]
    %v316 = vld [vmem:[%s2 + $0xd0] sm:$0xff]
    %v317 = vld [vmem:[%s2 + $0xd8] sm:$0xff]
    %v318 = vld [vmem:[%s2 + $0xe0] sm:$0xff]
    %v319 = vld [vmem:[%s2 + $0xe8] sm:$0xff]
    %v320 = vld [vmem:[%s2 + $0xf0] sm:$0xff]
    %v321 = vld [vmem:[%s2 + $0xf8] sm:$0xff]
    %323 = vset.pattern.permute.xlu0 0
    %324 = vperm.xlu0 %323, %v290
    %v325 = vpop.permute.xlu0 %324
    %328 = vset.pattern.permute.xlu0 0
    %329 = vperm.xlu0 %328, %v291
    %v330 = vpop.permute.xlu0 %329
    %333 = vset.pattern.permute.xlu0 0
    %334 = vperm.xlu0 %333, %v292
    %v335 = vpop.permute.xlu0 %334
    %338 = vset.pattern.permute.xlu0 0
    %339 = vperm.xlu0 %338, %v293
    %v340 = vpop.permute.xlu0 %339
    %343 = vset.pattern.permute.xlu0 0
    %344 = vperm.xlu0 %343, %v294
    %v345 = vpop.permute.xlu0 %344
    %348 = vset.pattern.permute.xlu0 0
    %349 = vperm.xlu0 %348, %v295
    %v350 = vpop.permute.xlu0 %349
    %353 = vset.pattern.permute.xlu0 0
    %354 = vperm.xlu0 %353, %v296
    %v355 = vpop.permute.xlu0 %354
    %358 = vset.pattern.permute.xlu0 0
    %359 = vperm.xlu0 %358, %v297
    %v360 = vpop.permute.xlu0 %359
    %363 = vset.pattern.permute.xlu0 0
    %364 = vperm.xlu0 %363, %v298
    %v365 = vpop.permute.xlu0 %364
    %368 = vset.pattern.permute.xlu0 0
    %369 = vperm.xlu0 %368, %v299
    %v370 = vpop.permute.xlu0 %369
    %373 = vset.pattern.permute.xlu0 0
    %374 = vperm.xlu0 %373, %v300
    %v375 = vpop.permute.xlu0 %374
    %378 = vset.pattern.permute.xlu0 0
    %379 = vperm.xlu0 %378, %v301
    %v380 = vpop.permute.xlu0 %379
    %383 = vset.pattern.permute.xlu0 0
    %384 = vperm.xlu0 %383, %v302
    %v385 = vpop.permute.xlu0 %384
    %388 = vset.pattern.permute.xlu0 0
    %389 = vperm.xlu0 %388, %v303
    %v390 = vpop.permute.xlu0 %389
    %393 = vset.pattern.permute.xlu0 0
    %394 = vperm.xlu0 %393, %v304
    %v395 = vpop.permute.xlu0 %394
    %398 = vset.pattern.permute.xlu0 0
    %399 = vperm.xlu0 %398, %v305
    %v400 = vpop.permute.xlu0 %399
    %403 = vset.pattern.permute.xlu0 0
    %404 = vperm.xlu0 %403, %v306
    %v405 = vpop.permute.xlu0 %404
    %408 = vset.pattern.permute.xlu0 0
    %409 = vperm.xlu0 %408, %v307
    %v410 = vpop.permute.xlu0 %409
    %413 = vset.pattern.permute.xlu0 0
    %414 = vperm.xlu0 %413, %v308
    %v415 = vpop.permute.xlu0 %414
    %418 = vset.pattern.permute.xlu0 0
    %419 = vperm.xlu0 %418, %v309
    %v420 = vpop.permute.xlu0 %419
    %423 = vset.pattern.permute.xlu0 0
    %424 = vperm.xlu0 %423, %v310
    %v425 = vpop.permute.xlu0 %424
    %428 = vset.pattern.permute.xlu0 0
    %429 = vperm.xlu0 %428, %v311
    %v430 = vpop.permute.xlu0 %429
    %433 = vset.pattern.permute.xlu0 0
    %434 = vperm.xlu0 %433, %v312
    %v435 = vpop.permute.xlu0 %434
    %438 = vset.pattern.permute.xlu0 0
    %439 = vperm.xlu0 %438, %v313
    %v440 = vpop.permute.xlu0 %439
    %443 = vset.pattern.permute.xlu0 0
    %444 = vperm.xlu0 %443, %v314
    %v445 = vpop.permute.xlu0 %444
    %448 = vset.pattern.permute.xlu0 0
    %449 = vperm.xlu0 %448, %v315
    %v450 = vpop.permute.xlu0 %449
    %453 = vset.pattern.permute.xlu0 0
    %454 = vperm.xlu0 %453, %v316
    %v455 = vpop.permute.xlu0 %454
    %458 = vset.pattern.permute.xlu0 0
    %459 = vperm.xlu0 %458, %v317
    %v460 = vpop.permute.xlu0 %459
    %463 = vset.pattern.permute.xlu0 0
    %464 = vperm.xlu0 %463, %v318
    %v465 = vpop.permute.xlu0 %464
    %468 = vset.pattern.permute.xlu0 0
    %469 = vperm.xlu0 %468, %v319
    %v470 = vpop.permute.xlu0 %469
    %473 = vset.pattern.permute.xlu0 0
    %474 = vperm.xlu0 %473, %v320
    %v475 = vpop.permute.xlu0 %474
    %478 = vset.pattern.permute.xlu0 0
    %479 = vperm.xlu0 %478, %v321
    %v480 = vpop.permute.xlu0 %479
    %v482 = vadd.f32 %v226, %v325
    %v483 = vadd.f32 %v227, %v325
    %v484 = vadd.f32 %v228, %v330
    %v485 = vadd.f32 %v229, %v330
    %v486 = vadd.f32 %v230, %v335
    %v487 = vadd.f32 %v231, %v335
    %v488 = vadd.f32 %v232, %v340
    %v489 = vadd.f32 %v233, %v340
    %v490 = vadd.f32 %v234, %v345
    %v491 = vadd.f32 %v235, %v345
    %v492 = vadd.f32 %v236, %v350
    %v493 = vadd.f32 %v237, %v350
    %v494 = vadd.f32 %v238, %v355
    %v495 = vadd.f32 %v239, %v355
    %v496 = vadd.f32 %v240, %v360
    %v497 = vadd.f32 %v241, %v360
    %v498 = vadd.f32 %v242, %v365
    %v499 = vadd.f32 %v243, %v365
    %v500 = vadd.f32 %v244, %v370
    %v501 = vadd.f32 %v245, %v370
    %v502 = vadd.f32 %v246, %v375
    %v503 = vadd.f32 %v247, %v375
    %v504 = vadd.f32 %v248, %v380
    %v505 = vadd.f32 %v249, %v380
    %v506 = vadd.f32 %v250, %v385
    %v507 = vadd.f32 %v251, %v385
    %v508 = vadd.f32 %v252, %v390
    %v509 = vadd.f32 %v253, %v390
    %v510 = vadd.f32 %v254, %v395
    %v511 = vadd.f32 %v255, %v395
    %v512 = vadd.f32 %v256, %v400
    %v513 = vadd.f32 %v257, %v400
    %v514 = vadd.f32 %v258, %v405
    %v515 = vadd.f32 %v259, %v405
    %v516 = vadd.f32 %v260, %v410
    %v517 = vadd.f32 %v261, %v410
    %v518 = vadd.f32 %v262, %v415
    %v519 = vadd.f32 %v263, %v415
    %v520 = vadd.f32 %v264, %v420
    %v521 = vadd.f32 %v265, %v420
    %v522 = vadd.f32 %v266, %v425
    %v523 = vadd.f32 %v267, %v425
    %v524 = vadd.f32 %v268, %v430
    %v525 = vadd.f32 %v269, %v430
    %v526 = vadd.f32 %v270, %v435
    %v527 = vadd.f32 %v271, %v435
    %v528 = vadd.f32 %v272, %v440
    %v529 = vadd.f32 %v273, %v440
    %v530 = vadd.f32 %v274, %v445
    %v531 = vadd.f32 %v275, %v445
    %v532 = vadd.f32 %v276, %v450
    %v533 = vadd.f32 %v277, %v450
    %v534 = vadd.f32 %v278, %v455
    %v535 = vadd.f32 %v279, %v455
    %v536 = vadd.f32 %v280, %v460
    %v537 = vadd.f32 %v281, %v460
    %v538 = vadd.f32 %v282, %v465
    %v539 = vadd.f32 %v283, %v465
    %v540 = vadd.f32 %v284, %v470
    %v541 = vadd.f32 %v285, %v470
    %v542 = vadd.f32 %v286, %v475
    %v543 = vadd.f32 %v287, %v475
    %v544 = vadd.f32 %v288, %v480
    %v545 = vadd.f32 %v289, %v480
    %v546 = vmax.f32 %v482, 0.0
    %v547 = vmax.f32 %v483, 0.0
    %v548 = vmax.f32 %v484, 0.0
    %v549 = vmax.f32 %v485, 0.0
    %v550 = vmax.f32 %v486, 0.0
    %v551 = vmax.f32 %v487, 0.0
    %v552 = vmax.f32 %v488, 0.0
    %v553 = vmax.f32 %v489, 0.0
    %v554 = vmax.f32 %v490, 0.0
    %v555 = vmax.f32 %v491, 0.0
    %v556 = vmax.f32 %v492, 0.0
    %v557 = vmax.f32 %v493, 0.0
    %v558 = vmax.f32 %v494, 0.0
    %v559 = vmax.f32 %v495, 0.0
    %v560 = vmax.f32 %v496, 0.0
    %v561 = vmax.f32 %v497, 0.0
    %v562 = vmax.f32 %v498, 0.0
    %v563 = vmax.f32 %v499, 0.0
    %v564 = vmax.f32 %v500, 0.0
    %v565 = vmax.f32 %v501, 0.0
    %v566 = vmax.f32 %v502, 0.0
    %v567 = vmax.f32 %v503, 0.0
    %v568 = vmax.f32 %v504, 0.0
    %v569 = vmax.f32 %v505, 0.0
    %v570 = vmax.f32 %v506, 0.0
    %v571 = vmax.f32 %v507, 0.0
    %v572 = vmax.f32 %v508, 0.0
    %v573 = vmax.f32 %v509, 0.0
    %v574 = vmax.f32 %v510, 0.0
    %v575 = vmax.f32 %v511, 0.0
    %v576 = vmax.f32 %v512, 0.0
    %v577 = vmax.f32 %v513, 0.0
    %v578 = vmax.f32 %v514, 0.0
    %v579 = vmax.f32 %v515, 0.0
    %v580 = vmax.f32 %v516, 0.0
    %v581 = vmax.f32 %v517, 0.0
    %v582 = vmax.f32 %v518, 0.0
    %v583 = vmax.f32 %v519, 0.0
    %v584 = vmax.f32 %v520, 0.0
    %v585 = vmax.f32 %v521, 0.0
    %v586 = vmax.f32 %v522, 0.0
    %v587 = vmax.f32 %v523, 0.0
    %v588 = vmax.f32 %v524, 0.0
    %v589 = vmax.f32 %v525, 0.0
    %v590 = vmax.f32 %v526, 0.0
    %v591 = vmax.f32 %v527, 0.0
    %v592 = vmax.f32 %v528, 0.0
    %v593 = vmax.f32 %v529, 0.0
    %v594 = vmax.f32 %v530, 0.0
    %v595 = vmax.f32 %v531, 0.0
    %v596 = vmax.f32 %v532, 0.0
    %v597 = vmax.f32 %v533, 0.0
    %v598 = vmax.f32 %v534, 0.0
    %v599 = vmax.f32 %v535, 0.0
    %v600 = vmax.f32 %v536, 0.0
    %v601 = vmax.f32 %v537, 0.0
    %v602 = vmax.f32 %v538, 0.0
    %v603 = vmax.f32 %v539, 0.0
    %v604 = vmax.f32 %v540, 0.0
    %v605 = vmax.f32 %v541, 0.0
    %v606 = vmax.f32 %v542, 0.0
    %v607 = vmax.f32 %v543, 0.0
    %v608 = vmax.f32 %v544, 0.0
    %v609 = vmax.f32 %v545, 0.0
    %v610 = vld [vmem:[%s3] sm:$0xff]
    %v611 = vld [vmem:[%s3 + $0x8] sm:$0xff]
    %v612 = vld [vmem:[%s3 + $0x10] sm:$0xff]
    %v613 = vld [vmem:[%s3 + $0x18] sm:$0xff]
    %v614 = vld [vmem:[%s3 + $0x20] sm:$0xff]
    %v615 = vld [vmem:[%s3 + $0x28] sm:$0xff]
    %v616 = vld [vmem:[%s3 + $0x30] sm:$0xff]
    %v617 = vld [vmem:[%s3 + $0x38] sm:$0xff]
    %v618 = vld [vmem:[%s3 + $0x40] sm:$0xff]
    %v619 = vld [vmem:[%s3 + $0x48] sm:$0xff]
    %v620 = vld [vmem:[%s3 + $0x50] sm:$0xff]
    %v621 = vld [vmem:[%s3 + $0x58] sm:$0xff]
    %v622 = vld [vmem:[%s3 + $0x60] sm:$0xff]
    %v623 = vld [vmem:[%s3 + $0x68] sm:$0xff]
    %v624 = vld [vmem:[%s3 + $0x70] sm:$0xff]
    %v625 = vld [vmem:[%s3 + $0x78] sm:$0xff]
    %v626 = vld [vmem:[%s3 + $0x80] sm:$0xff]
    %v627 = vld [vmem:[%s3 + $0x88] sm:$0xff]
    %v628 = vld [vmem:[%s3 + $0x90] sm:$0xff]
    %v629 = vld [vmem:[%s3 + $0x98] sm:$0xff]
    %v630 = vld [vmem:[%s3 + $0xa0] sm:$0xff]
    %v631 = vld [vmem:[%s3 + $0xa8] sm:$0xff]
    %v632 = vld [vmem:[%s3 + $0xb0] sm:$0xff]
    %v633 = vld [vmem:[%s3 + $0xb8] sm:$0xff]
    %v634 = vld [vmem:[%s3 + $0xc0] sm:$0xff]
    %v635 = vld [vmem:[%s3 + $0xc8] sm:$0xff]
    %v636 = vld [vmem:[%s3 + $0xd0] sm:$0xff]
    %v637 = vld [vmem:[%s3 + $0xd8] sm:$0xff]
    %v638 = vld [vmem:[%s3 + $0xe0] sm:$0xff]
    %v639 = vld [vmem:[%s3 + $0xe8] sm:$0xff]
    %v640 = vld [vmem:[%s3 + $0xf0] sm:$0xff]
    %v641 = vld [vmem:[%s3 + $0xf8] sm:$0xff]
    %v642 = vpack.c.bf16 %v548, %v546
    %v643 = vpack.c.bf16 %v549, %v547
    %v644 = vpack.c.bf16 %v552, %v550
    %v645 = vpack.c.bf16 %v553, %v551
    %v646 = vpack.c.bf16 %v556, %v554
    %v647 = vpack.c.bf16 %v557, %v555
    %v648 = vpack.c.bf16 %v560, %v558
    %v649 = vpack.c.bf16 %v561, %v559
    %v650 = vpack.c.bf16 %v564, %v562
    %v651 = vpack.c.bf16 %v565, %v563
    %v652 = vpack.c.bf16 %v568, %v566
    %v653 = vpack.c.bf16 %v569, %v567
    %v654 = vpack.c.bf16 %v572, %v570
    %v655 = vpack.c.bf16 %v573, %v571
    %v656 = vpack.c.bf16 %v576, %v574
    %v657 = vpack.c.bf16 %v577, %v575
    %v658 = vpack.c.bf16 %v580, %v578
    %v659 = vpack.c.bf16 %v581, %v579
    %v660 = vpack.c.bf16 %v584, %v582
    %v661 = vpack.c.bf16 %v585, %v583
    %v662 = vpack.c.bf16 %v588, %v586
    %v663 = vpack.c.bf16 %v589, %v587
    %v664 = vpack.c.bf16 %v592, %v590
    %v665 = vpack.c.bf16 %v593, %v591
    %v666 = vpack.c.bf16 %v596, %v594
    %v667 = vpack.c.bf16 %v597, %v595
    %v668 = vpack.c.bf16 %v600, %v598
    %v669 = vpack.c.bf16 %v601, %v599
    %v670 = vpack.c.bf16 %v604, %v602
    %v671 = vpack.c.bf16 %v605, %v603
    %v672 = vpack.c.bf16 %v608, %v606
    %v673 = vpack.c.bf16 %v609, %v607
    %v674 = vld [vmem:[%s4] sm:$0xff]
    %v675 = vld [vmem:[%s4 + $0x8] sm:$0xff]
    %v676 = vld [vmem:[%s4 + $0x10] sm:$0xff]
    %v677 = vld [vmem:[%s4 + $0x18] sm:$0xff]
    %v678 = vld [vmem:[%s4 + $0x20] sm:$0xff]
    %v679 = vld [vmem:[%s4 + $0x28] sm:$0xff]
    %v680 = vld [vmem:[%s4 + $0x30] sm:$0xff]
    %v681 = vld [vmem:[%s4 + $0x38] sm:$0xff]
    %v682 = vld [vmem:[%s4 + $0x40] sm:$0xff]
    %v683 = vld [vmem:[%s4 + $0x48] sm:$0xff]
    %v684 = vld [vmem:[%s4 + $0x50] sm:$0xff]
    %v685 = vld [vmem:[%s4 + $0x58] sm:$0xff]
    %v686 = vld [vmem:[%s4 + $0x60] sm:$0xff]
    %v687 = vld [vmem:[%s4 + $0x68] sm:$0xff]
    %v688 = vld [vmem:[%s4 + $0x70] sm:$0xff]
    %v689 = vld [vmem:[%s4 + $0x78] sm:$0xff]
    %v690 = vld [vmem:[%s4 + $0x80] sm:$0xff]
    %v691 = vld [vmem:[%s4 + $0x88] sm:$0xff]
    %v692 = vld [vmem:[%s4 + $0x90] sm:$0xff]
    %v693 = vld [vmem:[%s4 + $0x98] sm:$0xff]
    %v694 = vld [vmem:[%s4 + $0xa0] sm:$0xff]
    %v695 = vld [vmem:[%s4 + $0xa8] sm:$0xff]
    %v696 = vld [vmem:[%s4 + $0xb0] sm:$0xff]
    %v697 = vld [vmem:[%s4 + $0xb8] sm:$0xff]
    %v698 = vld [vmem:[%s4 + $0xc0] sm:$0xff]
    %v699 = vld [vmem:[%s4 + $0xc8] sm:$0xff]
    %v700 = vld [vmem:[%s4 + $0xd0] sm:$0xff]
    %v701 = vld [vmem:[%s4 + $0xd8] sm:$0xff]
    %v702 = vld [vmem:[%s4 + $0xe0] sm:$0xff]
    %v703 = vld [vmem:[%s4 + $0xe8] sm:$0xff]
    %v704 = vld [vmem:[%s4 + $0xf0] sm:$0xff]
    %v705 = vld [vmem:[%s4 + $0xf8] sm:$0xff]
    %707 = vset.pattern.permute.xlu0 0
    %708 = vperm.xlu0 %707, %v674
    %v709 = vpop.permute.xlu0 %708
    %712 = vset.pattern.permute.xlu0 0
    %713 = vperm.xlu0 %712, %v675
    %v714 = vpop.permute.xlu0 %713
    %717 = vset.pattern.permute.xlu0 0
    %718 = vperm.xlu0 %717, %v676
    %v719 = vpop.permute.xlu0 %718
    %722 = vset.pattern.permute.xlu0 0
    %723 = vperm.xlu0 %722, %v677
    %v724 = vpop.permute.xlu0 %723
    %727 = vset.pattern.permute.xlu0 0
    %728 = vperm.xlu0 %727, %v678
    %v729 = vpop.permute.xlu0 %728
    %732 = vset.pattern.permute.xlu0 0
    %733 = vperm.xlu0 %732, %v679
    %v734 = vpop.permute.xlu0 %733
    %737 = vset.pattern.permute.xlu0 0
    %738 = vperm.xlu0 %737, %v680
    %v739 = vpop.permute.xlu0 %738
    %742 = vset.pattern.permute.xlu0 0
    %743 = vperm.xlu0 %742, %v681
    %v744 = vpop.permute.xlu0 %743
    %747 = vset.pattern.permute.xlu0 0
    %748 = vperm.xlu0 %747, %v682
    %v749 = vpop.permute.xlu0 %748
    %752 = vset.pattern.permute.xlu0 0
    %753 = vperm.xlu0 %752, %v683
    %v754 = vpop.permute.xlu0 %753
    %757 = vset.pattern.permute.xlu0 0
    %758 = vperm.xlu0 %757, %v684
    %v759 = vpop.permute.xlu0 %758
    %762 = vset.pattern.permute.xlu0 0
    %763 = vperm.xlu0 %762, %v685
    %v764 = vpop.permute.xlu0 %763
    %767 = vset.pattern.permute.xlu0 0
    %768 = vperm.xlu0 %767, %v686
    %v769 = vpop.permute.xlu0 %768
    %772 = vset.pattern.permute.xlu0 0
    %773 = vperm.xlu0 %772, %v687
    %v774 = vpop.permute.xlu0 %773
    %777 = vset.pattern.permute.xlu0 0
    %778 = vperm.xlu0 %777, %v688
    %v779 = vpop.permute.xlu0 %778
    %782 = vset.pattern.permute.xlu0 0
    %783 = vperm.xlu0 %782, %v689
    %v784 = vpop.permute.xlu0 %783
    %787 = vset.pattern.permute.xlu0 0
    %788 = vperm.xlu0 %787, %v690
    %v789 = vpop.permute.xlu0 %788
    %792 = vset.pattern.permute.xlu0 0
    %793 = vperm.xlu0 %792, %v691
    %v794 = vpop.permute.xlu0 %793
    %797 = vset.pattern.permute.xlu0 0
    %798 = vperm.xlu0 %797, %v692
    %v799 = vpop.permute.xlu0 %798
    %802 = vset.pattern.permute.xlu0 0
    %803 = vperm.xlu0 %802, %v693
    %v804 = vpop.permute.xlu0 %803
    %807 = vset.pattern.permute.xlu0 0
    %808 = vperm.xlu0 %807, %v694
    %v809 = vpop.permute.xlu0 %808
    %812 = vset.pattern.permute.xlu0 0
    %813 = vperm.xlu0 %812, %v695
    %v814 = vpop.permute.xlu0 %813
    %817 = vset.pattern.permute.xlu0 0
    %818 = vperm.xlu0 %817, %v696
    %v819 = vpop.permute.xlu0 %818
    %822 = vset.pattern.permute.xlu0 0
    %823 = vperm.xlu0 %822, %v697
    %v824 = vpop.permute.xlu0 %823
    %827 = vset.pattern.permute.xlu0 0
    %828 = vperm.xlu0 %827, %v698
    %v829 = vpop.permute.xlu0 %828
    %832 = vset.pattern.permute.xlu0 0
    %833 = vperm.xlu0 %832, %v699
    %v834 = vpop.permute.xlu0 %833
    %837 = vset.pattern.permute.xlu0 0
    %838 = vperm.xlu0 %837, %v700
    %v839 = vpop.permute.xlu0 %838
    %842 = vset.pattern.permute.xlu0 0
    %843 = vperm.xlu0 %842, %v701
    %v844 = vpop.permute.xlu0 %843
    %847 = vset.pattern.permute.xlu0 0
    %848 = vperm.xlu0 %847, %v702
    %v849 = vpop.permute.xlu0 %848
    %852 = vset.pattern.permute.xlu0 0
    %853 = vperm.xlu0 %852, %v703
    %v854 = vpop.permute.xlu0 %853
    %857 = vset.pattern.permute.xlu0 0
    %858 = vperm.xlu0 %857, %v704
    %v859 = vpop.permute.xlu0 %858
    %862 = vset.pattern.permute.xlu0 0
    %863 = vperm.xlu0 %862, %v705
    %v864 = vpop.permute.xlu0 %863
    %v898 = vunpack.c.l.b16 %v610
    %v899 = vunpack.c.h.b16 %v610
    %v900 = vunpack.c.l.b16 %v611
    %v901 = vunpack.c.h.b16 %v611
    %v902 = vunpack.c.l.b16 %v612
    %v903 = vunpack.c.h.b16 %v612
    %v904 = vunpack.c.l.b16 %v613
    %v905 = vunpack.c.h.b16 %v613
    %v906 = vunpack.c.l.b16 %v614
    %v907 = vunpack.c.h.b16 %v614
    %v908 = vunpack.c.l.b16 %v615
    %v909 = vunpack.c.h.b16 %v615
    %v910 = vunpack.c.l.b16 %v616
    %v911 = vunpack.c.h.b16 %v616
    %v912 = vunpack.c.l.b16 %v617
    %v913 = vunpack.c.h.b16 %v617
    %v914 = vunpack.c.l.b16 %v618
    %v915 = vunpack.c.h.b16 %v618
    %v916 = vunpack.c.l.b16 %v619
    %v917 = vunpack.c.h.b16 %v619
    %v918 = vunpack.c.l.b16 %v620
    %v919 = vunpack.c.h.b16 %v620
    %v920 = vunpack.c.l.b16 %v621
    %v921 = vunpack.c.h.b16 %v621
    %v922 = vunpack.c.l.b16 %v622
    %v923 = vunpack.c.h.b16 %v622
    %v924 = vunpack.c.l.b16 %v623
    %v925 = vunpack.c.h.b16 %v623
    %v926 = vunpack.c.l.b16 %v624
    %v927 = vunpack.c.h.b16 %v624
    %v928 = vunpack.c.l.b16 %v625
    %v929 = vunpack.c.h.b16 %v625
    %v930 = vunpack.c.l.b16 %v626
    %v931 = vunpack.c.h.b16 %v626
    %v932 = vunpack.c.l.b16 %v627
    %v933 = vunpack.c.h.b16 %v627
    %v934 = vunpack.c.l.b16 %v628
    %v935 = vunpack.c.h.b16 %v628
    %v936 = vunpack.c.l.b16 %v629
    %v937 = vunpack.c.h.b16 %v629
    %v938 = vunpack.c.l.b16 %v630
    %v939 = vunpack.c.h.b16 %v630
    %v940 = vunpack.c.l.b16 %v631
    %v941 = vunpack.c.h.b16 %v631
    %v942 = vunpack.c.l.b16 %v632
    %v943 = vunpack.c.h.b16 %v632
    %v944 = vunpack.c.l.b16 %v633
    %v945 = vunpack.c.h.b16 %v633
    %v946 = vunpack.c.l.b16 %v634
    %v947 = vunpack.c.h.b16 %v634
    %v948 = vunpack.c.l.b16 %v635
    %v949 = vunpack.c.h.b16 %v635
    %v950 = vunpack.c.l.b16 %v636
    %v951 = vunpack.c.h.b16 %v636
    %v952 = vunpack.c.l.b16 %v637
    %v953 = vunpack.c.h.b16 %v637
    %v954 = vunpack.c.l.b16 %v638
    %v955 = vunpack.c.h.b16 %v638
    %v956 = vunpack.c.l.b16 %v639
    %v957 = vunpack.c.h.b16 %v639
    %v958 = vunpack.c.l.b16 %v640
    %v959 = vunpack.c.h.b16 %v640
    %v960 = vunpack.c.l.b16 %v641
    %v961 = vunpack.c.h.b16 %v641
    %v962 = vpack.c.b16 %v900, %v898
    %v963 = vpack.c.b16 %v901, %v899
    %v964 = vpack.c.b16 %v904, %v902
    %v965 = vpack.c.b16 %v905, %v903
    %v966 = vpack.c.b16 %v908, %v906
    %v967 = vpack.c.b16 %v909, %v907
    %v968 = vpack.c.b16 %v912, %v910
    %v969 = vpack.c.b16 %v913, %v911
    %v970 = vpack.c.b16 %v916, %v914
    %v971 = vpack.c.b16 %v917, %v915
    %v972 = vpack.c.b16 %v920, %v918
    %v973 = vpack.c.b16 %v921, %v919
    %v974 = vpack.c.b16 %v924, %v922
    %v975 = vpack.c.b16 %v925, %v923
    %v976 = vpack.c.b16 %v928, %v926
    %v977 = vpack.c.b16 %v929, %v927
    %v978 = vpack.c.b16 %v932, %v930
    %v979 = vpack.c.b16 %v933, %v931
    %v980 = vpack.c.b16 %v936, %v934
    %v981 = vpack.c.b16 %v937, %v935
    %v982 = vpack.c.b16 %v940, %v938
    %v983 = vpack.c.b16 %v941, %v939
    %v984 = vpack.c.b16 %v944, %v942
    %v985 = vpack.c.b16 %v945, %v943
    %v986 = vpack.c.b16 %v948, %v946
    %v987 = vpack.c.b16 %v949, %v947
    %v988 = vpack.c.b16 %v952, %v950
    %v989 = vpack.c.b16 %v953, %v951
    %v990 = vpack.c.b16 %v956, %v954
    %v991 = vpack.c.b16 %v957, %v955
    %v992 = vpack.c.b16 %v960, %v958
    %v993 = vpack.c.b16 %v961, %v959
    %1026 = vmatpush.bf16.msra.mxu0 %v656
    %1027 = vmatpush.bf16.msra.mxu0 %v654
    %1028 = vmatpush.bf16.msra.mxu0 %v652
    %1029 = vmatpush.bf16.msra.mxu0 %v650
    %1030 = vmatpush.bf16.msra.mxu0 %v648
    %1031 = vmatpush.bf16.msra.mxu0 %v646
    %1032 = vmatpush.bf16.msra.mxu0 %v644
    %1033 = vmatpush.bf16.msra.mxu0 %v642
    %1034 = vmatmul.bf16.gmra.mxu0 %v962
    %v1035 = vpop.f32.mrf.mxu0
    %v1036 = vadd.f32 %v709, %v1035
    %v1037 = vpop.f32.mrf.mxu0
    %v1038 = vadd.f32 %v714, %v1037
    %1039 = vmatmul.bf16.gmra.mxu0 %v964
    %v1040 = vpop.f32.mrf.mxu0
    %v1041 = vadd.f32 %v719, %v1040
    %v1042 = vpop.f32.mrf.mxu0
    %v1043 = vadd.f32 %v724, %v1042
    %1044 = vmatmul.bf16.gmra.mxu0 %v966
    %v1045 = vpop.f32.mrf.mxu0
    %v1046 = vadd.f32 %v729, %v1045
    %v1047 = vpop.f32.mrf.mxu0
    %v1048 = vadd.f32 %v734, %v1047
    %1049 = vmatmul.bf16.gmra.mxu0 %v968
    %v1050 = vpop.f32.mrf.mxu0
    %v1051 = vadd.f32 %v739, %v1050
    %v1052 = vpop.f32.mrf.mxu0
    %v1053 = vadd.f32 %v744, %v1052
    %1054 = vmatmul.bf16.gmra.mxu0 %v970
    %v1055 = vpop.f32.mrf.mxu0
    %v1056 = vadd.f32 %v749, %v1055
    %v1057 = vpop.f32.mrf.mxu0
    %v1058 = vadd.f32 %v754, %v1057
    %1059 = vmatmul.bf16.gmra.mxu0 %v972
    %v1060 = vpop.f32.mrf.mxu0
    %v1061 = vadd.f32 %v759, %v1060
    %v1062 = vpop.f32.mrf.mxu0
    %v1063 = vadd.f32 %v764, %v1062
    %1064 = vmatmul.bf16.gmra.mxu0 %v974
    %v1065 = vpop.f32.mrf.mxu0
    %v1066 = vadd.f32 %v769, %v1065
    %v1067 = vpop.f32.mrf.mxu0
    %v1068 = vadd.f32 %v774, %v1067
    %1069 = vmatmul.bf16.gmra.mxu0 %v976
    %v1070 = vpop.f32.mrf.mxu0
    %v1071 = vadd.f32 %v779, %v1070
    %v1072 = vpop.f32.mrf.mxu0
    %v1073 = vadd.f32 %v784, %v1072
    %1074 = vmatmul.bf16.gmra.mxu0 %v978
    %v1075 = vpop.f32.mrf.mxu0
    %v1076 = vadd.f32 %v789, %v1075
    %v1077 = vpop.f32.mrf.mxu0
    %v1078 = vadd.f32 %v794, %v1077
    %1079 = vmatmul.bf16.gmra.mxu0 %v980
    %v1080 = vpop.f32.mrf.mxu0
    %v1081 = vadd.f32 %v799, %v1080
    %v1082 = vpop.f32.mrf.mxu0
    %v1083 = vadd.f32 %v804, %v1082
    %1084 = vmatmul.bf16.gmra.mxu0 %v982
    %v1085 = vpop.f32.mrf.mxu0
    %v1086 = vadd.f32 %v809, %v1085
    %v1087 = vpop.f32.mrf.mxu0
    %v1088 = vadd.f32 %v814, %v1087
    %1089 = vmatmul.bf16.gmra.mxu0 %v984
    %v1090 = vpop.f32.mrf.mxu0
    %v1091 = vadd.f32 %v819, %v1090
    %v1092 = vpop.f32.mrf.mxu0
    %v1093 = vadd.f32 %v824, %v1092
    %1094 = vmatmul.bf16.gmra.mxu0 %v986
    %v1095 = vpop.f32.mrf.mxu0
    %v1096 = vadd.f32 %v829, %v1095
    %v1097 = vpop.f32.mrf.mxu0
    %v1098 = vadd.f32 %v834, %v1097
    %1099 = vmatmul.bf16.gmra.mxu0 %v988
    %v1100 = vpop.f32.mrf.mxu0
    %v1101 = vadd.f32 %v839, %v1100
    %v1102 = vpop.f32.mrf.mxu0
    %v1103 = vadd.f32 %v844, %v1102
    %1104 = vmatmul.bf16.gmra.mxu0 %v990
    %v1105 = vpop.f32.mrf.mxu0
    %v1106 = vadd.f32 %v849, %v1105
    %v1107 = vpop.f32.mrf.mxu0
    %v1108 = vadd.f32 %v854, %v1107
    %1109 = vmatmul.bf16.gmra.mxu0 %v992
    %v1110 = vpop.f32.mrf.mxu0
    %v1111 = vadd.f32 %v859, %v1110
    %v1112 = vpop.f32.mrf.mxu0
    %v1113 = vadd.f32 %v864, %v1112
    %1114 = vdwg.mxu0
    %1115 = vmatpush.bf16.msra.mxu0 %v672
    %1116 = vmatpush.bf16.msra.mxu0 %v670
    %1117 = vmatpush.bf16.msra.mxu0 %v668
    %1118 = vmatpush.bf16.msra.mxu0 %v666
    %1119 = vmatpush.bf16.msra.mxu0 %v664
    %1120 = vmatpush.bf16.msra.mxu0 %v662
    %1121 = vmatpush.bf16.msra.mxu0 %v660
    %1122 = vmatpush.bf16.msra.mxu0 %v658
    %1123 = vmatmul.bf16.gmra.mxu0 %v963
    %v1124 = vpop.f32.mrf.mxu0
    %v1125 = vadd.f32 %v1036, %v1124
    %v1126 = vpop.f32.mrf.mxu0
    %v1127 = vadd.f32 %v1038, %v1126
    %1128 = vmatmul.bf16.gmra.mxu0 %v965
    %v1129 = vpop.f32.mrf.mxu0
    %v1130 = vadd.f32 %v1041, %v1129
    %v1131 = vpop.f32.mrf.mxu0
    %v1132 = vadd.f32 %v1043, %v1131
    %1133 = vmatmul.bf16.gmra.mxu0 %v967
    %v1134 = vpop.f32.mrf.mxu0
    %v1135 = vadd.f32 %v1046, %v1134
    %v1136 = vpop.f32.mrf.mxu0
    %v1137 = vadd.f32 %v1048, %v1136
    %1138 = vmatmul.bf16.gmra.mxu0 %v969
    %v1139 = vpop.f32.mrf.mxu0
    %v1140 = vadd.f32 %v1051, %v1139
    %v1141 = vpop.f32.mrf.mxu0
    %v1142 = vadd.f32 %v1053, %v1141
    %1143 = vmatmul.bf16.gmra.mxu0 %v971
    %v1144 = vpop.f32.mrf.mxu0
    %v1145 = vadd.f32 %v1056, %v1144
    %v1146 = vpop.f32.mrf.mxu0
    %v1147 = vadd.f32 %v1058, %v1146
    %1148 = vmatmul.bf16.gmra.mxu0 %v973
    %v1149 = vpop.f32.mrf.mxu0
    %v1150 = vadd.f32 %v1061, %v1149
    %v1151 = vpop.f32.mrf.mxu0
    %v1152 = vadd.f32 %v1063, %v1151
    %1153 = vmatmul.bf16.gmra.mxu0 %v975
    %v1154 = vpop.f32.mrf.mxu0
    %v1155 = vadd.f32 %v1066, %v1154
    %v1156 = vpop.f32.mrf.mxu0
    %v1157 = vadd.f32 %v1068, %v1156
    %1158 = vmatmul.bf16.gmra.mxu0 %v977
    %v1159 = vpop.f32.mrf.mxu0
    %v1160 = vadd.f32 %v1071, %v1159
    %v1161 = vpop.f32.mrf.mxu0
    %v1162 = vadd.f32 %v1073, %v1161
    %1163 = vmatmul.bf16.gmra.mxu0 %v979
    %v1164 = vpop.f32.mrf.mxu0
    %v1165 = vadd.f32 %v1076, %v1164
    %v1166 = vpop.f32.mrf.mxu0
    %v1167 = vadd.f32 %v1078, %v1166
    %1168 = vmatmul.bf16.gmra.mxu0 %v981
    %v1169 = vpop.f32.mrf.mxu0
    %v1170 = vadd.f32 %v1081, %v1169
    %v1171 = vpop.f32.mrf.mxu0
    %v1172 = vadd.f32 %v1083, %v1171
    %1173 = vmatmul.bf16.gmra.mxu0 %v983
    %v1174 = vpop.f32.mrf.mxu0
    %v1175 = vadd.f32 %v1086, %v1174
    %v1176 = vpop.f32.mrf.mxu0
    %v1177 = vadd.f32 %v1088, %v1176
    %1178 = vmatmul.bf16.gmra.mxu0 %v985
    %v1179 = vpop.f32.mrf.mxu0
    %v1180 = vadd.f32 %v1091, %v1179
    %v1181 = vpop.f32.mrf.mxu0
    %v1182 = vadd.f32 %v1093, %v1181
    %1183 = vmatmul.bf16.gmra.mxu0 %v987
    %v1184 = vpop.f32.mrf.mxu0
    %v1185 = vadd.f32 %v1096, %v1184
    %v1186 = vpop.f32.mrf.mxu0
    %v1187 = vadd.f32 %v1098, %v1186
    %1188 = vmatmul.bf16.gmra.mxu0 %v989
    %v1189 = vpop.f32.mrf.mxu0
    %v1190 = vadd.f32 %v1101, %v1189
    %v1191 = vpop.f32.mrf.mxu0
    %v1192 = vadd.f32 %v1103, %v1191
    %1193 = vmatmul.bf16.gmra.mxu0 %v991
    %v1194 = vpop.f32.mrf.mxu0
    %v1195 = vadd.f32 %v1106, %v1194
    %v1196 = vpop.f32.mrf.mxu0
    %v1197 = vadd.f32 %v1108, %v1196
    %1198 = vmatmul.bf16.gmra.mxu0 %v993
    %v1199 = vpop.f32.mrf.mxu0
    %v1200 = vadd.f32 %v1111, %v1199
    %v1201 = vpop.f32.mrf.mxu0
    %v1202 = vadd.f32 %v1113, %v1201
    %1203 = vdwg.mxu0
    %1204 = vmatpush.bf16.msra.mxu0 %v657
    %1205 = vmatpush.bf16.msra.mxu0 %v655
    %1206 = vmatpush.bf16.msra.mxu0 %v653
    %1207 = vmatpush.bf16.msra.mxu0 %v651
    %1208 = vmatpush.bf16.msra.mxu0 %v649
    %1209 = vmatpush.bf16.msra.mxu0 %v647
    %1210 = vmatpush.bf16.msra.mxu0 %v645
    %1211 = vmatpush.bf16.msra.mxu0 %v643
    %1212 = vmatmul.bf16.gmra.mxu0 %v962
    %v1213 = vpop.f32.mrf.mxu0
    %v1214 = vadd.f32 %v709, %v1213
    %v1215 = vpop.f32.mrf.mxu0
    %v1216 = vadd.f32 %v714, %v1215
    %1217 = vmatmul.bf16.gmra.mxu0 %v964
    %v1218 = vpop.f32.mrf.mxu0
    %v1219 = vadd.f32 %v719, %v1218
    %v1220 = vpop.f32.mrf.mxu0
    %v1221 = vadd.f32 %v724, %v1220
    %1222 = vmatmul.bf16.gmra.mxu0 %v966
    %v1223 = vpop.f32.mrf.mxu0
    %v1224 = vadd.f32 %v729, %v1223
    %v1225 = vpop.f32.mrf.mxu0
    %v1226 = vadd.f32 %v734, %v1225
    %1227 = vmatmul.bf16.gmra.mxu0 %v968
    %v1228 = vpop.f32.mrf.mxu0
    %v1229 = vadd.f32 %v739, %v1228
    %v1230 = vpop.f32.mrf.mxu0
    %v1231 = vadd.f32 %v744, %v1230
    %1232 = vmatmul.bf16.gmra.mxu0 %v970
    %v1233 = vpop.f32.mrf.mxu0
    %v1234 = vadd.f32 %v749, %v1233
    %v1235 = vpop.f32.mrf.mxu0
    %v1236 = vadd.f32 %v754, %v1235
    %1237 = vmatmul.bf16.gmra.mxu0 %v972
    %v1238 = vpop.f32.mrf.mxu0
    %v1239 = vadd.f32 %v759, %v1238
    %v1240 = vpop.f32.mrf.mxu0
    %v1241 = vadd.f32 %v764, %v1240
    %1242 = vmatmul.bf16.gmra.mxu0 %v974
    %v1243 = vpop.f32.mrf.mxu0
    %v1244 = vadd.f32 %v769, %v1243
    %v1245 = vpop.f32.mrf.mxu0
    %v1246 = vadd.f32 %v774, %v1245
    %1247 = vmatmul.bf16.gmra.mxu0 %v976
    %v1248 = vpop.f32.mrf.mxu0
    %v1249 = vadd.f32 %v779, %v1248
    %v1250 = vpop.f32.mrf.mxu0
    %v1251 = vadd.f32 %v784, %v1250
    %1252 = vmatmul.bf16.gmra.mxu0 %v978
    %v1253 = vpop.f32.mrf.mxu0
    %v1254 = vadd.f32 %v789, %v1253
    %v1255 = vpop.f32.mrf.mxu0
    %v1256 = vadd.f32 %v794, %v1255
    %1257 = vmatmul.bf16.gmra.mxu0 %v980
    %v1258 = vpop.f32.mrf.mxu0
    %v1259 = vadd.f32 %v799, %v1258
    %v1260 = vpop.f32.mrf.mxu0
    %v1261 = vadd.f32 %v804, %v1260
    %1262 = vmatmul.bf16.gmra.mxu0 %v982
    %v1263 = vpop.f32.mrf.mxu0
    %v1264 = vadd.f32 %v809, %v1263
    %v1265 = vpop.f32.mrf.mxu0
    %v1266 = vadd.f32 %v814, %v1265
    %1267 = vmatmul.bf16.gmra.mxu0 %v984
    %v1268 = vpop.f32.mrf.mxu0
    %v1269 = vadd.f32 %v819, %v1268
    %v1270 = vpop.f32.mrf.mxu0
    %v1271 = vadd.f32 %v824, %v1270
    %1272 = vmatmul.bf16.gmra.mxu0 %v986
    %v1273 = vpop.f32.mrf.mxu0
    %v1274 = vadd.f32 %v829, %v1273
    %v1275 = vpop.f32.mrf.mxu0
    %v1276 = vadd.f32 %v834, %v1275
    %1277 = vmatmul.bf16.gmra.mxu0 %v988
    %v1278 = vpop.f32.mrf.mxu0
    %v1279 = vadd.f32 %v839, %v1278
    %v1280 = vpop.f32.mrf.mxu0
    %v1281 = vadd.f32 %v844, %v1280
    %1282 = vmatmul.bf16.gmra.mxu0 %v990
    %v1283 = vpop.f32.mrf.mxu0
    %v1284 = vadd.f32 %v849, %v1283
    %v1285 = vpop.f32.mrf.mxu0
    %v1286 = vadd.f32 %v854, %v1285
    %1287 = vmatmul.bf16.gmra.mxu0 %v992
    %v1288 = vpop.f32.mrf.mxu0
    %v1289 = vadd.f32 %v859, %v1288
    %v1290 = vpop.f32.mrf.mxu0
    %v1291 = vadd.f32 %v864, %v1290
    %1292 = vdwg.mxu0
    %1293 = vmatpush.bf16.msra.mxu0 %v673
    %1294 = vmatpush.bf16.msra.mxu0 %v671
    %1295 = vmatpush.bf16.msra.mxu0 %v669
    %1296 = vmatpush.bf16.msra.mxu0 %v667
    %1297 = vmatpush.bf16.msra.mxu0 %v665
    %1298 = vmatpush.bf16.msra.mxu0 %v663
    %1299 = vmatpush.bf16.msra.mxu0 %v661
    %1300 = vmatpush.bf16.msra.mxu0 %v659
    %1301 = vmatmul.bf16.gmra.mxu0 %v963
    %v1302 = vpop.f32.mrf.mxu0
    %v1303 = vadd.f32 %v1214, %v1302
    %v1304 = vpop.f32.mrf.mxu0
    %v1305 = vadd.f32 %v1216, %v1304
    %1306 = vmatmul.bf16.gmra.mxu0 %v965
    %v1307 = vpop.f32.mrf.mxu0
    %v1308 = vadd.f32 %v1219, %v1307
    %v1309 = vpop.f32.mrf.mxu0
    %v1310 = vadd.f32 %v1221, %v1309
    %1311 = vmatmul.bf16.gmra.mxu0 %v967
    %v1312 = vpop.f32.mrf.mxu0
    %v1313 = vadd.f32 %v1224, %v1312
    %v1314 = vpop.f32.mrf.mxu0
    %v1315 = vadd.f32 %v1226, %v1314
    %1316 = vmatmul.bf16.gmra.mxu0 %v969
    %v1317 = vpop.f32.mrf.mxu0
    %v1318 = vadd.f32 %v1229, %v1317
    %v1319 = vpop.f32.mrf.mxu0
    %v1320 = vadd.f32 %v1231, %v1319
    %1321 = vmatmul.bf16.gmra.mxu0 %v971
    %v1322 = vpop.f32.mrf.mxu0
    %v1323 = vadd.f32 %v1234, %v1322
    %v1324 = vpop.f32.mrf.mxu0
    %v1325 = vadd.f32 %v1236, %v1324
    %1326 = vmatmul.bf16.gmra.mxu0 %v973
    %v1327 = vpop.f32.mrf.mxu0
    %v1328 = vadd.f32 %v1239, %v1327
    %v1329 = vpop.f32.mrf.mxu0
    %v1330 = vadd.f32 %v1241, %v1329
    %1331 = vmatmul.bf16.gmra.mxu0 %v975
    %v1332 = vpop.f32.mrf.mxu0
    %v1333 = vadd.f32 %v1244, %v1332
    %v1334 = vpop.f32.mrf.mxu0
    %v1335 = vadd.f32 %v1246, %v1334
    %1336 = vmatmul.bf16.gmra.mxu0 %v977
    %v1337 = vpop.f32.mrf.mxu0
    %v1338 = vadd.f32 %v1249, %v1337
    %v1339 = vpop.f32.mrf.mxu0
    %v1340 = vadd.f32 %v1251, %v1339
    %1341 = vmatmul.bf16.gmra.mxu0 %v979
    %v1342 = vpop.f32.mrf.mxu0
    %v1343 = vadd.f32 %v1254, %v1342
    %v1344 = vpop.f32.mrf.mxu0
    %v1345 = vadd.f32 %v1256, %v1344
    %1346 = vmatmul.bf16.gmra.mxu0 %v981
    %v1347 = vpop.f32.mrf.mxu0
    %v1348 = vadd.f32 %v1259, %v1347
    %v1349 = vpop.f32.mrf.mxu0
    %v1350 = vadd.f32 %v1261, %v1349
    %1351 = vmatmul.bf16.gmra.mxu0 %v983
    %v1352 = vpop.f32.mrf.mxu0
    %v1353 = vadd.f32 %v1264, %v1352
    %v1354 = vpop.f32.mrf.mxu0
    %v1355 = vadd.f32 %v1266, %v1354
    %1356 = vmatmul.bf16.gmra.mxu0 %v985
    %v1357 = vpop.f32.mrf.mxu0
    %v1358 = vadd.f32 %v1269, %v1357
    %v1359 = vpop.f32.mrf.mxu0
    %v1360 = vadd.f32 %v1271, %v1359
    %1361 = vmatmul.bf16.gmra.mxu0 %v987
    %v1362 = vpop.f32.mrf.mxu0
    %v1363 = vadd.f32 %v1274, %v1362
    %v1364 = vpop.f32.mrf.mxu0
    %v1365 = vadd.f32 %v1276, %v1364
    %1366 = vmatmul.bf16.gmra.mxu0 %v989
    %v1367 = vpop.f32.mrf.mxu0
    %v1368 = vadd.f32 %v1279, %v1367
    %v1369 = vpop.f32.mrf.mxu0
    %v1370 = vadd.f32 %v1281, %v1369
    %1371 = vmatmul.bf16.gmra.mxu0 %v991
    %v1372 = vpop.f32.mrf.mxu0
    %v1373 = vadd.f32 %v1284, %v1372
    %v1374 = vpop.f32.mrf.mxu0
    %v1375 = vadd.f32 %v1286, %v1374
    %1376 = vmatmul.bf16.gmra.mxu0 %v993
    %v1377 = vpop.f32.mrf.mxu0
    %v1378 = vadd.f32 %v1289, %v1377
    %v1379 = vpop.f32.mrf.mxu0
    %v1380 = vadd.f32 %v1291, %v1379
    %1381 = vdwg.mxu0
    %v1382 = vmax.f32 %v1125, 0.0
    %v1383 = vmax.f32 %v1303, 0.0
    %v1384 = vmax.f32 %v1127, 0.0
    %v1385 = vmax.f32 %v1305, 0.0
    %v1386 = vmax.f32 %v1130, 0.0
    %v1387 = vmax.f32 %v1308, 0.0
    %v1388 = vmax.f32 %v1132, 0.0
    %v1389 = vmax.f32 %v1310, 0.0
    %v1390 = vmax.f32 %v1135, 0.0
    %v1391 = vmax.f32 %v1313, 0.0
    %v1392 = vmax.f32 %v1137, 0.0
    %v1393 = vmax.f32 %v1315, 0.0
    %v1394 = vmax.f32 %v1140, 0.0
    %v1395 = vmax.f32 %v1318, 0.0
    %v1396 = vmax.f32 %v1142, 0.0
    %v1397 = vmax.f32 %v1320, 0.0
    %v1398 = vmax.f32 %v1145, 0.0
    %v1399 = vmax.f32 %v1323, 0.0
    %v1400 = vmax.f32 %v1147, 0.0
    %v1401 = vmax.f32 %v1325, 0.0
    %v1402 = vmax.f32 %v1150, 0.0
    %v1403 = vmax.f32 %v1328, 0.0
    %v1404 = vmax.f32 %v1152, 0.0
    %v1405 = vmax.f32 %v1330, 0.0
    %v1406 = vmax.f32 %v1155, 0.0
    %v1407 = vmax.f32 %v1333, 0.0
    %v1408 = vmax.f32 %v1157, 0.0
    %v1409 = vmax.f32 %v1335, 0.0
    %v1410 = vmax.f32 %v1160, 0.0
    %v1411 = vmax.f32 %v1338, 0.0
    %v1412 = vmax.f32 %v1162, 0.0
    %v1413 = vmax.f32 %v1340, 0.0
    %v1414 = vmax.f32 %v1165, 0.0
    %v1415 = vmax.f32 %v1343, 0.0
    %v1416 = vmax.f32 %v1167, 0.0
    %v1417 = vmax.f32 %v1345, 0.0
    %v1418 = vmax.f32 %v1170, 0.0
    %v1419 = vmax.f32 %v1348, 0.0
    %v1420 = vmax.f32 %v1172, 0.0
    %v1421 = vmax.f32 %v1350, 0.0
    %v1422 = vmax.f32 %v1175, 0.0
    %v1423 = vmax.f32 %v1353, 0.0
    %v1424 = vmax.f32 %v1177, 0.0
    %v1425 = vmax.f32 %v1355, 0.0
    %v1426 = vmax.f32 %v1180, 0.0
    %v1427 = vmax.f32 %v1358, 0.0
    %v1428 = vmax.f32 %v1182, 0.0
    %v1429 = vmax.f32 %v1360, 0.0
    %v1430 = vmax.f32 %v1185, 0.0
    %v1431 = vmax.f32 %v1363, 0.0
    %v1432 = vmax.f32 %v1187, 0.0
    %v1433 = vmax.f32 %v1365, 0.0
    %v1434 = vmax.f32 %v1190, 0.0
    %v1435 = vmax.f32 %v1368, 0.0
    %v1436 = vmax.f32 %v1192, 0.0
    %v1437 = vmax.f32 %v1370, 0.0
    %v1438 = vmax.f32 %v1195, 0.0
    %v1439 = vmax.f32 %v1373, 0.0
    %v1440 = vmax.f32 %v1197, 0.0
    %v1441 = vmax.f32 %v1375, 0.0
    %v1442 = vmax.f32 %v1200, 0.0
    %v1443 = vmax.f32 %v1378, 0.0
    %v1444 = vmax.f32 %v1202, 0.0
    %v1445 = vmax.f32 %v1380, 0.0
    %v1446 = vld [vmem:[%s5] sm:$0xff]
    %v1447 = vld [vmem:[%s5 + $0x8] sm:$0xff]
    %v1448 = vld [vmem:[%s5 + $0x10] sm:$0xff]
    %v1449 = vld [vmem:[%s5 + $0x18] sm:$0xff]
    %v1450 = vld [vmem:[%s5 + $0x20] sm:$0xff]
    %v1451 = vld [vmem:[%s5 + $0x28] sm:$0xff]
    %v1452 = vld [vmem:[%s5 + $0x30] sm:$0xff]
    %v1453 = vld [vmem:[%s5 + $0x38] sm:$0xff]
    %v1454 = vld [vmem:[%s5 + $0x40] sm:$0xff]
    %v1455 = vld [vmem:[%s5 + $0x48] sm:$0xff]
    %v1456 = vld [vmem:[%s5 + $0x50] sm:$0xff]
    %v1457 = vld [vmem:[%s5 + $0x58] sm:$0xff]
    %v1458 = vld [vmem:[%s5 + $0x60] sm:$0xff]
    %v1459 = vld [vmem:[%s5 + $0x68] sm:$0xff]
    %v1460 = vld [vmem:[%s5 + $0x70] sm:$0xff]
    %v1461 = vld [vmem:[%s5 + $0x78] sm:$0xff]
    %v1462 = vld [vmem:[%s5 + $0x80] sm:$0xff]
    %v1463 = vld [vmem:[%s5 + $0x88] sm:$0xff]
    %v1464 = vld [vmem:[%s5 + $0x90] sm:$0xff]
    %v1465 = vld [vmem:[%s5 + $0x98] sm:$0xff]
    %v1466 = vld [vmem:[%s5 + $0xa0] sm:$0xff]
    %v1467 = vld [vmem:[%s5 + $0xa8] sm:$0xff]
    %v1468 = vld [vmem:[%s5 + $0xb0] sm:$0xff]
    %v1469 = vld [vmem:[%s5 + $0xb8] sm:$0xff]
    %v1470 = vld [vmem:[%s5 + $0xc0] sm:$0xff]
    %v1471 = vld [vmem:[%s5 + $0xc8] sm:$0xff]
    %v1472 = vld [vmem:[%s5 + $0xd0] sm:$0xff]
    %v1473 = vld [vmem:[%s5 + $0xd8] sm:$0xff]
    %v1474 = vld [vmem:[%s5 + $0xe0] sm:$0xff]
    %v1475 = vld [vmem:[%s5 + $0xe8] sm:$0xff]
    %v1476 = vld [vmem:[%s5 + $0xf0] sm:$0xff]
    %v1477 = vld [vmem:[%s5 + $0xf8] sm:$0xff]
    %1479 = vset.pattern.permute.xlu0 0
    %1480 = vperm.xlu0 %1479, %v1446
    %v1481 = vpop.permute.xlu0 %1480
    %1484 = vset.pattern.permute.xlu0 0
    %1485 = vperm.xlu0 %1484, %v1447
    %v1486 = vpop.permute.xlu0 %1485
    %1489 = vset.pattern.permute.xlu0 0
    %1490 = vperm.xlu0 %1489, %v1448
    %v1491 = vpop.permute.xlu0 %1490
    %1494 = vset.pattern.permute.xlu0 0
    %1495 = vperm.xlu0 %1494, %v1449
    %v1496 = vpop.permute.xlu0 %1495
    %1499 = vset.pattern.permute.xlu0 0
    %1500 = vperm.xlu0 %1499, %v1450
    %v1501 = vpop.permute.xlu0 %1500
    %1504 = vset.pattern.permute.xlu0 0
    %1505 = vperm.xlu0 %1504, %v1451
    %v1506 = vpop.permute.xlu0 %1505
    %1509 = vset.pattern.permute.xlu0 0
    %1510 = vperm.xlu0 %1509, %v1452
    %v1511 = vpop.permute.xlu0 %1510
    %1514 = vset.pattern.permute.xlu0 0
    %1515 = vperm.xlu0 %1514, %v1453
    %v1516 = vpop.permute.xlu0 %1515
    %1519 = vset.pattern.permute.xlu0 0
    %1520 = vperm.xlu0 %1519, %v1454
    %v1521 = vpop.permute.xlu0 %1520
    %1524 = vset.pattern.permute.xlu0 0
    %1525 = vperm.xlu0 %1524, %v1455
    %v1526 = vpop.permute.xlu0 %1525
    %1529 = vset.pattern.permute.xlu0 0
    %1530 = vperm.xlu0 %1529, %v1456
    %v1531 = vpop.permute.xlu0 %1530
    %1534 = vset.pattern.permute.xlu0 0
    %1535 = vperm.xlu0 %1534, %v1457
    %v1536 = vpop.permute.xlu0 %1535
    %1539 = vset.pattern.permute.xlu0 0
    %1540 = vperm.xlu0 %1539, %v1458
    %v1541 = vpop.permute.xlu0 %1540
    %1544 = vset.pattern.permute.xlu0 0
    %1545 = vperm.xlu0 %1544, %v1459
    %v1546 = vpop.permute.xlu0 %1545
    %1549 = vset.pattern.permute.xlu0 0
    %1550 = vperm.xlu0 %1549, %v1460
    %v1551 = vpop.permute.xlu0 %1550
    %1554 = vset.pattern.permute.xlu0 0
    %1555 = vperm.xlu0 %1554, %v1461
    %v1556 = vpop.permute.xlu0 %1555
    %1559 = vset.pattern.permute.xlu0 0
    %1560 = vperm.xlu0 %1559, %v1462
    %v1561 = vpop.permute.xlu0 %1560
    %1564 = vset.pattern.permute.xlu0 0
    %1565 = vperm.xlu0 %1564, %v1463
    %v1566 = vpop.permute.xlu0 %1565
    %1569 = vset.pattern.permute.xlu0 0
    %1570 = vperm.xlu0 %1569, %v1464
    %v1571 = vpop.permute.xlu0 %1570
    %1574 = vset.pattern.permute.xlu0 0
    %1575 = vperm.xlu0 %1574, %v1465
    %v1576 = vpop.permute.xlu0 %1575
    %1579 = vset.pattern.permute.xlu0 0
    %1580 = vperm.xlu0 %1579, %v1466
    %v1581 = vpop.permute.xlu0 %1580
    %1584 = vset.pattern.permute.xlu0 0
    %1585 = vperm.xlu0 %1584, %v1467
    %v1586 = vpop.permute.xlu0 %1585
    %1589 = vset.pattern.permute.xlu0 0
    %1590 = vperm.xlu0 %1589, %v1468
    %v1591 = vpop.permute.xlu0 %1590
    %1594 = vset.pattern.permute.xlu0 0
    %1595 = vperm.xlu0 %1594, %v1469
    %v1596 = vpop.permute.xlu0 %1595
    %1599 = vset.pattern.permute.xlu0 0
    %1600 = vperm.xlu0 %1599, %v1470
    %v1601 = vpop.permute.xlu0 %1600
    %1604 = vset.pattern.permute.xlu0 0
    %1605 = vperm.xlu0 %1604, %v1471
    %v1606 = vpop.permute.xlu0 %1605
    %1609 = vset.pattern.permute.xlu0 0
    %1610 = vperm.xlu0 %1609, %v1472
    %v1611 = vpop.permute.xlu0 %1610
    %1614 = vset.pattern.permute.xlu0 0
    %1615 = vperm.xlu0 %1614, %v1473
    %v1616 = vpop.permute.xlu0 %1615
    %1619 = vset.pattern.permute.xlu0 0
    %1620 = vperm.xlu0 %1619, %v1474
    %v1621 = vpop.permute.xlu0 %1620
    %1624 = vset.pattern.permute.xlu0 0
    %1625 = vperm.xlu0 %1624, %v1475
    %v1626 = vpop.permute.xlu0 %1625
    %1629 = vset.pattern.permute.xlu0 0
    %1630 = vperm.xlu0 %1629, %v1476
    %v1631 = vpop.permute.xlu0 %1630
    %1634 = vset.pattern.permute.xlu0 0
    %1635 = vperm.xlu0 %1634, %v1477
    %v1636 = vpop.permute.xlu0 %1635
    %v1638 = vmul.f32 %v1481, %v1382
    %v1639 = vmul.f32 %v1481, %v1383
    %v1640 = vmul.f32 %v1486, %v1384
    %v1641 = vmul.f32 %v1486, %v1385
    %v1642 = vmul.f32 %v1491, %v1386
    %v1643 = vmul.f32 %v1491, %v1387
    %v1644 = vmul.f32 %v1496, %v1388
    %v1645 = vmul.f32 %v1496, %v1389
    %v1646 = vmul.f32 %v1501, %v1390
    %v1647 = vmul.f32 %v1501, %v1391
    %v1648 = vmul.f32 %v1506, %v1392
    %v1649 = vmul.f32 %v1506, %v1393
    %v1650 = vmul.f32 %v1511, %v1394
    %v1651 = vmul.f32 %v1511, %v1395
    %v1652 = vmul.f32 %v1516, %v1396
    %v1653 = vmul.f32 %v1516, %v1397
    %v1654 = vmul.f32 %v1521, %v1398
    %v1655 = vmul.f32 %v1521, %v1399
    %v1656 = vmul.f32 %v1526, %v1400
    %v1657 = vmul.f32 %v1526, %v1401
    %v1658 = vmul.f32 %v1531, %v1402
    %v1659 = vmul.f32 %v1531, %v1403
    %v1660 = vmul.f32 %v1536, %v1404
    %v1661 = vmul.f32 %v1536, %v1405
    %v1662 = vmul.f32 %v1541, %v1406
    %v1663 = vmul.f32 %v1541, %v1407
    %v1664 = vmul.f32 %v1546, %v1408
    %v1665 = vmul.f32 %v1546, %v1409
    %v1666 = vmul.f32 %v1551, %v1410
    %v1667 = vmul.f32 %v1551, %v1411
    %v1668 = vmul.f32 %v1556, %v1412
    %v1669 = vmul.f32 %v1556, %v1413
    %v1670 = vmul.f32 %v1561, %v1414
    %v1671 = vmul.f32 %v1561, %v1415
    %v1672 = vmul.f32 %v1566, %v1416
    %v1673 = vmul.f32 %v1566, %v1417
    %v1674 = vmul.f32 %v1571, %v1418
    %v1675 = vmul.f32 %v1571, %v1419
    %v1676 = vmul.f32 %v1576, %v1420
    %v1677 = vmul.f32 %v1576, %v1421
    %v1678 = vmul.f32 %v1581, %v1422
    %v1679 = vmul.f32 %v1581, %v1423
    %v1680 = vmul.f32 %v1586, %v1424
    %v1681 = vmul.f32 %v1586, %v1425
    %v1682 = vmul.f32 %v1591, %v1426
    %v1683 = vmul.f32 %v1591, %v1427
    %v1684 = vmul.f32 %v1596, %v1428
    %v1685 = vmul.f32 %v1596, %v1429
    %v1686 = vmul.f32 %v1601, %v1430
    %v1687 = vmul.f32 %v1601, %v1431
    %v1688 = vmul.f32 %v1606, %v1432
    %v1689 = vmul.f32 %v1606, %v1433
    %v1690 = vmul.f32 %v1611, %v1434
    %v1691 = vmul.f32 %v1611, %v1435
    %v1692 = vmul.f32 %v1616, %v1436
    %v1693 = vmul.f32 %v1616, %v1437
    %v1694 = vmul.f32 %v1621, %v1438
    %v1695 = vmul.f32 %v1621, %v1439
    %v1696 = vmul.f32 %v1626, %v1440
    %v1697 = vmul.f32 %v1626, %v1441
    %v1698 = vmul.f32 %v1631, %v1442
    %v1699 = vmul.f32 %v1631, %v1443
    %v1700 = vmul.f32 %v1636, %v1444
    %v1701 = vmul.f32 %v1636, %v1445
    %v1702 = vadd.f32 %v1638, %v1640
    %v1703 = vadd.f32 %v1702, %v1642
    %v1704 = vadd.f32 %v1703, %v1644
    %v1705 = vadd.f32 %v1704, %v1646
    %v1706 = vadd.f32 %v1705, %v1648
    %v1707 = vadd.f32 %v1706, %v1650
    %v1708 = vadd.f32 %v1707, %v1652
    %v1709 = vadd.f32 %v1708, %v1654
    %v1710 = vadd.f32 %v1709, %v1656
    %v1711 = vadd.f32 %v1710, %v1658
    %v1712 = vadd.f32 %v1711, %v1660
    %v1713 = vadd.f32 %v1712, %v1662
    %v1714 = vadd.f32 %v1713, %v1664
    %v1715 = vadd.f32 %v1714, %v1666
    %v1716 = vadd.f32 %v1715, %v1668
    %v1717 = vadd.f32 %v1716, %v1670
    %v1718 = vadd.f32 %v1717, %v1672
    %v1719 = vadd.f32 %v1718, %v1674
    %v1720 = vadd.f32 %v1719, %v1676
    %v1721 = vadd.f32 %v1720, %v1678
    %v1722 = vadd.f32 %v1721, %v1680
    %v1723 = vadd.f32 %v1722, %v1682
    %v1724 = vadd.f32 %v1723, %v1684
    %v1725 = vadd.f32 %v1724, %v1686
    %v1726 = vadd.f32 %v1725, %v1688
    %v1727 = vadd.f32 %v1726, %v1690
    %v1728 = vadd.f32 %v1727, %v1692
    %v1729 = vadd.f32 %v1728, %v1694
    %v1730 = vadd.f32 %v1729, %v1696
    %v1731 = vadd.f32 %v1730, %v1698
    %v1732 = vadd.f32 %v1731, %v1700
    %v1733 = vrot.slane %v1732, 4
    %v1734 = vadd.f32 %v1732, %v1733
    %v1735 = vrot.slane %v1734, 2
    %v1736 = vadd.f32 %v1734, %v1735
    %v1737 = vrot.slane %v1736, 1
    %v1738 = vadd.f32 %v1736, %v1737
    %v1739 = vadd.f32 %v1639, %v1641
    %v1740 = vadd.f32 %v1739, %v1643
    %v1741 = vadd.f32 %v1740, %v1645
    %v1742 = vadd.f32 %v1741, %v1647
    %v1743 = vadd.f32 %v1742, %v1649
    %v1744 = vadd.f32 %v1743, %v1651
    %v1745 = vadd.f32 %v1744, %v1653
    %v1746 = vadd.f32 %v1745, %v1655
    %v1747 = vadd.f32 %v1746, %v1657
    %v1748 = vadd.f32 %v1747, %v1659
    %v1749 = vadd.f32 %v1748, %v1661
    %v1750 = vadd.f32 %v1749, %v1663
    %v1751 = vadd.f32 %v1750, %v1665
    %v1752 = vadd.f32 %v1751, %v1667
    %v1753 = vadd.f32 %v1752, %v1669
    %v1754 = vadd.f32 %v1753, %v1671
    %v1755 = vadd.f32 %v1754, %v1673
    %v1756 = vadd.f32 %v1755, %v1675
    %v1757 = vadd.f32 %v1756, %v1677
    %v1758 = vadd.f32 %v1757, %v1679
    %v1759 = vadd.f32 %v1758, %v1681
    %v1760 = vadd.f32 %v1759, %v1683
    %v1761 = vadd.f32 %v1760, %v1685
    %v1762 = vadd.f32 %v1761, %v1687
    %v1763 = vadd.f32 %v1762, %v1689
    %v1764 = vadd.f32 %v1763, %v1691
    %v1765 = vadd.f32 %v1764, %v1693
    %v1766 = vadd.f32 %v1765, %v1695
    %v1767 = vadd.f32 %v1766, %v1697
    %v1768 = vadd.f32 %v1767, %v1699
    %v1769 = vadd.f32 %v1768, %v1701
    %v1770 = vrot.slane %v1769, 4
    %v1771 = vadd.f32 %v1769, %v1770
    %v1772 = vrot.slane %v1771, 2
    %v1773 = vadd.f32 %v1771, %v1772
    %v1774 = vrot.slane %v1773, 1
    %v1775 = vadd.f32 %v1773, %v1774
    %s1776 = sld [smem:[#allocation2]]
    %v1777 = vstv %s1776
    %v1778 = vadd.f32 %v1738, %v1777
    %v1779 = vadd.f32 %v1775, %v1777
    %v1782 = vrot.slane %v1779, 7
    %vm1783 = vcmask 1040384
    %v1784 = vsel %vm1783, %v1778, %v1782
    %v1786 = vlaneseq
    %vm1787 = vcmp.ge.s32.totalorder %v1786, 0
    %vm1788 = vcmp.lt.s32.totalorder %v1786, 256
    %vm1789 = vmand %vm1787, %vm1788
    %1790 = vst.msk [vmem:[#allocation3] sm:$0x3] %vm1789, %v1784
    // Predicated region
    $region30: #{tpu_custom_call.1} parent=1 // pred_check
      _
    $region31: #{tpu_custom_call.1} parent=1 // pred_check_branch
      %1792 = sbr.rel (0) target = $region33
    $region32: #{tpu_custom_call.1} parent=1 // pred_region
      %1794 = vsyncadd [#allocation4], 0
      %s1796 = sshll.u32 [#allocation3], 4
      %s1797 = int_to_ptr.vmem [resolvable:$true] %s1796
      %s1798 = sshll.u32 %s7, 4
      %s1799 = int_to_ptr.hbm [resolvable:$true] %s1798
      %1801 = dma.vmem_to_hbm [thread:$0]  %s1797, 32, %s1799, [#allocation4]
    $region33: #{tpu_custom_call.1} parent=1 // pred_fallthru
      _
    // Predicated region
    $region34: #{tpu_custom_call.1} parent=1 // pred_check
      _
    $region35: #{tpu_custom_call.1} parent=1 // pred_check_branch
      %1803 = sbr.rel (0) target = $region37
    $region36: #{tpu_custom_call.1} parent=1 // pred_region
      %1805 = dma.done [#allocation4], 32
    $region37: #{tpu_custom_call.1} parent=1 // pred_fallthru
      _
    %1806 = vsyncpa [#allocation4], 1

// kernel: tpu_custom_call.1
$region0: #{tpu_custom_call.1}
  #allocation0 [shape = 'u32[]', space=smem, size = 0x4, offset = 0x4, fixed_abs, tag = 'smem constant byte address 0x4 - core index']
  #allocation1 [shape = 'u32[72,128]{1,0:T(1,128)}', space=vmem, size = 0x9000, scoped, tag = 'internal scratch']
  #allocation2 [shape = 'f32[1]{0:T(128)S(6)}', space=smem, size = 0x200, scoped, tag = 'scoped memory for tpu_custom_call.1']
  %s0 = inlined_call_operand.vmem [shape: f32[1,256], index: 0, kind: input, shape index: {}]
  %s1 = inlined_call_operand.vmem [shape: f32[256,1], index: 1, kind: input, shape index: {}]
  %s2 = inlined_call_operand.vmem [shape: f32[256,1], index: 2, kind: input, shape index: {}]
  %s3 = inlined_call_operand.vmem [shape: bf16[256,256], index: 3, kind: input, shape index: {}]
  %s4 = inlined_call_operand.vmem [shape: f32[256,1], index: 4, kind: input, shape index: {}]
  %s5 = inlined_call_operand.vmem [shape: f32[256,1], index: 5, kind: input, shape index: {}]
  %s6 = inlined_call_operand.<no memory space> [shape: f32[1], index: 6, kind: input, shape index: {}]
  %s7 = inlined_call_operand.hbm [shape: f32[1,256], index: 7, kind: output, shape index: {}]
  %s8 = sld [smem:[#allocation0]]
  $region38: #{tpu_custom_call.1} parent=0
    _
  %s10 = ssub.s32 1, %s8
  %s11 = scalar_select 0, %s10, %s8
  %12 = sst [smem:[#allocation2]] %s6
  $region1: #{tpu_custom_call.1} parent=0
    #allocation3 [shape = 'u8[1024]{0}', space=vmem, size = 0x400, scoped, tag = 'output window, operand 0, single buffered']
    #allocation4 [shape = 's32[1]{0}', space=sflag, size = 0x4, scoped, tag = 'scoped memory for tpu_custom_call.1']
    %13 = vsyncpa [#allocation4], 0
    // Predicated region
    $region2: #{tpu_custom_call.1} parent=1 // pred_check
      _
    $region3: #{tpu_custom_call.1} parent=1 // pred_check_branch
      %15 = sbr.rel (0) target = $region5
    $region4: #{tpu_custom_call.1} parent=1 // pred_region
      _
    $region5: #{tpu_custom_call.1} parent=1 // pred_fallthru
      _
    // Predicated region
    $region6: #{tpu_custom_call.1} parent=1 // pred_check
      _
    $region7: #{tpu_custom_call.1} parent=1 // pred_check_branch
      %17 = sbr.rel (0) target = $region9
    $region8: #{tpu_custom_call.1} parent=1 // pred_region
      _
    $region9: #{tpu_custom_call.1} parent=1 // pred_fallthru
      _
    // Predicated region
    $region10: #{tpu_custom_call.1} parent=1 // pred_check
      _
    $region11: #{tpu_custom_call.1} parent=1 // pred_check_branch
      %19 = sbr.rel (0) target = $region13
    $region12: #{tpu_custom_call.1} parent=1 // pred_region
      _
    $region13: #{tpu_custom_call.1} parent=1 // pred_fallthru
      _
    // Predicated region
    $region14: #{tpu_custom_call.1} parent=1 // pred_check
      _
    $region15: #{tpu_custom_call.1} parent=1 // pred_check_branch
      %21 = sbr.rel (0) target = $region17
    $region16: #{tpu_custom_call.1} parent=1 // pred_region
      _
    $region17: #{tpu_custom_call.1} parent=1 // pred_fallthru
      _
    // Predicated region
    $region18: #{tpu_custom_call.1} parent=1 // pred_check
      _
    $region19: #{tpu_custom_call.1} parent=1 // pred_check_branch
      %23 = sbr.rel (0) target = $region21
    $region20: #{tpu_custom_call.1} parent=1 // pred_region
      _
    $region21: #{tpu_custom_call.1} parent=1 // pred_fallthru
      _
    // Predicated region
    $region22: #{tpu_custom_call.1} parent=1 // pred_check
      _
    $region23: #{tpu_custom_call.1} parent=1 // pred_check_branch
      %25 = sbr.rel (0) target = $region25
    $region24: #{tpu_custom_call.1} parent=1 // pred_region
      _
    $region25: #{tpu_custom_call.1} parent=1 // pred_fallthru
      _
    // Predicated region
    $region26: #{tpu_custom_call.1} parent=1 // pred_check
      _
    $region27: #{tpu_custom_call.1} parent=1 // pred_check_branch
      %27 = sbr.rel (0) target = $region29
    $region28: #{tpu_custom_call.1} parent=1 // pred_region
      _
    $region29: #{tpu_custom_call.1} parent=1 // pred_fallthru
      _
    %v28 = vld [vmem:[%s0] sm:$0x3]
    %v29 = vld [vmem:[%s1] sm:$0xff]
    %v30 = vld [vmem:[%s1 + $0x8] sm:$0xff]
    %v31 = vld [vmem:[%s1 + $0x10] sm:$0xff]
    %v32 = vld [vmem:[%s1 + $0x18] sm:$0xff]
    %v33 = vld [vmem:[%s1 + $0x20] sm:$0xff]
    %v34 = vld [vmem:[%s1 + $0x28] sm:$0xff]
    %v35 = vld [vmem:[%s1 + $0x30] sm:$0xff]
    %v36 = vld [vmem:[%s1 + $0x38] sm:$0xff]
    %v37 = vld [vmem:[%s1 + $0x40] sm:$0xff]
    %v38 = vld [vmem:[%s1 + $0x48] sm:$0xff]
    %v39 = vld [vmem:[%s1 + $0x50] sm:$0xff]
    %v40 = vld [vmem:[%s1 + $0x58] sm:$0xff]
    %v41 = vld [vmem:[%s1 + $0x60] sm:$0xff]
    %v42 = vld [vmem:[%s1 + $0x68] sm:$0xff]
    %v43 = vld [vmem:[%s1 + $0x70] sm:$0xff]
    %v44 = vld [vmem:[%s1 + $0x78] sm:$0xff]
    %v45 = vld [vmem:[%s1 + $0x80] sm:$0xff]
    %v46 = vld [vmem:[%s1 + $0x88] sm:$0xff]
    %v47 = vld [vmem:[%s1 + $0x90] sm:$0xff]
    %v48 = vld [vmem:[%s1 + $0x98] sm:$0xff]
    %v49 = vld [vmem:[%s1 + $0xa0] sm:$0xff]
    %v50 = vld [vmem:[%s1 + $0xa8] sm:$0xff]
    %v51 = vld [vmem:[%s1 + $0xb0] sm:$0xff]
    %v52 = vld [vmem:[%s1 + $0xb8] sm:$0xff]
    %v53 = vld [vmem:[%s1 + $0xc0] sm:$0xff]
    %v54 = vld [vmem:[%s1 + $0xc8] sm:$0xff]
    %v55 = vld [vmem:[%s1 + $0xd0] sm:$0xff]
    %v56 = vld [vmem:[%s1 + $0xd8] sm:$0xff]
    %v57 = vld [vmem:[%s1 + $0xe0] sm:$0xff]
    %v58 = vld [vmem:[%s1 + $0xe8] sm:$0xff]
    %v59 = vld [vmem:[%s1 + $0xf0] sm:$0xff]
    %v60 = vld [vmem:[%s1 + $0xf8] sm:$0xff]
    %62 = vset.pattern.permute.xlu0 0
    %63 = vperm.xlu0 %62, %v29
    %v64 = vpop.permute.xlu0 %63
    %67 = vset.pattern.permute.xlu0 0
    %68 = vperm.xlu0 %67, %v30
    %v69 = vpop.permute.xlu0 %68
    %72 = vset.pattern.permute.xlu0 0
    %73 = vperm.xlu0 %72, %v31
    %v74 = vpop.permute.xlu0 %73
    %77 = vset.pattern.permute.xlu0 0
    %78 = vperm.xlu0 %77, %v32
    %v79 = vpop.permute.xlu0 %78
    %82 = vset.pattern.permute.xlu0 0
    %83 = vperm.xlu0 %82, %v33
    %v84 = vpop.permute.xlu0 %83
    %87 = vset.pattern.permute.xlu0 0
    %88 = vperm.xlu0 %87, %v34
    %v89 = vpop.permute.xlu0 %88
    %92 = vset.pattern.permute.xlu0 0
    %93 = vperm.xlu0 %92, %v35
    %v94 = vpop.permute.xlu0 %93
    %97 = vset.pattern.permute.xlu0 0
    %98 = vperm.xlu0 %97, %v36
    %v99 = vpop.permute.xlu0 %98
    %102 = vset.pattern.permute.xlu0 0
    %103 = vperm.xlu0 %102, %v37
    %v104 = vpop.permute.xlu0 %103
    %107 = vset.pattern.permute.xlu0 0
    %108 = vperm.xlu0 %107, %v38
    %v109 = vpop.permute.xlu0 %108
    %112 = vset.pattern.permute.xlu0 0
    %113 = vperm.xlu0 %112, %v39
    %v114 = vpop.permute.xlu0 %113
    %117 = vset.pattern.permute.xlu0 0
    %118 = vperm.xlu0 %117, %v40
    %v119 = vpop.permute.xlu0 %118
    %122 = vset.pattern.permute.xlu0 0
    %123 = vperm.xlu0 %122, %v41
    %v124 = vpop.permute.xlu0 %123
    %127 = vset.pattern.permute.xlu0 0
    %128 = vperm.xlu0 %127, %v42
    %v129 = vpop.permute.xlu0 %128
    %132 = vset.pattern.permute.xlu0 0
    %133 = vperm.xlu0 %132, %v43
    %v134 = vpop.permute.xlu0 %133
    %137 = vset.pattern.permute.xlu0 0
    %138 = vperm.xlu0 %137, %v44
    %v139 = vpop.permute.xlu0 %138
    %142 = vset.pattern.permute.xlu0 0
    %143 = vperm.xlu0 %142, %v45
    %v144 = vpop.permute.xlu0 %143
    %147 = vset.pattern.permute.xlu0 0
    %148 = vperm.xlu0 %147, %v46
    %v149 = vpop.permute.xlu0 %148
    %152 = vset.pattern.permute.xlu0 0
    %153 = vperm.xlu0 %152, %v47
    %v154 = vpop.permute.xlu0 %153
    %157 = vset.pattern.permute.xlu0 0
    %158 = vperm.xlu0 %157, %v48
    %v159 = vpop.permute.xlu0 %158
    %162 = vset.pattern.permute.xlu0 0
    %163 = vperm.xlu0 %162, %v49
    %v164 = vpop.permute.xlu0 %163
    %167 = vset.pattern.permute.xlu0 0
    %168 = vperm.xlu0 %167, %v50
    %v169 = vpop.permute.xlu0 %168
    %172 = vset.pattern.permute.xlu0 0
    %173 = vperm.xlu0 %172, %v51
    %v174 = vpop.permute.xlu0 %173
    %177 = vset.pattern.permute.xlu0 0
    %178 = vperm.xlu0 %177, %v52
    %v179 = vpop.permute.xlu0 %178
    %182 = vset.pattern.permute.xlu0 0
    %183 = vperm.xlu0 %182, %v53
    %v184 = vpop.permute.xlu0 %183
    %187 = vset.pattern.permute.xlu0 0
    %188 = vperm.xlu0 %187, %v54
    %v189 = vpop.permute.xlu0 %188
    %192 = vset.pattern.permute.xlu0 0
    %193 = vperm.xlu0 %192, %v55
    %v194 = vpop.permute.xlu0 %193
    %197 = vset.pattern.permute.xlu0 0
    %198 = vperm.xlu0 %197, %v56
    %v199 = vpop.permute.xlu0 %198
    %202 = vset.pattern.permute.xlu0 0
    %203 = vperm.xlu0 %202, %v57
    %v204 = vpop.permute.xlu0 %203
    %207 = vset.pattern.permute.xlu0 0
    %208 = vperm.xlu0 %207, %v58
    %v209 = vpop.permute.xlu0 %208
    %212 = vset.pattern.permute.xlu0 0
    %213 = vperm.xlu0 %212, %v59
    %v214 = vpop.permute.xlu0 %213
    %217 = vset.pattern.permute.xlu0 0
    %218 = vperm.xlu0 %217, %v60
    %v219 = vpop.permute.xlu0 %218
    %v222 = vperm.slane %v28, 0
    %v223 = vperm.slane %v28, 1
    %v226 = vmul.f32 %v64, %v222
    %v227 = vmul.f32 %v64, %v223
    %v228 = vmul.f32 %v69, %v222
    %v229 = vmul.f32 %v69, %v223
    %v230 = vmul.f32 %v74, %v222
    %v231 = vmul.f32 %v74, %v223
    %v232 = vmul.f32 %v79, %v222
    %v233 = vmul.f32 %v79, %v223
    %v234 = vmul.f32 %v84, %v222
    %v235 = vmul.f32 %v84, %v223
    %v236 = vmul.f32 %v89, %v222
    %v237 = vmul.f32 %v89, %v223
    %v238 = vmul.f32 %v94, %v222
    %v239 = vmul.f32 %v94, %v223
    %v240 = vmul.f32 %v99, %v222
    %v241 = vmul.f32 %v99, %v223
    %v242 = vmul.f32 %v104, %v222
    %v243 = vmul.f32 %v104, %v223
    %v244 = vmul.f32 %v109, %v222
    %v245 = vmul.f32 %v109, %v223
    %v246 = vmul.f32 %v114, %v222
    %v247 = vmul.f32 %v114, %v223
    %v248 = vmul.f32 %v119, %v222
    %v249 = vmul.f32 %v119, %v223
    %v250 = vmul.f32 %v124, %v222
    %v251 = vmul.f32 %v124, %v223
    %v252 = vmul.f32 %v129, %v222
    %v253 = vmul.f32 %v129, %v223
    %v254 = vmul.f32 %v134, %v222
    %v255 = vmul.f32 %v134, %v223
    %v256 = vmul.f32 %v139, %v222
    %v257 = vmul.f32 %v139, %v223
    %v258 = vmul.f32 %v144, %v222
    %v259 = vmul.f32 %v144, %v223
    %v260 = vmul.f32 %v149, %v222
    %v261 = vmul.f32 %v149, %v223
    %v262 = vmul.f32 %v154, %v222
    %v263 = vmul.f32 %v154, %v223
    %v264 = vmul.f32 %v159, %v222
    %v265 = vmul.f32 %v159, %v223
    %v266 = vmul.f32 %v164, %v222
    %v267 = vmul.f32 %v164, %v223
    %v268 = vmul.f32 %v169, %v222
    %v269 = vmul.f32 %v169, %v223
    %v270 = vmul.f32 %v174, %v222
    %v271 = vmul.f32 %v174, %v223
    %v272 = vmul.f32 %v179, %v222
    %v273 = vmul.f32 %v179, %v223
    %v274 = vmul.f32 %v184, %v222
    %v275 = vmul.f32 %v184, %v223
    %v276 = vmul.f32 %v189, %v222
    %v277 = vmul.f32 %v189, %v223
    %v278 = vmul.f32 %v194, %v222
    %v279 = vmul.f32 %v194, %v223
    %v280 = vmul.f32 %v199, %v222
    %v281 = vmul.f32 %v199, %v223
    %v282 = vmul.f32 %v204, %v222
    %v283 = vmul.f32 %v204, %v223
    %v284 = vmul.f32 %v209, %v222
    %v285 = vmul.f32 %v209, %v223
    %v286 = vmul.f32 %v214, %v222
    %v287 = vmul.f32 %v214, %v223
    %v288 = vmul.f32 %v219, %v222
    %v289 = vmul.f32 %v219, %v223
    %v290 = vld [vmem:[%s2] sm:$0xff]
    %v291 = vld [vmem:[%s2 + $0x8] sm:$0xff]
    %v292 = vld [vmem:[%s2 + $0x10] sm:$0xff]
    %v293 = vld [vmem:[%s2 + $0x18] sm:$0xff]
    %v294 = vld [vmem:[%s2 + $0x20] sm:$0xff]
    %v295 = vld [vmem:[%s2 + $0x28] sm:$0xff]
    %v296 = vld [vmem:[%s2 + $0x30] sm:$0xff]
    %v297 = vld [vmem:[%s2 + $0x38] sm:$0xff]
    %v298 = vld [vmem:[%s2 + $0x40] sm:$0xff]
    %v299 = vld [vmem:[%s2 + $0x48] sm:$0xff]
    %v300 = vld [vmem:[%s2 + $0x50] sm:$0xff]
    %v301 = vld [vmem:[%s2 + $0x58] sm:$0xff]
    %v302 = vld [vmem:[%s2 + $0x60] sm:$0xff]
    %v303 = vld [vmem:[%s2 + $0x68] sm:$0xff]
    %v304 = vld [vmem:[%s2 + $0x70] sm:$0xff]
    %v305 = vld [vmem:[%s2 + $0x78] sm:$0xff]
    %v306 = vld [vmem:[%s2 + $0x80] sm:$0xff]
    %v307 = vld [vmem:[%s2 + $0x88] sm:$0xff]
    %v308 = vld [vmem:[%s2 + $0x90] sm:$0xff]
    %v309 = vld [vmem:[%s2 + $0x98] sm:$0xff]
    %v310 = vld [vmem:[%s2 + $0xa0] sm:$0xff]
    %v311 = vld [vmem:[%s2 + $0xa8] sm:$0xff]
    %v312 = vld [vmem:[%s2 + $0xb0] sm:$0xff]
    %v313 = vld [vmem:[%s2 + $0xb8] sm:$0xff]
    %v314 = vld [vmem:[%s2 + $0xc0] sm:$0xff]
    %v315 = vld [vmem:[%s2 + $0xc8] sm:$0xff]
    %v316 = vld [vmem:[%s2 + $0xd0] sm:$0xff]
    %v317 = vld [vmem:[%s2 + $0xd8] sm:$0xff]
    %v318 = vld [vmem:[%s2 + $0xe0] sm:$0xff]
    %v319 = vld [vmem:[%s2 + $0xe8] sm:$0xff]
    %v320 = vld [vmem:[%s2 + $0xf0] sm:$0xff]
    %v321 = vld [vmem:[%s2 + $0xf8] sm:$0xff]
    %323 = vset.pattern.permute.xlu0 0
    %324 = vperm.xlu0 %323, %v290
    %v325 = vpop.permute.xlu0 %324
    %328 = vset.pattern.permute.xlu0 0
    %329 = vperm.xlu0 %328, %v291
    %v330 = vpop.permute.xlu0 %329
    %333 = vset.pattern.permute.xlu0 0
    %334 = vperm.xlu0 %333, %v292
    %v335 = vpop.permute.xlu0 %334
    %338 = vset.pattern.permute.xlu0 0
    %339 = vperm.xlu0 %338, %v293
    %v340 = vpop.permute.xlu0 %339
    %343 = vset.pattern.permute.xlu0 0
    %344 = vperm.xlu0 %343, %v294
    %v345 = vpop.permute.xlu0 %344
    %348 = vset.pattern.permute.xlu0 0
    %349 = vperm.xlu0 %348, %v295
    %v350 = vpop.permute.xlu0 %349
    %353 = vset.pattern.permute.xlu0 0
    %354 = vperm.xlu0 %353, %v296
    %v355 = vpop.permute.xlu0 %354
    %358 = vset.pattern.permute.xlu0 0
    %359 = vperm.xlu0 %358, %v297
    %v360 = vpop.permute.xlu0 %359
    %363 = vset.pattern.permute.xlu0 0
    %364 = vperm.xlu0 %363, %v298
    %v365 = vpop.permute.xlu0 %364
    %368 = vset.pattern.permute.xlu0 0
    %369 = vperm.xlu0 %368, %v299
    %v370 = vpop.permute.xlu0 %369
    %373 = vset.pattern.permute.xlu0 0
    %374 = vperm.xlu0 %373, %v300
    %v375 = vpop.permute.xlu0 %374
    %378 = vset.pattern.permute.xlu0 0
    %379 = vperm.xlu0 %378, %v301
    %v380 = vpop.permute.xlu0 %379
    %383 = vset.pattern.permute.xlu0 0
    %384 = vperm.xlu0 %383, %v302
    %v385 = vpop.permute.xlu0 %384
    %388 = vset.pattern.permute.xlu0 0
    %389 = vperm.xlu0 %388, %v303
    %v390 = vpop.permute.xlu0 %389
    %393 = vset.pattern.permute.xlu0 0
    %394 = vperm.xlu0 %393, %v304
    %v395 = vpop.permute.xlu0 %394
    %398 = vset.pattern.permute.xlu0 0
    %399 = vperm.xlu0 %398, %v305
    %v400 = vpop.permute.xlu0 %399
    %403 = vset.pattern.permute.xlu0 0
    %404 = vperm.xlu0 %403, %v306
    %v405 = vpop.permute.xlu0 %404
    %408 = vset.pattern.permute.xlu0 0
    %409 = vperm.xlu0 %408, %v307
    %v410 = vpop.permute.xlu0 %409
    %413 = vset.pattern.permute.xlu0 0
    %414 = vperm.xlu0 %413, %v308
    %v415 = vpop.permute.xlu0 %414
    %418 = vset.pattern.permute.xlu0 0
    %419 = vperm.xlu0 %418, %v309
    %v420 = vpop.permute.xlu0 %419
    %423 = vset.pattern.permute.xlu0 0
    %424 = vperm.xlu0 %423, %v310
    %v425 = vpop.permute.xlu0 %424
    %428 = vset.pattern.permute.xlu0 0
    %429 = vperm.xlu0 %428, %v311
    %v430 = vpop.permute.xlu0 %429
    %433 = vset.pattern.permute.xlu0 0
    %434 = vperm.xlu0 %433, %v312
    %v435 = vpop.permute.xlu0 %434
    %438 = vset.pattern.permute.xlu0 0
    %439 = vperm.xlu0 %438, %v313
    %v440 = vpop.permute.xlu0 %439
    %443 = vset.pattern.permute.xlu0 0
    %444 = vperm.xlu0 %443, %v314
    %v445 = vpop.permute.xlu0 %444
    %448 = vset.pattern.permute.xlu0 0
    %449 = vperm.xlu0 %448, %v315
    %v450 = vpop.permute.xlu0 %449
    %453 = vset.pattern.permute.xlu0 0
    %454 = vperm.xlu0 %453, %v316
    %v455 = vpop.permute.xlu0 %454
    %458 = vset.pattern.permute.xlu0 0
    %459 = vperm.xlu0 %458, %v317
    %v460 = vpop.permute.xlu0 %459
    %463 = vset.pattern.permute.xlu0 0
    %464 = vperm.xlu0 %463, %v318
    %v465 = vpop.permute.xlu0 %464
    %468 = vset.pattern.permute.xlu0 0
    %469 = vperm.xlu0 %468, %v319
    %v470 = vpop.permute.xlu0 %469
    %473 = vset.pattern.permute.xlu0 0
    %474 = vperm.xlu0 %473, %v320
    %v475 = vpop.permute.xlu0 %474
    %478 = vset.pattern.permute.xlu0 0
    %479 = vperm.xlu0 %478, %v321
    %v480 = vpop.permute.xlu0 %479
    %v482 = vadd.f32 %v226, %v325
    %v483 = vadd.f32 %v227, %v325
    %v484 = vadd.f32 %v228, %v330
    %v485 = vadd.f32 %v229, %v330
    %v486 = vadd.f32 %v230, %v335
    %v487 = vadd.f32 %v231, %v335
    %v488 = vadd.f32 %v232, %v340
    %v489 = vadd.f32 %v233, %v340
    %v490 = vadd.f32 %v234, %v345
    %v491 = vadd.f32 %v235, %v345
    %v492 = vadd.f32 %v236, %v350
    %v493 = vadd.f32 %v237, %v350
    %v494 = vadd.f32 %v238, %v355
    %v495 = vadd.f32 %v239, %v355
    %v496 = vadd.f32 %v240, %v360
    %v497 = vadd.f32 %v241, %v360
    %v498 = vadd.f32 %v242, %v365
    %v499 = vadd.f32 %v243, %v365
    %v500 = vadd.f32 %v244, %v370
    %v501 = vadd.f32 %v245, %v370
    %v502 = vadd.f32 %v246, %v375
    %v503 = vadd.f32 %v247, %v375
    %v504 = vadd.f32 %v248, %v380
    %v505 = vadd.f32 %v249, %v380
    %v506 = vadd.f32 %v250, %v385
    %v507 = vadd.f32 %v251, %v385
    %v508 = vadd.f32 %v252, %v390
    %v509 = vadd.f32 %v253, %v390
    %v510 = vadd.f32 %v254, %v395
    %v511 = vadd.f32 %v255, %v395
    %v512 = vadd.f32 %v256, %v400
    %v513 = vadd.f32 %v257, %v400
    %v514 = vadd.f32 %v258, %v405
    %v515 = vadd.f32 %v259, %v405
    %v516 = vadd.f32 %v260, %v410
    %v517 = vadd.f32 %v261, %v410
    %v518 = vadd.f32 %v262, %v415
    %v519 = vadd.f32 %v263, %v415
    %v520 = vadd.f32 %v264, %v420
    %v521 = vadd.f32 %v265, %v420
    %v522 = vadd.f32 %v266, %v425
    %v523 = vadd.f32 %v267, %v425
    %v524 = vadd.f32 %v268, %v430
    %v525 = vadd.f32 %v269, %v430
    %v526 = vadd.f32 %v270, %v435
    %v527 = vadd.f32 %v271, %v435
    %v528 = vadd.f32 %v272, %v440
    %v529 = vadd.f32 %v273, %v440
    %v530 = vadd.f32 %v274, %v445
    %v531 = vadd.f32 %v275, %v445
    %v532 = vadd.f32 %v276, %v450
    %v533 = vadd.f32 %v277, %v450
    %v534 = vadd.f32 %v278, %v455
    %v535 = vadd.f32 %v279, %v455
    %v536 = vadd.f32 %v280, %v460
    %v537 = vadd.f32 %v281, %v460
    %v538 = vadd.f32 %v282, %v465
    %v539 = vadd.f32 %v283, %v465
    %v540 = vadd.f32 %v284, %v470
    %v541 = vadd.f32 %v285, %v470
    %v542 = vadd.f32 %v286, %v475
    %v543 = vadd.f32 %v287, %v475
    %v544 = vadd.f32 %v288, %v480
    %v545 = vadd.f32 %v289, %v480
    %v546 = vmax.f32 %v482, 0.0
    %v547 = vmax.f32 %v483, 0.0
    %v548 = vmax.f32 %v484, 0.0
    %v549 = vmax.f32 %v485, 0.0
    %v550 = vmax.f32 %v486, 0.0
    %v551 = vmax.f32 %v487, 0.0
    %v552 = vmax.f32 %v488, 0.0
    %v553 = vmax.f32 %v489, 0.0
    %v554 = vmax.f32 %v490, 0.0
    %v555 = vmax.f32 %v491, 0.0
    %v556 = vmax.f32 %v492, 0.0
    %v557 = vmax.f32 %v493, 0.0
    %v558 = vmax.f32 %v494, 0.0
    %v559 = vmax.f32 %v495, 0.0
    %v560 = vmax.f32 %v496, 0.0
    %v561 = vmax.f32 %v497, 0.0
    %v562 = vmax.f32 %v498, 0.0
    %v563 = vmax.f32 %v499, 0.0
    %v564 = vmax.f32 %v500, 0.0
    %v565 = vmax.f32 %v501, 0.0
    %v566 = vmax.f32 %v502, 0.0
    %v567 = vmax.f32 %v503, 0.0
    %v568 = vmax.f32 %v504, 0.0
    %v569 = vmax.f32 %v505, 0.0
    %v570 = vmax.f32 %v506, 0.0
    %v571 = vmax.f32 %v507, 0.0
    %v572 = vmax.f32 %v508, 0.0
    %v573 = vmax.f32 %v509, 0.0
    %v574 = vmax.f32 %v510, 0.0
    %v575 = vmax.f32 %v511, 0.0
    %v576 = vmax.f32 %v512, 0.0
    %v577 = vmax.f32 %v513, 0.0
    %v578 = vmax.f32 %v514, 0.0
    %v579 = vmax.f32 %v515, 0.0
    %v580 = vmax.f32 %v516, 0.0
    %v581 = vmax.f32 %v517, 0.0
    %v582 = vmax.f32 %v518, 0.0
    %v583 = vmax.f32 %v519, 0.0
    %v584 = vmax.f32 %v520, 0.0
    %v585 = vmax.f32 %v521, 0.0
    %v586 = vmax.f32 %v522, 0.0
    %v587 = vmax.f32 %v523, 0.0
    %v588 = vmax.f32 %v524, 0.0
    %v589 = vmax.f32 %v525, 0.0
    %v590 = vmax.f32 %v526, 0.0
    %v591 = vmax.f32 %v527, 0.0
    %v592 = vmax.f32 %v528, 0.0
    %v593 = vmax.f32 %v529, 0.0
    %v594 = vmax.f32 %v530, 0.0
    %v595 = vmax.f32 %v531, 0.0
    %v596 = vmax.f32 %v532, 0.0
    %v597 = vmax.f32 %v533, 0.0
    %v598 = vmax.f32 %v534, 0.0
    %v599 = vmax.f32 %v535, 0.0
    %v600 = vmax.f32 %v536, 0.0
    %v601 = vmax.f32 %v537, 0.0
    %v602 = vmax.f32 %v538, 0.0
    %v603 = vmax.f32 %v539, 0.0
    %v604 = vmax.f32 %v540, 0.0
    %v605 = vmax.f32 %v541, 0.0
    %v606 = vmax.f32 %v542, 0.0
    %v607 = vmax.f32 %v543, 0.0
    %v608 = vmax.f32 %v544, 0.0
    %v609 = vmax.f32 %v545, 0.0
    %v610 = vld [vmem:[%s3] sm:$0xff]
    %v611 = vld [vmem:[%s3 + $0x8] sm:$0xff]
    %v612 = vld [vmem:[%s3 + $0x10] sm:$0xff]
    %v613 = vld [vmem:[%s3 + $0x18] sm:$0xff]
    %v614 = vld [vmem:[%s3 + $0x20] sm:$0xff]
    %v615 = vld [vmem:[%s3 + $0x28] sm:$0xff]
    %v616 = vld [vmem:[%s3 + $0x30] sm:$0xff]
    %v617 = vld [vmem:[%s3 + $0x38] sm:$0xff]
    %v618 = vld [vmem:[%s3 + $0x40] sm:$0xff]
    %v619 = vld [vmem:[%s3 + $0x48] sm:$0xff]
    %v620 = vld [vmem:[%s3 + $0x50] sm:$0xff]
    %v621 = vld [vmem:[%s3 + $0x58] sm:$0xff]
    %v622 = vld [vmem:[%s3 + $0x60] sm:$0xff]
    %v623 = vld [vmem:[%s3 + $0x68] sm:$0xff]
    %v624 = vld [vmem:[%s3 + $0x70] sm:$0xff]
    %v625 = vld [vmem:[%s3 + $0x78] sm:$0xff]
    %v626 = vld [vmem:[%s3 + $0x80] sm:$0xff]
    %v627 = vld [vmem:[%s3 + $0x88] sm:$0xff]
    %v628 = vld [vmem:[%s3 + $0x90] sm:$0xff]
    %v629 = vld [vmem:[%s3 + $0x98] sm:$0xff]
    %v630 = vld [vmem:[%s3 + $0xa0] sm:$0xff]
    %v631 = vld [vmem:[%s3 + $0xa8] sm:$0xff]
    %v632 = vld [vmem:[%s3 + $0xb0] sm:$0xff]
    %v633 = vld [vmem:[%s3 + $0xb8] sm:$0xff]
    %v634 = vld [vmem:[%s3 + $0xc0] sm:$0xff]
    %v635 = vld [vmem:[%s3 + $0xc8] sm:$0xff]
    %v636 = vld [vmem:[%s3 + $0xd0] sm:$0xff]
    %v637 = vld [vmem:[%s3 + $0xd8] sm:$0xff]
    %v638 = vld [vmem:[%s3 + $0xe0] sm:$0xff]
    %v639 = vld [vmem:[%s3 + $0xe8] sm:$0xff]
    %v640 = vld [vmem:[%s3 + $0xf0] sm:$0xff]
    %v641 = vld [vmem:[%s3 + $0xf8] sm:$0xff]
    %v642 = vpack.c.bf16 %v548, %v546
    %v643 = vpack.c.bf16 %v549, %v547
    %v644 = vpack.c.bf16 %v552, %v550
    %v645 = vpack.c.bf16 %v553, %v551
    %v646 = vpack.c.bf16 %v556, %v554
    %v647 = vpack.c.bf16 %v557, %v555
    %v648 = vpack.c.bf16 %v560, %v558
    %v649 = vpack.c.bf16 %v561, %v559
    %v650 = vpack.c.bf16 %v564, %v562
    %v651 = vpack.c.bf16 %v565, %v563
    %v652 = vpack.c.bf16 %v568, %v566
    %v653 = vpack.c.bf16 %v569, %v567
    %v654 = vpack.c.bf16 %v572, %v570
    %v655 = vpack.c.bf16 %v573, %v571
    %v656 = vpack.c.bf16 %v576, %v574
    %v657 = vpack.c.bf16 %v577, %v575
    %v658 = vpack.c.bf16 %v580, %v578
    %v659 = vpack.c.bf16 %v581, %v579
    %v660 = vpack.c.bf16 %v584, %v582
    %v661 = vpack.c.bf16 %v585, %v583
    %v662 = vpack.c.bf16 %v588, %v586
    %v663 = vpack.c.bf16 %v589, %v587
    %v664 = vpack.c.bf16 %v592, %v590
    %v665 = vpack.c.bf16 %v593, %v591
    %v666 = vpack.c.bf16 %v596, %v594
    %v667 = vpack.c.bf16 %v597, %v595
    %v668 = vpack.c.bf16 %v600, %v598
    %v669 = vpack.c.bf16 %v601, %v599
    %v670 = vpack.c.bf16 %v604, %v602
    %v671 = vpack.c.bf16 %v605, %v603
    %v672 = vpack.c.bf16 %v608, %v606
    %v673 = vpack.c.bf16 %v609, %v607
    %v674 = vld [vmem:[%s4] sm:$0xff]
    %v675 = vld [vmem:[%s4 + $0x8] sm:$0xff]
    %v676 = vld [vmem:[%s4 + $0x10] sm:$0xff]
    %v677 = vld [vmem:[%s4 + $0x18] sm:$0xff]
    %v678 = vld [vmem:[%s4 + $0x20] sm:$0xff]
    %v679 = vld [vmem:[%s4 + $0x28] sm:$0xff]
    %v680 = vld [vmem:[%s4 + $0x30] sm:$0xff]
    %v681 = vld [vmem:[%s4 + $0x38] sm:$0xff]
    %v682 = vld [vmem:[%s4 + $0x40] sm:$0xff]
    %v683 = vld [vmem:[%s4 + $0x48] sm:$0xff]
    %v684 = vld [vmem:[%s4 + $0x50] sm:$0xff]
    %v685 = vld [vmem:[%s4 + $0x58] sm:$0xff]
    %v686 = vld [vmem:[%s4 + $0x60] sm:$0xff]
    %v687 = vld [vmem:[%s4 + $0x68] sm:$0xff]
    %v688 = vld [vmem:[%s4 + $0x70] sm:$0xff]
    %v689 = vld [vmem:[%s4 + $0x78] sm:$0xff]
    %v690 = vld [vmem:[%s4 + $0x80] sm:$0xff]
    %v691 = vld [vmem:[%s4 + $0x88] sm:$0xff]
    %v692 = vld [vmem:[%s4 + $0x90] sm:$0xff]
    %v693 = vld [vmem:[%s4 + $0x98] sm:$0xff]
    %v694 = vld [vmem:[%s4 + $0xa0] sm:$0xff]
    %v695 = vld [vmem:[%s4 + $0xa8] sm:$0xff]
    %v696 = vld [vmem:[%s4 + $0xb0] sm:$0xff]
    %v697 = vld [vmem:[%s4 + $0xb8] sm:$0xff]
    %v698 = vld [vmem:[%s4 + $0xc0] sm:$0xff]
    %v699 = vld [vmem:[%s4 + $0xc8] sm:$0xff]
    %v700 = vld [vmem:[%s4 + $0xd0] sm:$0xff]
    %v701 = vld [vmem:[%s4 + $0xd8] sm:$0xff]
    %v702 = vld [vmem:[%s4 + $0xe0] sm:$0xff]
    %v703 = vld [vmem:[%s4 + $0xe8] sm:$0xff]
    %v704 = vld [vmem:[%s4 + $0xf0] sm:$0xff]
    %v705 = vld [vmem:[%s4 + $0xf8] sm:$0xff]
    %707 = vset.pattern.permute.xlu0 0
    %708 = vperm.xlu0 %707, %v674
    %v709 = vpop.permute.xlu0 %708
    %712 = vset.pattern.permute.xlu0 0
    %713 = vperm.xlu0 %712, %v675
    %v714 = vpop.permute.xlu0 %713
    %717 = vset.pattern.permute.xlu0 0
    %718 = vperm.xlu0 %717, %v676
    %v719 = vpop.permute.xlu0 %718
    %722 = vset.pattern.permute.xlu0 0
    %723 = vperm.xlu0 %722, %v677
    %v724 = vpop.permute.xlu0 %723
    %727 = vset.pattern.permute.xlu0 0
    %728 = vperm.xlu0 %727, %v678
    %v729 = vpop.permute.xlu0 %728
    %732 = vset.pattern.permute.xlu0 0
    %733 = vperm.xlu0 %732, %v679
    %v734 = vpop.permute.xlu0 %733
    %737 = vset.pattern.permute.xlu0 0
    %738 = vperm.xlu0 %737, %v680
    %v739 = vpop.permute.xlu0 %738
    %742 = vset.pattern.permute.xlu0 0
    %743 = vperm.xlu0 %742, %v681
    %v744 = vpop.permute.xlu0 %743
    %747 = vset.pattern.permute.xlu0 0
    %748 = vperm.xlu0 %747, %v682
    %v749 = vpop.permute.xlu0 %748
    %752 = vset.pattern.permute.xlu0 0
    %753 = vperm.xlu0 %752, %v683
    %v754 = vpop.permute.xlu0 %753
    %757 = vset.pattern.permute.xlu0 0
    %758 = vperm.xlu0 %757, %v684
    %v759 = vpop.permute.xlu0 %758
    %762 = vset.pattern.permute.xlu0 0
    %763 = vperm.xlu0 %762, %v685
    %v764 = vpop.permute.xlu0 %763
    %767 = vset.pattern.permute.xlu0 0
    %768 = vperm.xlu0 %767, %v686
    %v769 = vpop.permute.xlu0 %768
    %772 = vset.pattern.permute.xlu0 0
    %773 = vperm.xlu0 %772, %v687
    %v774 = vpop.permute.xlu0 %773
    %777 = vset.pattern.permute.xlu0 0
    %778 = vperm.xlu0 %777, %v688
    %v779 = vpop.permute.xlu0 %778
    %782 = vset.pattern.permute.xlu0 0
    %783 = vperm.xlu0 %782, %v689
    %v784 = vpop.permute.xlu0 %783
    %787 = vset.pattern.permute.xlu0 0
    %788 = vperm.xlu0 %787, %v690
    %v789 = vpop.permute.xlu0 %788
    %792 = vset.pattern.permute.xlu0 0
    %793 = vperm.xlu0 %792, %v691
    %v794 = vpop.permute.xlu0 %793
    %797 = vset.pattern.permute.xlu0 0
    %798 = vperm.xlu0 %797, %v692
    %v799 = vpop.permute.xlu0 %798
    %802 = vset.pattern.permute.xlu0 0
    %803 = vperm.xlu0 %802, %v693
    %v804 = vpop.permute.xlu0 %803
    %807 = vset.pattern.permute.xlu0 0
    %808 = vperm.xlu0 %807, %v694
    %v809 = vpop.permute.xlu0 %808
    %812 = vset.pattern.permute.xlu0 0
    %813 = vperm.xlu0 %812, %v695
    %v814 = vpop.permute.xlu0 %813
    %817 = vset.pattern.permute.xlu0 0
    %818 = vperm.xlu0 %817, %v696
    %v819 = vpop.permute.xlu0 %818
    %822 = vset.pattern.permute.xlu0 0
    %823 = vperm.xlu0 %822, %v697
    %v824 = vpop.permute.xlu0 %823
    %827 = vset.pattern.permute.xlu0 0
    %828 = vperm.xlu0 %827, %v698
    %v829 = vpop.permute.xlu0 %828
    %832 = vset.pattern.permute.xlu0 0
    %833 = vperm.xlu0 %832, %v699
    %v834 = vpop.permute.xlu0 %833
    %837 = vset.pattern.permute.xlu0 0
    %838 = vperm.xlu0 %837, %v700
    %v839 = vpop.permute.xlu0 %838
    %842 = vset.pattern.permute.xlu0 0
    %843 = vperm.xlu0 %842, %v701
    %v844 = vpop.permute.xlu0 %843
    %847 = vset.pattern.permute.xlu0 0
    %848 = vperm.xlu0 %847, %v702
    %v849 = vpop.permute.xlu0 %848
    %852 = vset.pattern.permute.xlu0 0
    %853 = vperm.xlu0 %852, %v703
    %v854 = vpop.permute.xlu0 %853
    %857 = vset.pattern.permute.xlu0 0
    %858 = vperm.xlu0 %857, %v704
    %v859 = vpop.permute.xlu0 %858
    %862 = vset.pattern.permute.xlu0 0
    %863 = vperm.xlu0 %862, %v705
    %v864 = vpop.permute.xlu0 %863
    %v898 = vunpack.c.l.b16 %v610
    %v899 = vunpack.c.h.b16 %v610
    %v900 = vunpack.c.l.b16 %v611
    %v901 = vunpack.c.h.b16 %v611
    %v902 = vunpack.c.l.b16 %v612
    %v903 = vunpack.c.h.b16 %v612
    %v904 = vunpack.c.l.b16 %v613
    %v905 = vunpack.c.h.b16 %v613
    %v906 = vunpack.c.l.b16 %v614
    %v907 = vunpack.c.h.b16 %v614
    %v908 = vunpack.c.l.b16 %v615
    %v909 = vunpack.c.h.b16 %v615
    %v910 = vunpack.c.l.b16 %v616
    %v911 = vunpack.c.h.b16 %v616
    %v912 = vunpack.c.l.b16 %v617
    %v913 = vunpack.c.h.b16 %v617
    %v914 = vunpack.c.l.b16 %v618
    %v915 = vunpack.c.h.b16 %v618
    %v916 = vunpack.c.l.b16 %v619
    %v917 = vunpack.c.h.b16 %v619
    %v918 = vunpack.c.l.b16 %v620
    %v919 = vunpack.c.h.b16 %v620
    %v920 = vunpack.c.l.b16 %v621
    %v921 = vunpack.c.h.b16 %v621
    %v922 = vunpack.c.l.b16 %v622
    %v923 = vunpack.c.h.b16 %v622
    %v924 = vunpack.c.l.b16 %v623
    %v925 = vunpack.c.h.b16 %v623
    %v926 = vunpack.c.l.b16 %v624
    %v927 = vunpack.c.h.b16 %v624
    %v928 = vunpack.c.l.b16 %v625
    %v929 = vunpack.c.h.b16 %v625
    %v930 = vunpack.c.l.b16 %v626
    %v931 = vunpack.c.h.b16 %v626
    %v932 = vunpack.c.l.b16 %v627
    %v933 = vunpack.c.h.b16 %v627
    %v934 = vunpack.c.l.b16 %v628
    %v935 = vunpack.c.h.b16 %v628
    %v936 = vunpack.c.l.b16 %v629
    %v937 = vunpack.c.h.b16 %v629
    %v938 = vunpack.c.l.b16 %v630
    %v939 = vunpack.c.h.b16 %v630
    %v940 = vunpack.c.l.b16 %v631
    %v941 = vunpack.c.h.b16 %v631
    %v942 = vunpack.c.l.b16 %v632
    %v943 = vunpack.c.h.b16 %v632
    %v944 = vunpack.c.l.b16 %v633
    %v945 = vunpack.c.h.b16 %v633
    %v946 = vunpack.c.l.b16 %v634
    %v947 = vunpack.c.h.b16 %v634
    %v948 = vunpack.c.l.b16 %v635
    %v949 = vunpack.c.h.b16 %v635
    %v950 = vunpack.c.l.b16 %v636
    %v951 = vunpack.c.h.b16 %v636
    %v952 = vunpack.c.l.b16 %v637
    %v953 = vunpack.c.h.b16 %v637
    %v954 = vunpack.c.l.b16 %v638
    %v955 = vunpack.c.h.b16 %v638
    %v956 = vunpack.c.l.b16 %v639
    %v957 = vunpack.c.h.b16 %v639
    %v958 = vunpack.c.l.b16 %v640
    %v959 = vunpack.c.h.b16 %v640
    %v960 = vunpack.c.l.b16 %v641
    %v961 = vunpack.c.h.b16 %v641
    %v962 = vpack.c.b16 %v900, %v898
    %v963 = vpack.c.b16 %v901, %v899
    %v964 = vpack.c.b16 %v904, %v902
    %v965 = vpack.c.b16 %v905, %v903
    %v966 = vpack.c.b16 %v908, %v906
    %v967 = vpack.c.b16 %v909, %v907
    %v968 = vpack.c.b16 %v912, %v910
    %v969 = vpack.c.b16 %v913, %v911
    %v970 = vpack.c.b16 %v916, %v914
    %v971 = vpack.c.b16 %v917, %v915
    %v972 = vpack.c.b16 %v920, %v918
    %v973 = vpack.c.b16 %v921, %v919
    %v974 = vpack.c.b16 %v924, %v922
    %v975 = vpack.c.b16 %v925, %v923
    %v976 = vpack.c.b16 %v928, %v926
    %v977 = vpack.c.b16 %v929, %v927
    %v978 = vpack.c.b16 %v932, %v930
    %v979 = vpack.c.b16 %v933, %v931
    %v980 = vpack.c.b16 %v936, %v934
    %v981 = vpack.c.b16 %v937, %v935
    %v982 = vpack.c.b16 %v940, %v938
    %v983 = vpack.c.b16 %v941, %v939
    %v984 = vpack.c.b16 %v944, %v942
    %v985 = vpack.c.b16 %v945, %v943
    %v986 = vpack.c.b16 %v948, %v946
    %v987 = vpack.c.b16 %v949, %v947
    %v988 = vpack.c.b16 %v952, %v950
    %v989 = vpack.c.b16 %v953, %v951
    %v990 = vpack.c.b16 %v956, %v954
    %v991 = vpack.c.b16 %v957, %v955
    %v992 = vpack.c.b16 %v960, %v958
    %v993 = vpack.c.b16 %v961, %v959
    %1026 = vmatpush.bf16.msra.mxu0 %v656
    %1027 = vmatpush.bf16.msra.mxu0 %v654
    %1028 = vmatpush.bf16.msra.mxu0 %v652
    %1029 = vmatpush.bf16.msra.mxu0 %v650
    %1030 = vmatpush.bf16.msra.mxu0 %v648
    %1031 = vmatpush.bf16.msra.mxu0 %v646
    %1032 = vmatpush.bf16.msra.mxu0 %v644
    %1033 = vmatpush.bf16.msra.mxu0 %v642
    %1034 = vmatmul.bf16.gmra.mxu0 %v962
    %v1035 = vpop.f32.mrf.mxu0
    %v1036 = vadd.f32 %v709, %v1035
    %v1037 = vpop.f32.mrf.mxu0
    %v1038 = vadd.f32 %v714, %v1037
    %1039 = vmatmul.bf16.gmra.mxu0 %v964
    %v1040 = vpop.f32.mrf.mxu0
    %v1041 = vadd.f32 %v719, %v1040
    %v1042 = vpop.f32.mrf.mxu0
    %v1043 = vadd.f32 %v724, %v1042
    %1044 = vmatmul.bf16.gmra.mxu0 %v966
    %v1045 = vpop.f32.mrf.mxu0
    %v1046 = vadd.f32 %v729, %v1045
    %v1047 = vpop.f32.mrf.mxu0
    %v1048 = vadd.f32 %v734, %v1047
    %1049 = vmatmul.bf16.gmra.mxu0 %v968
    %v1050 = vpop.f32.mrf.mxu0
    %v1051 = vadd.f32 %v739, %v1050
    %v1052 = vpop.f32.mrf.mxu0
    %v1053 = vadd.f32 %v744, %v1052
    %1054 = vmatmul.bf16.gmra.mxu0 %v970
    %v1055 = vpop.f32.mrf.mxu0
    %v1056 = vadd.f32 %v749, %v1055
    %v1057 = vpop.f32.mrf.mxu0
    %v1058 = vadd.f32 %v754, %v1057
    %1059 = vmatmul.bf16.gmra.mxu0 %v972
    %v1060 = vpop.f32.mrf.mxu0
    %v1061 = vadd.f32 %v759, %v1060
    %v1062 = vpop.f32.mrf.mxu0
    %v1063 = vadd.f32 %v764, %v1062
    %1064 = vmatmul.bf16.gmra.mxu0 %v974
    %v1065 = vpop.f32.mrf.mxu0
    %v1066 = vadd.f32 %v769, %v1065
    %v1067 = vpop.f32.mrf.mxu0
    %v1068 = vadd.f32 %v774, %v1067
    %1069 = vmatmul.bf16.gmra.mxu0 %v976
    %v1070 = vpop.f32.mrf.mxu0
    %v1071 = vadd.f32 %v779, %v1070
    %v1072 = vpop.f32.mrf.mxu0
    %v1073 = vadd.f32 %v784, %v1072
    %1074 = vmatmul.bf16.gmra.mxu0 %v978
    %v1075 = vpop.f32.mrf.mxu0
    %v1076 = vadd.f32 %v789, %v1075
    %v1077 = vpop.f32.mrf.mxu0
    %v1078 = vadd.f32 %v794, %v1077
    %1079 = vmatmul.bf16.gmra.mxu0 %v980
    %v1080 = vpop.f32.mrf.mxu0
    %v1081 = vadd.f32 %v799, %v1080
    %v1082 = vpop.f32.mrf.mxu0
    %v1083 = vadd.f32 %v804, %v1082
    %1084 = vmatmul.bf16.gmra.mxu0 %v982
    %v1085 = vpop.f32.mrf.mxu0
    %v1086 = vadd.f32 %v809, %v1085
    %v1087 = vpop.f32.mrf.mxu0
    %v1088 = vadd.f32 %v814, %v1087
    %1089 = vmatmul.bf16.gmra.mxu0 %v984
    %v1090 = vpop.f32.mrf.mxu0
    %v1091 = vadd.f32 %v819, %v1090
    %v1092 = vpop.f32.mrf.mxu0
    %v1093 = vadd.f32 %v824, %v1092
    %1094 = vmatmul.bf16.gmra.mxu0 %v986
    %v1095 = vpop.f32.mrf.mxu0
    %v1096 = vadd.f32 %v829, %v1095
    %v1097 = vpop.f32.mrf.mxu0
    %v1098 = vadd.f32 %v834, %v1097
    %1099 = vmatmul.bf16.gmra.mxu0 %v988
    %v1100 = vpop.f32.mrf.mxu0
    %v1101 = vadd.f32 %v839, %v1100
    %v1102 = vpop.f32.mrf.mxu0
    %v1103 = vadd.f32 %v844, %v1102
    %1104 = vmatmul.bf16.gmra.mxu0 %v990
    %v1105 = vpop.f32.mrf.mxu0
    %v1106 = vadd.f32 %v849, %v1105
    %v1107 = vpop.f32.mrf.mxu0
    %v1108 = vadd.f32 %v854, %v1107
    %1109 = vmatmul.bf16.gmra.mxu0 %v992
    %v1110 = vpop.f32.mrf.mxu0
    %v1111 = vadd.f32 %v859, %v1110
    %v1112 = vpop.f32.mrf.mxu0
    %v1113 = vadd.f32 %v864, %v1112
    %1114 = vdwg.mxu0
    %1115 = vmatpush.bf16.msra.mxu0 %v672
    %1116 = vmatpush.bf16.msra.mxu0 %v670
    %1117 = vmatpush.bf16.msra.mxu0 %v668
    %1118 = vmatpush.bf16.msra.mxu0 %v666
    %1119 = vmatpush.bf16.msra.mxu0 %v664
    %1120 = vmatpush.bf16.msra.mxu0 %v662
    %1121 = vmatpush.bf16.msra.mxu0 %v660
    %1122 = vmatpush.bf16.msra.mxu0 %v658
    %1123 = vmatmul.bf16.gmra.mxu0 %v963
    %v1124 = vpop.f32.mrf.mxu0
    %v1125 = vadd.f32 %v1036, %v1124
    %v1126 = vpop.f32.mrf.mxu0
    %v1127 = vadd.f32 %v1038, %v1126
    %1128 = vmatmul.bf16.gmra.mxu0 %v965
    %v1129 = vpop.f32.mrf.mxu0
    %v1130 = vadd.f32 %v1041, %v1129
    %v1131 = vpop.f32.mrf.mxu0
    %v1132 = vadd.f32 %v1043, %v1131
    %1133 = vmatmul.bf16.gmra.mxu0 %v967
    %v1134 = vpop.f32.mrf.mxu0
    %v1135 = vadd.f32 %v1046, %v1134
    %v1136 = vpop.f32.mrf.mxu0
    %v1137 = vadd.f32 %v1048, %v1136
    %1138 = vmatmul.bf16.gmra.mxu0 %v969
    %v1139 = vpop.f32.mrf.mxu0
    %v1140 = vadd.f32 %v1051, %v1139
    %v1141 = vpop.f32.mrf.mxu0
    %v1142 = vadd.f32 %v1053, %v1141
    %1143 = vmatmul.bf16.gmra.mxu0 %v971
    %v1144 = vpop.f32.mrf.mxu0
    %v1145 = vadd.f32 %v1056, %v1144
    %v1146 = vpop.f32.mrf.mxu0
    %v1147 = vadd.f32 %v1058, %v1146
    %1148 = vmatmul.bf16.gmra.mxu0 %v973
    %v1149 = vpop.f32.mrf.mxu0
    %v1150 = vadd.f32 %v1061, %v1149
    %v1151 = vpop.f32.mrf.mxu0
    %v1152 = vadd.f32 %v1063, %v1151
    %1153 = vmatmul.bf16.gmra.mxu0 %v975
    %v1154 = vpop.f32.mrf.mxu0
    %v1155 = vadd.f32 %v1066, %v1154
    %v1156 = vpop.f32.mrf.mxu0
    %v1157 = vadd.f32 %v1068, %v1156
    %1158 = vmatmul.bf16.gmra.mxu0 %v977
    %v1159 = vpop.f32.mrf.mxu0
    %v1160 = vadd.f32 %v1071, %v1159
    %v1161 = vpop.f32.mrf.mxu0
    %v1162 = vadd.f32 %v1073, %v1161
    %1163 = vmatmul.bf16.gmra.mxu0 %v979
    %v1164 = vpop.f32.mrf.mxu0
    %v1165 = vadd.f32 %v1076, %v1164
    %v1166 = vpop.f32.mrf.mxu0
    %v1167 = vadd.f32 %v1078, %v1166
    %1168 = vmatmul.bf16.gmra.mxu0 %v981
    %v1169 = vpop.f32.mrf.mxu0
    %v1170 = vadd.f32 %v1081, %v1169
    %v1171 = vpop.f32.mrf.mxu0
    %v1172 = vadd.f32 %v1083, %v1171
    %1173 = vmatmul.bf16.gmra.mxu0 %v983
    %v1174 = vpop.f32.mrf.mxu0
    %v1175 = vadd.f32 %v1086, %v1174
    %v1176 = vpop.f32.mrf.mxu0
    %v1177 = vadd.f32 %v1088, %v1176
    %1178 = vmatmul.bf16.gmra.mxu0 %v985
    %v1179 = vpop.f32.mrf.mxu0
    %v1180 = vadd.f32 %v1091, %v1179
    %v1181 = vpop.f32.mrf.mxu0
    %v1182 = vadd.f32 %v1093, %v1181
    %1183 = vmatmul.bf16.gmra.mxu0 %v987
    %v1184 = vpop.f32.mrf.mxu0
    %v1185 = vadd.f32 %v1096, %v1184
    %v1186 = vpop.f32.mrf.mxu0
    %v1187 = vadd.f32 %v1098, %v1186
    %1188 = vmatmul.bf16.gmra.mxu0 %v989
    %v1189 = vpop.f32.mrf.mxu0
    %v1190 = vadd.f32 %v1101, %v1189
    %v1191 = vpop.f32.mrf.mxu0
    %v1192 = vadd.f32 %v1103, %v1191
    %1193 = vmatmul.bf16.gmra.mxu0 %v991
    %v1194 = vpop.f32.mrf.mxu0
    %v1195 = vadd.f32 %v1106, %v1194
    %v1196 = vpop.f32.mrf.mxu0
    %v1197 = vadd.f32 %v1108, %v1196
    %1198 = vmatmul.bf16.gmra.mxu0 %v993
    %v1199 = vpop.f32.mrf.mxu0
    %v1200 = vadd.f32 %v1111, %v1199
    %v1201 = vpop.f32.mrf.mxu0
    %v1202 = vadd.f32 %v1113, %v1201
    %1203 = vdwg.mxu0
    %1204 = vmatpush.bf16.msra.mxu0 %v657
    %1205 = vmatpush.bf16.msra.mxu0 %v655
    %1206 = vmatpush.bf16.msra.mxu0 %v653
    %1207 = vmatpush.bf16.msra.mxu0 %v651
    %1208 = vmatpush.bf16.msra.mxu0 %v649
    %1209 = vmatpush.bf16.msra.mxu0 %v647
    %1210 = vmatpush.bf16.msra.mxu0 %v645
    %1211 = vmatpush.bf16.msra.mxu0 %v643
    %1212 = vmatmul.bf16.gmra.mxu0 %v962
    %v1213 = vpop.f32.mrf.mxu0
    %v1214 = vadd.f32 %v709, %v1213
    %v1215 = vpop.f32.mrf.mxu0
    %v1216 = vadd.f32 %v714, %v1215
    %1217 = vmatmul.bf16.gmra.mxu0 %v964
    %v1218 = vpop.f32.mrf.mxu0
    %v1219 = vadd.f32 %v719, %v1218
    %v1220 = vpop.f32.mrf.mxu0
    %v1221 = vadd.f32 %v724, %v1220
    %1222 = vmatmul.bf16.gmra.mxu0 %v966
    %v1223 = vpop.f32.mrf.mxu0
    %v1224 = vadd.f32 %v729, %v1223
    %v1225 = vpop.f32.mrf.mxu0
    %v1226 = vadd.f32 %v734, %v1225
    %1227 = vmatmul.bf16.gmra.mxu0 %v968
    %v1228 = vpop.f32.mrf.mxu0
    %v1229 = vadd.f32 %v739, %v1228
    %v1230 = vpop.f32.mrf.mxu0
    %v1231 = vadd.f32 %v744, %v1230
    %1232 = vmatmul.bf16.gmra.mxu0 %v970
    %v1233 = vpop.f32.mrf.mxu0
    %v1234 = vadd.f32 %v749, %v1233
    %v1235 = vpop.f32.mrf.mxu0
    %v1236 = vadd.f32 %v754, %v1235
    %1237 = vmatmul.bf16.gmra.mxu0 %v972
    %v1238 = vpop.f32.mrf.mxu0
    %v1239 = vadd.f32 %v759, %v1238
    %v1240 = vpop.f32.mrf.mxu0
    %v1241 = vadd.f32 %v764, %v1240
    %1242 = vmatmul.bf16.gmra.mxu0 %v974
    %v1243 = vpop.f32.mrf.mxu0
    %v1244 = vadd.f32 %v769, %v1243
    %v1245 = vpop.f32.mrf.mxu0
    %v1246 = vadd.f32 %v774, %v1245
    %1247 = vmatmul.bf16.gmra.mxu0 %v976
    %v1248 = vpop.f32.mrf.mxu0
    %v1249 = vadd.f32 %v779, %v1248
    %v1250 = vpop.f32.mrf.mxu0
    %v1251 = vadd.f32 %v784, %v1250
    %1252 = vmatmul.bf16.gmra.mxu0 %v978
    %v1253 = vpop.f32.mrf.mxu0
    %v1254 = vadd.f32 %v789, %v1253
    %v1255 = vpop.f32.mrf.mxu0
    %v1256 = vadd.f32 %v794, %v1255
    %1257 = vmatmul.bf16.gmra.mxu0 %v980
    %v1258 = vpop.f32.mrf.mxu0
    %v1259 = vadd.f32 %v799, %v1258
    %v1260 = vpop.f32.mrf.mxu0
    %v1261 = vadd.f32 %v804, %v1260
    %1262 = vmatmul.bf16.gmra.mxu0 %v982
    %v1263 = vpop.f32.mrf.mxu0
    %v1264 = vadd.f32 %v809, %v1263
    %v1265 = vpop.f32.mrf.mxu0
    %v1266 = vadd.f32 %v814, %v1265
    %1267 = vmatmul.bf16.gmra.mxu0 %v984
    %v1268 = vpop.f32.mrf.mxu0
    %v1269 = vadd.f32 %v819, %v1268
    %v1270 = vpop.f32.mrf.mxu0
    %v1271 = vadd.f32 %v824, %v1270
    %1272 = vmatmul.bf16.gmra.mxu0 %v986
    %v1273 = vpop.f32.mrf.mxu0
    %v1274 = vadd.f32 %v829, %v1273
    %v1275 = vpop.f32.mrf.mxu0
    %v1276 = vadd.f32 %v834, %v1275
    %1277 = vmatmul.bf16.gmra.mxu0 %v988
    %v1278 = vpop.f32.mrf.mxu0
    %v1279 = vadd.f32 %v839, %v1278
    %v1280 = vpop.f32.mrf.mxu0
    %v1281 = vadd.f32 %v844, %v1280
    %1282 = vmatmul.bf16.gmra.mxu0 %v990
    %v1283 = vpop.f32.mrf.mxu0
    %v1284 = vadd.f32 %v849, %v1283
    %v1285 = vpop.f32.mrf.mxu0
    %v1286 = vadd.f32 %v854, %v1285
    %1287 = vmatmul.bf16.gmra.mxu0 %v992
    %v1288 = vpop.f32.mrf.mxu0
    %v1289 = vadd.f32 %v859, %v1288
    %v1290 = vpop.f32.mrf.mxu0
    %v1291 = vadd.f32 %v864, %v1290
    %1292 = vdwg.mxu0
    %1293 = vmatpush.bf16.msra.mxu0 %v673
    %1294 = vmatpush.bf16.msra.mxu0 %v671
    %1295 = vmatpush.bf16.msra.mxu0 %v669
    %1296 = vmatpush.bf16.msra.mxu0 %v667
    %1297 = vmatpush.bf16.msra.mxu0 %v665
    %1298 = vmatpush.bf16.msra.mxu0 %v663
    %1299 = vmatpush.bf16.msra.mxu0 %v661
    %1300 = vmatpush.bf16.msra.mxu0 %v659
    %1301 = vmatmul.bf16.gmra.mxu0 %v963
    %v1302 = vpop.f32.mrf.mxu0
    %v1303 = vadd.f32 %v1214, %v1302
    %v1304 = vpop.f32.mrf.mxu0
    %v1305 = vadd.f32 %v1216, %v1304
    %1306 = vmatmul.bf16.gmra.mxu0 %v965
    %v1307 = vpop.f32.mrf.mxu0
    %v1308 = vadd.f32 %v1219, %v1307
    %v1309 = vpop.f32.mrf.mxu0
    %v1310 = vadd.f32 %v1221, %v1309
    %1311 = vmatmul.bf16.gmra.mxu0 %v967
    %v1312 = vpop.f32.mrf.mxu0
    %v1313 = vadd.f32 %v1224, %v1312
    %v1314 = vpop.f32.mrf.mxu0
    %v1315 = vadd.f32 %v1226, %v1314
    %1316 = vmatmul.bf16.gmra.mxu0 %v969
    %v1317 = vpop.f32.mrf.mxu0
    %v1318 = vadd.f32 %v1229, %v1317
    %v1319 = vpop.f32.mrf.mxu0
    %v1320 = vadd.f32 %v1231, %v1319
    %1321 = vmatmul.bf16.gmra.mxu0 %v971
    %v1322 = vpop.f32.mrf.mxu0
    %v1323 = vadd.f32 %v1234, %v1322
    %v1324 = vpop.f32.mrf.mxu0
    %v1325 = vadd.f32 %v1236, %v1324
    %1326 = vmatmul.bf16.gmra.mxu0 %v973
    %v1327 = vpop.f32.mrf.mxu0
    %v1328 = vadd.f32 %v1239, %v1327
    %v1329 = vpop.f32.mrf.mxu0
    %v1330 = vadd.f32 %v1241, %v1329
    %1331 = vmatmul.bf16.gmra.mxu0 %v975
    %v1332 = vpop.f32.mrf.mxu0
    %v1333 = vadd.f32 %v1244, %v1332
    %v1334 = vpop.f32.mrf.mxu0
    %v1335 = vadd.f32 %v1246, %v1334
    %1336 = vmatmul.bf16.gmra.mxu0 %v977
    %v1337 = vpop.f32.mrf.mxu0
    %v1338 = vadd.f32 %v1249, %v1337
    %v1339 = vpop.f32.mrf.mxu0
    %v1340 = vadd.f32 %v1251, %v1339
    %1341 = vmatmul.bf16.gmra.mxu0 %v979
    %v1342 = vpop.f32.mrf.mxu0
    %v1343 = vadd.f32 %v1254, %v1342
    %v1344 = vpop.f32.mrf.mxu0
    %v1345 = vadd.f32 %v1256, %v1344
    %1346 = vmatmul.bf16.gmra.mxu0 %v981
    %v1347 = vpop.f32.mrf.mxu0
    %v1348 = vadd.f32 %v1259, %v1347
    %v1349 = vpop.f32.mrf.mxu0
    %v1350 = vadd.f32 %v1261, %v1349
    %1351 = vmatmul.bf16.gmra.mxu0 %v983
    %v1352 = vpop.f32.mrf.mxu0
    %v1353 = vadd.f32 %v1264, %v1352
    %v1354 = vpop.f32.mrf.mxu0
    %v1355 = vadd.f32 %v1266, %v1354
    %1356 = vmatmul.bf16.gmra.mxu0 %v985
    %v1357 = vpop.f32.mrf.mxu0
    %v1358 = vadd.f32 %v1269, %v1357
    %v1359 = vpop.f32.mrf.mxu0
    %v1360 = vadd.f32 %v1271, %v1359
    %1361 = vmatmul.bf16.gmra.mxu0 %v987
    %v1362 = vpop.f32.mrf.mxu0
    %v1363 = vadd.f32 %v1274, %v1362
    %v1364 = vpop.f32.mrf.mxu0
    %v1365 = vadd.f32 %v1276, %v1364
    %1366 = vmatmul.bf16.gmra.mxu0 %v989
    %v1367 = vpop.f32.mrf.mxu0
    %v1368 = vadd.f32 %v1279, %v1367
    %v1369 = vpop.f32.mrf.mxu0
    %v1370 = vadd.f32 %v1281, %v1369
    %1371 = vmatmul.bf16.gmra.mxu0 %v991
    %v1372 = vpop.f32.mrf.mxu0
    %v1373 = vadd.f32 %v1284, %v1372
    %v1374 = vpop.f32.mrf.mxu0
    %v1375 = vadd.f32 %v1286, %v1374
    %1376 = vmatmul.bf16.gmra.mxu0 %v993
    %v1377 = vpop.f32.mrf.mxu0
    %v1378 = vadd.f32 %v1289, %v1377
    %v1379 = vpop.f32.mrf.mxu0
    %v1380 = vadd.f32 %v1291, %v1379
    %1381 = vdwg.mxu0
    %v1382 = vmax.f32 %v1125, 0.0
    %v1383 = vmax.f32 %v1303, 0.0
    %v1384 = vmax.f32 %v1127, 0.0
    %v1385 = vmax.f32 %v1305, 0.0
    %v1386 = vmax.f32 %v1130, 0.0
    %v1387 = vmax.f32 %v1308, 0.0
    %v1388 = vmax.f32 %v1132, 0.0
    %v1389 = vmax.f32 %v1310, 0.0
    %v1390 = vmax.f32 %v1135, 0.0
    %v1391 = vmax.f32 %v1313, 0.0
    %v1392 = vmax.f32 %v1137, 0.0
    %v1393 = vmax.f32 %v1315, 0.0
    %v1394 = vmax.f32 %v1140, 0.0
    %v1395 = vmax.f32 %v1318, 0.0
    %v1396 = vmax.f32 %v1142, 0.0
    %v1397 = vmax.f32 %v1320, 0.0
    %v1398 = vmax.f32 %v1145, 0.0
    %v1399 = vmax.f32 %v1323, 0.0
    %v1400 = vmax.f32 %v1147, 0.0
    %v1401 = vmax.f32 %v1325, 0.0
    %v1402 = vmax.f32 %v1150, 0.0
    %v1403 = vmax.f32 %v1328, 0.0
    %v1404 = vmax.f32 %v1152, 0.0
    %v1405 = vmax.f32 %v1330, 0.0
    %v1406 = vmax.f32 %v1155, 0.0
    %v1407 = vmax.f32 %v1333, 0.0
    %v1408 = vmax.f32 %v1157, 0.0
    %v1409 = vmax.f32 %v1335, 0.0
    %v1410 = vmax.f32 %v1160, 0.0
    %v1411 = vmax.f32 %v1338, 0.0
    %v1412 = vmax.f32 %v1162, 0.0
    %v1413 = vmax.f32 %v1340, 0.0
    %v1414 = vmax.f32 %v1165, 0.0
    %v1415 = vmax.f32 %v1343, 0.0
    %v1416 = vmax.f32 %v1167, 0.0
    %v1417 = vmax.f32 %v1345, 0.0
    %v1418 = vmax.f32 %v1170, 0.0
    %v1419 = vmax.f32 %v1348, 0.0
    %v1420 = vmax.f32 %v1172, 0.0
    %v1421 = vmax.f32 %v1350, 0.0
    %v1422 = vmax.f32 %v1175, 0.0
    %v1423 = vmax.f32 %v1353, 0.0
    %v1424 = vmax.f32 %v1177, 0.0
    %v1425 = vmax.f32 %v1355, 0.0
    %v1426 = vmax.f32 %v1180, 0.0
    %v1427 = vmax.f32 %v1358, 0.0
    %v1428 = vmax.f32 %v1182, 0.0
    %v1429 = vmax.f32 %v1360, 0.0
    %v1430 = vmax.f32 %v1185, 0.0
    %v1431 = vmax.f32 %v1363, 0.0
    %v1432 = vmax.f32 %v1187, 0.0
    %v1433 = vmax.f32 %v1365, 0.0
    %v1434 = vmax.f32 %v1190, 0.0
    %v1435 = vmax.f32 %v1368, 0.0
    %v1436 = vmax.f32 %v1192, 0.0
    %v1437 = vmax.f32 %v1370, 0.0
    %v1438 = vmax.f32 %v1195, 0.0
    %v1439 = vmax.f32 %v1373, 0.0
    %v1440 = vmax.f32 %v1197, 0.0
    %v1441 = vmax.f32 %v1375, 0.0
    %v1442 = vmax.f32 %v1200, 0.0
    %v1443 = vmax.f32 %v1378, 0.0
    %v1444 = vmax.f32 %v1202, 0.0
    %v1445 = vmax.f32 %v1380, 0.0
    %v1446 = vld [vmem:[%s5] sm:$0xff]
    %v1447 = vld [vmem:[%s5 + $0x8] sm:$0xff]
    %v1448 = vld [vmem:[%s5 + $0x10] sm:$0xff]
    %v1449 = vld [vmem:[%s5 + $0x18] sm:$0xff]
    %v1450 = vld [vmem:[%s5 + $0x20] sm:$0xff]
    %v1451 = vld [vmem:[%s5 + $0x28] sm:$0xff]
    %v1452 = vld [vmem:[%s5 + $0x30] sm:$0xff]
    %v1453 = vld [vmem:[%s5 + $0x38] sm:$0xff]
    %v1454 = vld [vmem:[%s5 + $0x40] sm:$0xff]
    %v1455 = vld [vmem:[%s5 + $0x48] sm:$0xff]
    %v1456 = vld [vmem:[%s5 + $0x50] sm:$0xff]
    %v1457 = vld [vmem:[%s5 + $0x58] sm:$0xff]
    %v1458 = vld [vmem:[%s5 + $0x60] sm:$0xff]
    %v1459 = vld [vmem:[%s5 + $0x68] sm:$0xff]
    %v1460 = vld [vmem:[%s5 + $0x70] sm:$0xff]
    %v1461 = vld [vmem:[%s5 + $0x78] sm:$0xff]
    %v1462 = vld [vmem:[%s5 + $0x80] sm:$0xff]
    %v1463 = vld [vmem:[%s5 + $0x88] sm:$0xff]
    %v1464 = vld [vmem:[%s5 + $0x90] sm:$0xff]
    %v1465 = vld [vmem:[%s5 + $0x98] sm:$0xff]
    %v1466 = vld [vmem:[%s5 + $0xa0] sm:$0xff]
    %v1467 = vld [vmem:[%s5 + $0xa8] sm:$0xff]
    %v1468 = vld [vmem:[%s5 + $0xb0] sm:$0xff]
    %v1469 = vld [vmem:[%s5 + $0xb8] sm:$0xff]
    %v1470 = vld [vmem:[%s5 + $0xc0] sm:$0xff]
    %v1471 = vld [vmem:[%s5 + $0xc8] sm:$0xff]
    %v1472 = vld [vmem:[%s5 + $0xd0] sm:$0xff]
    %v1473 = vld [vmem:[%s5 + $0xd8] sm:$0xff]
    %v1474 = vld [vmem:[%s5 + $0xe0] sm:$0xff]
    %v1475 = vld [vmem:[%s5 + $0xe8] sm:$0xff]
    %v1476 = vld [vmem:[%s5 + $0xf0] sm:$0xff]
    %v1477 = vld [vmem:[%s5 + $0xf8] sm:$0xff]
    %1479 = vset.pattern.permute.xlu0 0
    %1480 = vperm.xlu0 %1479, %v1446
    %v1481 = vpop.permute.xlu0 %1480
    %1484 = vset.pattern.permute.xlu0 0
    %1485 = vperm.xlu0 %1484, %v1447
    %v1486 = vpop.permute.xlu0 %1485
    %1489 = vset.pattern.permute.xlu0 0
    %1490 = vperm.xlu0 %1489, %v1448
    %v1491 = vpop.permute.xlu0 %1490
    %1494 = vset.pattern.permute.xlu0 0
    %1495 = vperm.xlu0 %1494, %v1449
    %v1496 = vpop.permute.xlu0 %1495
    %1499 = vset.pattern.permute.xlu0 0
    %1500 = vperm.xlu0 %1499, %v1450
    %v1501 = vpop.permute.xlu0 %1500
    %1504 = vset.pattern.permute.xlu0 0
    %1505 = vperm.xlu0 %1504, %v1451
    %v1506 = vpop.permute.xlu0 %1505
    %1509 = vset.pattern.permute.xlu0 0
    %1510 = vperm.xlu0 %1509, %v1452
    %v1511 = vpop.permute.xlu0 %1510
    %1514 = vset.pattern.permute.xlu0 0
    %1515 = vperm.xlu0 %1514, %v1453
    %v1516 = vpop.permute.xlu0 %1515
    %1519 = vset.pattern.permute.xlu0 0
    %1520 = vperm.xlu0 %1519, %v1454
    %v1521 = vpop.permute.xlu0 %1520
    %1524 = vset.pattern.permute.xlu0 0
    %1525 = vperm.xlu0 %1524, %v1455
    %v1526 = vpop.permute.xlu0 %1525
    %1529 = vset.pattern.permute.xlu0 0
    %1530 = vperm.xlu0 %1529, %v1456
    %v1531 = vpop.permute.xlu0 %1530
    %1534 = vset.pattern.permute.xlu0 0
    %1535 = vperm.xlu0 %1534, %v1457
    %v1536 = vpop.permute.xlu0 %1535
    %1539 = vset.pattern.permute.xlu0 0
    %1540 = vperm.xlu0 %1539, %v1458
    %v1541 = vpop.permute.xlu0 %1540
    %1544 = vset.pattern.permute.xlu0 0
    %1545 = vperm.xlu0 %1544, %v1459
    %v1546 = vpop.permute.xlu0 %1545
    %1549 = vset.pattern.permute.xlu0 0
    %1550 = vperm.xlu0 %1549, %v1460
    %v1551 = vpop.permute.xlu0 %1550
    %1554 = vset.pattern.permute.xlu0 0
    %1555 = vperm.xlu0 %1554, %v1461
    %v1556 = vpop.permute.xlu0 %1555
    %1559 = vset.pattern.permute.xlu0 0
    %1560 = vperm.xlu0 %1559, %v1462
    %v1561 = vpop.permute.xlu0 %1560
    %1564 = vset.pattern.permute.xlu0 0
    %1565 = vperm.xlu0 %1564, %v1463
    %v1566 = vpop.permute.xlu0 %1565
    %1569 = vset.pattern.permute.xlu0 0
    %1570 = vperm.xlu0 %1569, %v1464
    %v1571 = vpop.permute.xlu0 %1570
    %1574 = vset.pattern.permute.xlu0 0
    %1575 = vperm.xlu0 %1574, %v1465
    %v1576 = vpop.permute.xlu0 %1575
    %1579 = vset.pattern.permute.xlu0 0
    %1580 = vperm.xlu0 %1579, %v1466
    %v1581 = vpop.permute.xlu0 %1580
    %1584 = vset.pattern.permute.xlu0 0
    %1585 = vperm.xlu0 %1584, %v1467
    %v1586 = vpop.permute.xlu0 %1585
    %1589 = vset.pattern.permute.xlu0 0
    %1590 = vperm.xlu0 %1589, %v1468
    %v1591 = vpop.permute.xlu0 %1590
    %1594 = vset.pattern.permute.xlu0 0
    %1595 = vperm.xlu0 %1594, %v1469
    %v1596 = vpop.permute.xlu0 %1595
    %1599 = vset.pattern.permute.xlu0 0
    %1600 = vperm.xlu0 %1599, %v1470
    %v1601 = vpop.permute.xlu0 %1600
    %1604 = vset.pattern.permute.xlu0 0
    %1605 = vperm.xlu0 %1604, %v1471
    %v1606 = vpop.permute.xlu0 %1605
    %1609 = vset.pattern.permute.xlu0 0
    %1610 = vperm.xlu0 %1609, %v1472
    %v1611 = vpop.permute.xlu0 %1610
    %1614 = vset.pattern.permute.xlu0 0
    %1615 = vperm.xlu0 %1614, %v1473
    %v1616 = vpop.permute.xlu0 %1615
    %1619 = vset.pattern.permute.xlu0 0
    %1620 = vperm.xlu0 %1619, %v1474
    %v1621 = vpop.permute.xlu0 %1620
    %1624 = vset.pattern.permute.xlu0 0
    %1625 = vperm.xlu0 %1624, %v1475
    %v1626 = vpop.permute.xlu0 %1625
    %1629 = vset.pattern.permute.xlu0 0
    %1630 = vperm.xlu0 %1629, %v1476
    %v1631 = vpop.permute.xlu0 %1630
    %1634 = vset.pattern.permute.xlu0 0
    %1635 = vperm.xlu0 %1634, %v1477
    %v1636 = vpop.permute.xlu0 %1635
    %v1638 = vmul.f32 %v1481, %v1382
    %v1639 = vmul.f32 %v1481, %v1383
    %v1640 = vmul.f32 %v1486, %v1384
    %v1641 = vmul.f32 %v1486, %v1385
    %v1642 = vmul.f32 %v1491, %v1386
    %v1643 = vmul.f32 %v1491, %v1387
    %v1644 = vmul.f32 %v1496, %v1388
    %v1645 = vmul.f32 %v1496, %v1389
    %v1646 = vmul.f32 %v1501, %v1390
    %v1647 = vmul.f32 %v1501, %v1391
    %v1648 = vmul.f32 %v1506, %v1392
    %v1649 = vmul.f32 %v1506, %v1393
    %v1650 = vmul.f32 %v1511, %v1394
    %v1651 = vmul.f32 %v1511, %v1395
    %v1652 = vmul.f32 %v1516, %v1396
    %v1653 = vmul.f32 %v1516, %v1397
    %v1654 = vmul.f32 %v1521, %v1398
    %v1655 = vmul.f32 %v1521, %v1399
    %v1656 = vmul.f32 %v1526, %v1400
    %v1657 = vmul.f32 %v1526, %v1401
    %v1658 = vmul.f32 %v1531, %v1402
    %v1659 = vmul.f32 %v1531, %v1403
    %v1660 = vmul.f32 %v1536, %v1404
    %v1661 = vmul.f32 %v1536, %v1405
    %v1662 = vmul.f32 %v1541, %v1406
    %v1663 = vmul.f32 %v1541, %v1407
    %v1664 = vmul.f32 %v1546, %v1408
    %v1665 = vmul.f32 %v1546, %v1409
    %v1666 = vmul.f32 %v1551, %v1410
    %v1667 = vmul.f32 %v1551, %v1411
    %v1668 = vmul.f32 %v1556, %v1412
    %v1669 = vmul.f32 %v1556, %v1413
    %v1670 = vmul.f32 %v1561, %v1414
    %v1671 = vmul.f32 %v1561, %v1415
    %v1672 = vmul.f32 %v1566, %v1416
    %v1673 = vmul.f32 %v1566, %v1417
    %v1674 = vmul.f32 %v1571, %v1418
    %v1675 = vmul.f32 %v1571, %v1419
    %v1676 = vmul.f32 %v1576, %v1420
    %v1677 = vmul.f32 %v1576, %v1421
    %v1678 = vmul.f32 %v1581, %v1422
    %v1679 = vmul.f32 %v1581, %v1423
    %v1680 = vmul.f32 %v1586, %v1424
    %v1681 = vmul.f32 %v1586, %v1425
    %v1682 = vmul.f32 %v1591, %v1426
    %v1683 = vmul.f32 %v1591, %v1427
    %v1684 = vmul.f32 %v1596, %v1428
    %v1685 = vmul.f32 %v1596, %v1429
    %v1686 = vmul.f32 %v1601, %v1430
    %v1687 = vmul.f32 %v1601, %v1431
    %v1688 = vmul.f32 %v1606, %v1432
    %v1689 = vmul.f32 %v1606, %v1433
    %v1690 = vmul.f32 %v1611, %v1434
    %v1691 = vmul.f32 %v1611, %v1435
    %v1692 = vmul.f32 %v1616, %v1436
    %v1693 = vmul.f32 %v1616, %v1437
    %v1694 = vmul.f32 %v1621, %v1438
    %v1695 = vmul.f32 %v1621, %v1439
    %v1696 = vmul.f32 %v1626, %v1440
    %v1697 = vmul.f32 %v1626, %v1441
    %v1698 = vmul.f32 %v1631, %v1442
    %v1699 = vmul.f32 %v1631, %v1443
    %v1700 = vmul.f32 %v1636, %v1444
    %v1701 = vmul.f32 %v1636, %v1445
    %v1702 = vadd.f32 %v1638, %v1640
    %v1703 = vadd.f32 %v1702, %v1642
    %v1704 = vadd.f32 %v1703, %v1644
    %v1705 = vadd.f32 %v1704, %v1646
    %v1706 = vadd.f32 %v1705, %v1648
    %v1707 = vadd.f32 %v1706, %v1650
    %v1708 = vadd.f32 %v1707, %v1652
    %v1709 = vadd.f32 %v1708, %v1654
    %v1710 = vadd.f32 %v1709, %v1656
    %v1711 = vadd.f32 %v1710, %v1658
    %v1712 = vadd.f32 %v1711, %v1660
    %v1713 = vadd.f32 %v1712, %v1662
    %v1714 = vadd.f32 %v1713, %v1664
    %v1715 = vadd.f32 %v1714, %v1666
    %v1716 = vadd.f32 %v1715, %v1668
    %v1717 = vadd.f32 %v1716, %v1670
    %v1718 = vadd.f32 %v1717, %v1672
    %v1719 = vadd.f32 %v1718, %v1674
    %v1720 = vadd.f32 %v1719, %v1676
    %v1721 = vadd.f32 %v1720, %v1678
    %v1722 = vadd.f32 %v1721, %v1680
    %v1723 = vadd.f32 %v1722, %v1682
    %v1724 = vadd.f32 %v1723, %v1684
    %v1725 = vadd.f32 %v1724, %v1686
    %v1726 = vadd.f32 %v1725, %v1688
    %v1727 = vadd.f32 %v1726, %v1690
    %v1728 = vadd.f32 %v1727, %v1692
    %v1729 = vadd.f32 %v1728, %v1694
    %v1730 = vadd.f32 %v1729, %v1696
    %v1731 = vadd.f32 %v1730, %v1698
    %v1732 = vadd.f32 %v1731, %v1700
    %v1733 = vrot.slane %v1732, 4
    %v1734 = vadd.f32 %v1732, %v1733
    %v1735 = vrot.slane %v1734, 2
    %v1736 = vadd.f32 %v1734, %v1735
    %v1737 = vrot.slane %v1736, 1
    %v1738 = vadd.f32 %v1736, %v1737
    %v1739 = vadd.f32 %v1639, %v1641
    %v1740 = vadd.f32 %v1739, %v1643
    %v1741 = vadd.f32 %v1740, %v1645
    %v1742 = vadd.f32 %v1741, %v1647
    %v1743 = vadd.f32 %v1742, %v1649
    %v1744 = vadd.f32 %v1743, %v1651
    %v1745 = vadd.f32 %v1744, %v1653
    %v1746 = vadd.f32 %v1745, %v1655
    %v1747 = vadd.f32 %v1746, %v1657
    %v1748 = vadd.f32 %v1747, %v1659
    %v1749 = vadd.f32 %v1748, %v1661
    %v1750 = vadd.f32 %v1749, %v1663
    %v1751 = vadd.f32 %v1750, %v1665
    %v1752 = vadd.f32 %v1751, %v1667
    %v1753 = vadd.f32 %v1752, %v1669
    %v1754 = vadd.f32 %v1753, %v1671
    %v1755 = vadd.f32 %v1754, %v1673
    %v1756 = vadd.f32 %v1755, %v1675
    %v1757 = vadd.f32 %v1756, %v1677
    %v1758 = vadd.f32 %v1757, %v1679
    %v1759 = vadd.f32 %v1758, %v1681
    %v1760 = vadd.f32 %v1759, %v1683
    %v1761 = vadd.f32 %v1760, %v1685
    %v1762 = vadd.f32 %v1761, %v1687
    %v1763 = vadd.f32 %v1762, %v1689
    %v1764 = vadd.f32 %v1763, %v1691
    %v1765 = vadd.f32 %v1764, %v1693
    %v1766 = vadd.f32 %v1765, %v1695
    %v1767 = vadd.f32 %v1766, %v1697
    %v1768 = vadd.f32 %v1767, %v1699
    %v1769 = vadd.f32 %v1768, %v1701
    %v1770 = vrot.slane %v1769, 4
    %v1771 = vadd.f32 %v1769, %v1770
    %v1772 = vrot.slane %v1771, 2
    %v1773 = vadd.f32 %v1771, %v1772
    %v1774 = vrot.slane %v1773, 1
    %v1775 = vadd.f32 %v1773, %v1774
    %s1776 = sld [smem:[#allocation2]]
    %v1777 = vstv %s1776
    %v1778 = vadd.f32 %v1738, %v1777
    %v1779 = vadd.f32 %v1775, %v1777
    %v1782 = vrot.slane %v1779, 7
    %vm1783 = vcmask 1040384
    %v1784 = vsel %vm1783, %v1778, %v1782
    %v1786 = vlaneseq
    %vm1787 = vcmp.ge.s32.totalorder %v1786, 0
    %vm1788 = vcmp.lt.s32.totalorder %v1786, 256
    %vm1789 = vmand %vm1787, %vm1788
    %1790 = vst.msk [vmem:[#allocation3] sm:$0x3] %vm1789, %v1784
    // Predicated region
    $region30: #{tpu_custom_call.1} parent=1 // pred_check
      _
    $region31: #{tpu_custom_call.1} parent=1 // pred_check_branch
      %1792 = sbr.rel (0) target = $region33
    $region32: #{tpu_custom_call.1} parent=1 // pred_region
      %1794 = vsyncadd [#allocation4], 0
      %s1796 = sshll.u32 [#allocation3], 4
      %s1797 = int_to_ptr.vmem [resolvable:$true] %s1796
      %s1798 = sshll.u32 %s7, 4
      %s1799 = int_to_ptr.hbm [resolvable:$true] %s1798
      %1801 = dma.vmem_to_hbm [thread:$0]  %s1797, 32, %s1799, [#allocation4]
    $region33: #{tpu_custom_call.1} parent=1 // pred_fallthru
      _
    // Predicated region
    $region34: #{tpu_custom_call.1} parent=1 // pred_check
      _
    $region35: #{tpu_custom_call.1} parent=1 // pred_check_branch
      %1803 = sbr.rel (0) target = $region37
    $region36: #{tpu_custom_call.1} parent=1 // pred_region
      %1805 = dma.done [#allocation4], 32
    $region37: #{tpu_custom_call.1} parent=1 // pred_fallthru
      _
    %1806 = vsyncpa [#allocation4], 1

</llo_original>
